<compile_context>
chip_gen: v7x
topology: tpu7x:2x2x1
jax: 0.10.0
libtpu: 0.0.40
codegen_flags: <defaults>
</compile_context>

<pallas_src>
import numpy as np

import jax
import jax.numpy as jnp
from jax import lax
from jax.experimental import pallas as pl
from jax.experimental.pallas import tpu as pltpu

# ----------------------------- configuration --------------------------------
B = 2                      # batch
S = 12                     # sequence length
V = 50                     # vocab size
E = 16                     # embedding dim
C = 16                     # conv output channels == GRU input size (per branch)
H = 32                     # GRU hidden size (per branch)
NT = 8                     # topic-vector dim
NC = 2                     # number of classes
FILTER_SIZES = (1, 2, 3)   # opt.FILTER_SIZE = "1,2,3"  (must be ascending)
F = len(FILTER_SIZES)
FW = max(FILTER_SIZES)     # widest conv window
BRANCH_ORDER = ("glove", "fast", "para", "senti")
NB = len(BRANCH_ORDER)

EB = NB * E                # 64   branch-concatenated embedding width
CB = NB * C                # 64   branch-concatenated conv channels
HB = NB * H                # 128  branch-concatenated hidden (lane dense)
G3 = 3 * HB                # 384  packed GRU gates [r | z | n]
R = F * B                  # 6    live recurrence rows (filter-major)
RP = 8                     # rows padded to a full sublane tile
SR = S * RP                # 96   (time, filter, batch, pad) rows
W3 = FW * EB               # 192  conv window width (3 token positions)
FC = F * CB                # 192  all-filter conv output width
NEG = -1e30

# bf16 weight-slab row offsets (width G3 = 384; all offsets multiples of 16)
OFF_WIH, OFF_WHH, OFF_WC = 0, 384, 512
OFF_BIH, OFF_BHH, OFF_BC, OFF_FSEL = 704, 720, 736, 752
WBIG_ROWS = 768

# f32 misc-slab row offsets (width HB = 128; all offsets multiples of 8)
OFF_AMASK, OFF_SEG, OFF_SEGT, OFF_COEF = 0, 96, 224, 232
OFF_WPROJ, OFF_BPROJ, OFF_WGATE, OFF_BGATE, OFF_WFC, OFF_BFC = 240, 248, 256, 320, 328, 360
MISC_ROWS = 368


# ------------------------------ fused kernel --------------------------------
def _forward_kernel(emb_ref, topic_ref, wbig_ref, misc_ref, out_ref, outs_ref):
    f32, bf16 = jnp.float32, jnp.bfloat16

    # ---- conv (+bias, ReLU) for ALL filter sizes in one (96,192)@(192,384) GEMM
    emb = emb_ref[...]                                          # (SR, W3) bf16
    wc = wbig_ref[OFF_WC:OFF_WC + W3, :]                        # (192, 384) bf16
    bc = wbig_ref[OFF_BC:OFF_BC + 1, :].astype(f32)             # (1, 384)
    conv = jnp.maximum(jnp.dot(emb, wc, preferred_element_type=f32) + bc, 0.0)

    # keep each row's own filter block (rows are (t, filter, batch) ordered)
    fsel = wbig_ref[OFF_FSEL:OFF_FSEL + RP, :].astype(f32)      # (RP, 384)
    conv = (conv.reshape(S, RP, G3) * fsel[None]).reshape(SR, G3)

    # ---- GRU input projection for every row/step in one (96,384)@(384,384) GEMM
    wih = wbig_ref[OFF_WIH:OFF_WIH + G3, :]                     # (384, 384) bf16
    bih = wbig_ref[OFF_BIH:OFF_BIH + 1, :].astype(f32)          # (1, 384)
    xt_all = jnp.dot(conv.astype(bf16), wih, preferred_element_type=f32) + bih

    # ---- GRU recurrence: aligned 8-row slice + one bf16 MXU matmul per step
    whh = wbig_ref[OFF_WHH:OFF_WHH + HB, :]                     # (128, 384) bf16
    bhh = wbig_ref[OFF_BHH:OFF_BHH + 1, :].astype(f32)          # (1, 384)
    row_id = lax.broadcasted_iota(jnp.int32, (RP, 1), 0)
    h = jnp.zeros((RP, HB), f32)
    for t in range(S):                                          # static unroll
        xt = xt_all[t * RP:(t + 1) * RP, :]                     # aligned slice
        hp = jnp.dot(h.astype(bf16), whh, preferred_element_type=f32) + bhh
        r = jax.nn.sigmoid(xt[:, 0:HB] + hp[:, 0:HB])
        z = jax.nn.sigmoid(xt[:, HB:2 * HB] + hp[:, HB:2 * HB])
        n = jnp.tanh(xt[:, 2 * HB:3 * HB] + r * hp[:, 2 * HB:3 * HB])
        hn = (1.0 - z) * n + z * h
        # rows whose filter's sequence has ended keep their hidden state
        n_valid = B * sum(1 for fs in FILTER_SIZES if t < S - fs + 1)
        if n_valid < R:
            hn = jnp.where(row_id < n_valid, hn, h)
        outs_ref[t * RP:(t + 1) * RP, :] = hn                   # aligned store
        h = hn

    # ---- dot-product attention against the final (frozen) hidden state
    out_all = outs_ref[...].reshape(S, RP, HB)
    prod = (out_all * h[None]).reshape(SR, HB)
    seg = misc_ref[OFF_SEG:OFF_SEG + HB, 0:NB]                  # (128, 4)
    amask = misc_ref[OFF_AMASK:OFF_AMASK + SR, 0:NB]            # (96, 4)
    scores = (jnp.dot(prod, seg, preferred_element_type=f32) + amask
              ).reshape(S, RP, NB)
    m = jnp.max(scores, axis=0, keepdims=True)
    e = jnp.exp(scores - m)
    w = e / jnp.sum(e, axis=0, keepdims=True)                   # softmax over time
    segT = misc_ref[OFF_SEGT:OFF_SEGT + NB, :]                  # (4, 128)
    wexp = jnp.dot(w.reshape(SR, NB), segT, preferred_element_type=f32)
    ctx = jnp.sum(wexp.reshape(S, RP, HB) * out_all, axis=0)    # (RP, HB)

    # ---- per-filter weighted sums ("total" pre-folded into coefs), gate, fc
    wctx = ctx * misc_ref[OFF_COEF:OFF_COEF + RP, :]
    fsum = wctx[0:B, :] + wctx[B:2 * B, :] + wctx[2 * B:3 * B, :]    # (B, HB)
    semantic = fsum[:, 0:H] + fsum[:, H:2 * H] + fsum[:, 2 * H:3 * H]
    senti_s = fsum[:, 3 * H:4 * H]

    tproj = (jnp.dot(topic_ref[...], misc_ref[OFF_WPROJ:OFF_WPROJ + NT, 0:H],
                     preferred_element_type=f32)
             + misc_ref[OFF_BPROJ:OFF_BPROJ + 1, 0:H])          # (B, H)
    gin = jnp.concatenate([semantic, tproj], axis=-1)           # (B, 2H)
    zg = jax.nn.sigmoid(
        jnp.dot(gin, misc_ref[OFF_WGATE:OFF_WGATE + 2 * H, 0:H],
                preferred_element_type=f32)
        + misc_ref[OFF_BGATE:OFF_BGATE + 1, 0:H])
    joint = zg * semantic + (1.0 - zg) * senti_s
    out_ref[...] = (jnp.dot(joint, misc_ref[OFF_WFC:OFF_WFC + H, 0:NC],
                            preferred_element_type=f32)
                    + misc_ref[OFF_BFC:OFF_BFC + 1, 0:NC]).astype(out_ref.dtype)


def _run_fused(emb3, topic, packed):
    vmem = pl.BlockSpec(memory_space=pltpu.MemorySpace.VMEM)
    return pl.pallas_call(
        _forward_kernel,
        out_shape=jax.ShapeDtypeStruct((B, NC), jnp.float32),
        in_specs=[vmem, vmem, vmem, vmem],
        out_specs=vmem,
        scratch_shapes=[pltpu.VMEM((SR, HB), jnp.float32)],
    )(emb3, topic, packed["wbig"], packed["misc"])


def deep_basic_forward(packed, text, topic):
    # Single fused gather that directly produces the (time, filter, batch)-
    # ordered 3-token window layout (SR, W3) the kernel consumes; the only XLA
    # ops besides it are a tiny concat + index translation.
    text_ext = jnp.concatenate([text.reshape(-1).astype(jnp.int32),
                                jnp.full((1,), V, dtype=jnp.int32)])
    tok = text_ext[packed["rmap"]]                       # (SR, FW), V = zero row
    emb3 = packed["table"][tok].reshape(SR, W3)          # bf16 (96, 192)
    return _run_fused(emb3, topic, packed)


# --------------------------- parameter packing -------------------------------
def pack_params(params):
    """Pack per-branch weights into the two slabs the fused kernel expects."""
    assert tuple(FILTER_SIZES) == tuple(sorted(FILTER_SIZES)), \
        "recurrence freeze logic assumes ascending filter sizes"

    def npf(x):
        return np.asarray(x, dtype=np.float32)

    packed = {}

    # ---- embedding table, branch-concatenated, + one all-zero padding row
    table = np.zeros((V + 1, EB), np.float32)
    for bi, name in enumerate(BRANCH_ORDER):
        table[:V, bi * E:(bi + 1) * E] = npf(params[name]["table"])
    packed["table"] = jnp.asarray(table, dtype=jnp.bfloat16)

    # ---- static gather map: row t*RP + filter*B + b, window positions 0..FW-1
    SENT = B * S                                     # maps to the zero emb row
    rmap = np.full((SR, FW), SENT, np.int32)
    for t in range(S):
        for fi in range(F):
            for b in range(B):
                r = t * RP + fi * B + b
                for i in range(FW):
                    if t + i < S:
                        rmap[r, i] = b * S + (t + i)
    packed["rmap"] = jnp.asarray(rmap)

    # ---- combined conv weight/bias: all filters & branches in one block matrix
    wc = np.zeros((W3, FC), np.float32)
    bc = np.zeros((FC,), np.float32)
    for fi, fs in enumerate(FILTER_SIZES):
        for bi, name in enumerate(BRANCH_ORDER):
            w = npf(params[name]["conv_w"][fi])      # (fs*E, C)
            for i in range(fs):
                wc[i * EB + bi * E:i * EB + (bi + 1) * E,
                   fi * CB + bi * C:fi * CB + (bi + 1) * C] = w[i * E:(i + 1) * E, :]
            bc[fi * CB + bi * C:fi * CB + (bi + 1) * C] = npf(params[name]["conv_b"][fi])

    # ---- GRU weights: block-diagonal over branches, gate-major [r|z|n]
    wih = np.zeros((CB, G3), np.float32)
    bih = np.zeros((G3,), np.float32)
    whh = np.zeros((HB, G3), np.float32)
    bhh = np.zeros((G3,), np.float32)
    for bi, name in enumerate(BRANCH_ORDER):
        p = params[name]
        wi, bi_v = npf(p["w_ih"]), npf(p["b_ih"])
        wh, bh_v = npf(p["w_hh"]), npf(p["b_hh"])
        for g in range(3):
            dst = slice(g * HB + bi * H, g * HB + (bi + 1) * H)
            src = slice(g * H, (g + 1) * H)
            wih[bi * C:(bi + 1) * C, dst] = wi[:, src]
            whh[bi * H:(bi + 1) * H, dst] = wh[:, src]
            bih[dst] = bi_v[src]
            bhh[dst] = bh_v[src]
    wih3 = np.concatenate([wih] * F, axis=0)         # (FC, G3): shared per filter

    # ---- per-row filter-block select mask (rows filter*B + b; pad rows zero)
    fsel = np.zeros((RP, FC), np.float32)
    for fi in range(F):
        fsel[fi * B:(fi + 1) * B, fi * CB:(fi + 1) * CB] = 1.0

    # ---- bf16 weight slab
    wbig = np.zeros((WBIG_ROWS, G3), np.float32)
    wbig[OFF_WIH:OFF_WIH + FC, :] = wih3             # rows FC:G3 stay zero
    wbig[OFF_WHH:OFF_WHH + HB, :] = whh
    wbig[OFF_WC:OFF_WC + W3, 0:FC] = wc              # cols FC:G3 stay zero
    wbig[OFF_BIH, :] = bih
    wbig[OFF_BHH, :] = bhh
    wbig[OFF_BC, 0:FC] = bc
    wbig[OFF_FSEL:OFF_FSEL + RP, 0:FC] = fsel
    packed["wbig"] = jnp.asarray(wbig, dtype=jnp.bfloat16)

    # ---- f32 misc slab (width HB = 128)
    misc = np.zeros((MISC_ROWS, HB), np.float32)
    for fi, fs in enumerate(FILTER_SIZES):           # additive attention mask
        for t in range(S - fs + 1, S):
            misc[OFF_AMASK + t * RP + fi * B:
                 OFF_AMASK + t * RP + (fi + 1) * B, 0:NB] = NEG
    for bi in range(NB):                             # branch segment indicators
        misc[OFF_SEG + bi * H:OFF_SEG + (bi + 1) * H, bi] = 1.0
        misc[OFF_SEGT + bi, bi * H:(bi + 1) * H] = 1.0
    total = npf(params["total"])                     # folded into coefficients
    per_branch = {"glove": npf(params["a"]) * total[0],
                  "para": npf(params["b"]) * total[1],
                  "fast": npf(params["c"]) * total[2],
                  "senti": npf(params["d"])}
    for fi in range(F):
        for bi, name in enumerate(BRANCH_ORDER):
            misc[OFF_COEF + fi * B:OFF_COEF + (fi + 1) * B,
                 bi * H:(bi + 1) * H] = per_branch[name][fi]
    misc[OFF_WPROJ:OFF_WPROJ + NT, 0:H] = npf(params["proj_t_w"])
    misc[OFF_BPROJ, 0:H] = npf(params["proj_t_b"])
    misc[OFF_WGATE:OFF_WGATE + H, 0:H] = npf(params["gate_ws"])
    misc[OFF_WGATE + H:OFF_WGATE + 2 * H, 0:H] = npf(params["gate_wt"])
    misc[OFF_BGATE, 0:H] = npf(params["gate_b"])
    misc[OFF_WFC:OFF_WFC + H, 0:NC] = npf(params["fc_w"])
    misc[OFF_BFC, 0:NC] = npf(params["fc_b"])
    packed["misc"] = jnp.asarray(misc)
    return packed


# ------------------------------ parameters -----------------------------------
def init_params(key):
    keys = iter(jax.random.split(key, 64))

    def nrm(shape, scale=0.1):
        return scale * jax.random.normal(next(keys), shape, dtype=jnp.float32)

    params = {}
    for name in BRANCH_ORDER:
        params[name] = {
            "table": nrm((V, E), 1.0),
            "conv_w": [nrm((fs * E, C)) for fs in FILTER_SIZES],
            "conv_b": [nrm((C,)) for _ in FILTER_SIZES],
            "w_ih": nrm((C, 3 * H)),
            "b_ih": nrm((3 * H,)),
            "w_hh": nrm((H, 3 * H)),
            "b_hh": nrm((3 * H,)),
        }
    params["a"] = jax.random.uniform(next(keys), (F,), jnp.float32)
    params["b"] = jax.random.uniform(next(keys), (F,), jnp.float32)
    params["c"] = jax.random.uniform(next(keys), (F,), jnp.float32)
    params["d"] = jax.random.uniform(next(keys), (F,), jnp.float32)
    params["total"] = jax.random.uniform(next(keys), (3,), jnp.float32)
    params["proj_t_w"] = nrm((NT, H))
    params["proj_t_b"] = nrm((H,))
    params["gate_ws"] = nrm((H, H))
    params["gate_wt"] = nrm((H, H))
    params["gate_b"] = nrm((H,))
    params["fc_w"] = nrm((H, NC))
    params["fc_b"] = nrm((NC,))
    return params


# --------------------------- pure-JAX reference -------------------------------
def reference_forward(params, text, topic):
    def gru(feat, w_ih, b_ih, w_hh, b_hh):
        xp = jnp.einsum("btc,ch->bth", feat, w_ih) + b_ih

        def step(h, x_t):
            hp = h @ w_hh + b_hh
            r = jax.nn.sigmoid(x_t[:, :H] + hp[:, :H])
            z = jax.nn.sigmoid(x_t[:, H:2 * H] + hp[:, H:2 * H])
            n = jnp.tanh(x_t[:, 2 * H:] + r * hp[:, 2 * H:])
            hn = (1.0 - z) * n + z * h
            return hn, hn

        h_last, outs = lax.scan(step, jnp.zeros((B, H), jnp.float32),
                                jnp.swapaxes(xp, 0, 1))
        return jnp.swapaxes(outs, 0, 1), h_last

    ctx = {}
    for name in BRANCH_ORDER:
        p = params[name]
        emb = p["table"][text]
        per_filter = []
        for fi, fs in enumerate(FILTER_SIZES):
            Tf = S - fs + 1
            cols = jnp.concatenate([emb[:, i:i + Tf, :] for i in range(fs)], axis=-1)
            feat = jax.nn.relu(jnp.einsum("btk,kc->btc", cols, p["conv_w"][fi])
                               + p["conv_b"][fi])
            outs, h_last = gru(feat, p["w_ih"], p["b_ih"], p["w_hh"], p["b_hh"])
            scores = jnp.einsum("bth,bh->bt", outs, h_last)
            w = jax.nn.softmax(scores, axis=-1)
            per_filter.append(jnp.einsum("bt,bth->bh", w, outs))
        ctx[name] = per_filter

    glove = sum(params["a"][fi] * ctx["glove"][fi] for fi in range(F))
    para = sum(params["b"][fi] * ctx["para"][fi] for fi in range(F))
    fast = sum(params["c"][fi] * ctx["fast"][fi] for fi in range(F))
    senti = sum(params["d"][fi] * ctx["senti"][fi] for fi in range(F))
    semantic = (params["total"][0] * glove + params["total"][1] * para
                + params["total"][2] * fast)
    tproj = topic @ params["proj_t_w"] + params["proj_t_b"]
    z = jax.nn.sigmoid(semantic @ params["gate_ws"] + tproj @ params["gate_wt"]
                       + params["gate_b"])
    joint = z * semantic + (1.0 - z) * senti
    return joint @ params["fc_w"] + params["fc_b"]


# ----------------------------------- main ------------------------------------
if __name__ == "__main__":
    root = jax.random.PRNGKey(0)
    k_params, k_text, k_topic = jax.random.split(root, 3)

    params = init_params(k_params)
    text = jax.random.randint(k_text, (B, S), 0, V, dtype=jnp.int32)
    topic = jax.random.normal(k_topic, (B, NT), dtype=jnp.float32)

    packed = pack_params(params)              # one-time weight packing (host)

    logits = jax.jit(deep_basic_forward)(packed, text, topic)
    jax.block_until_ready(logits)
    assert logits.shape == (B, NC)

    ref = jax.jit(reference_forward)(params, text, topic)
    np.testing.assert_allclose(np.asarray(logits), np.asarray(ref),
                               rtol=5e-2, atol=5e-2)
    print("KERNEL_OK")
</pallas_src>

<mosaic_0001>
module attributes {stable_mosaic.version = 11 : i64} {
  func.func @_forward_kernel(%arg0: memref<96x192xbf16, #tpu.memory_space<vmem>>, %arg1: memref<2x8xf32, #tpu.memory_space<vmem>>, %arg2: memref<768x384xbf16, #tpu.memory_space<vmem>>, %arg3: memref<368x128xf32, #tpu.memory_space<vmem>>, %arg4: memref<2x2xf32, #tpu.memory_space<vmem>>, %arg5: memref<96x128xf32, #tpu.memory_space<vmem>>) attributes {dimension_semantics = [], scalar_prefetch = 0 : i64, scratch_operands = 1 : i64, tpu.core_type = #tpu.core_type<tc>} {
    %c0 = arith.constant 0 : index
    %c0_0 = arith.constant 0 : index
    %0 = vector.load %arg0[%c0, %c0_0] : memref<96x192xbf16, #tpu.memory_space<vmem>>, vector<96x192xbf16>
    %c512 = arith.constant 512 : index
    %c0_1 = arith.constant 0 : index
    %1 = vector.load %arg2[%c512, %c0_1] : memref<768x384xbf16, #tpu.memory_space<vmem>>, vector<192x384xbf16>
    %c736 = arith.constant 736 : index
    %c0_2 = arith.constant 0 : index
    %2 = vector.load %arg2[%c736, %c0_2] : memref<768x384xbf16, #tpu.memory_space<vmem>>, vector<1x384xbf16>
    %3 = arith.extf %2 : vector<1x384xbf16> to vector<1x384xf32>
    %cst = arith.constant dense<0.000000e+00> : vector<96x384xf32>
    %4 = tpu.matmul %0, %1, %cst {dimension_numbers = #tpu.dot_dimension_numbers<[1], [0], [0], [1], [0, 0, 1, 1], [], []>} : vector<96x192xbf16>, vector<192x384xbf16>, vector<96x384xf32> -> vector<96x384xf32>
    %5 = vector.broadcast %3 : vector<1x384xf32> to vector<96x384xf32>
    %6 = arith.addf %4, %5 : vector<96x384xf32>
    %cst_3 = arith.constant 0.000000e+00 : f32
    %7 = vector.broadcast %cst_3 : f32 to vector<96x384xf32>
    %8 = arith.maximumf %6, %7 : vector<96x384xf32>
    %c752 = arith.constant 752 : index
    %c0_4 = arith.constant 0 : index
    %9 = vector.load %arg2[%c752, %c0_4] : memref<768x384xbf16, #tpu.memory_space<vmem>>, vector<8x384xbf16>
    %10 = arith.extf %9 : vector<8x384xbf16> to vector<8x384xf32>
    %11 = vector.shape_cast %8 : vector<96x384xf32> to vector<12x8x384xf32>
    %12 = vector.shape_cast %10 : vector<8x384xf32> to vector<1x8x384xf32>
    %13 = vector.broadcast %12 : vector<1x8x384xf32> to vector<12x8x384xf32>
    %14 = arith.mulf %11, %13 : vector<12x8x384xf32>
    %15 = vector.shape_cast %14 : vector<12x8x384xf32> to vector<96x384xf32>
    %c0_5 = arith.constant 0 : index
    %c0_6 = arith.constant 0 : index
    %16 = vector.load %arg2[%c0_5, %c0_6] : memref<768x384xbf16, #tpu.memory_space<vmem>>, vector<384x384xbf16>
    %c704 = arith.constant 704 : index
    %c0_7 = arith.constant 0 : index
    %17 = vector.load %arg2[%c704, %c0_7] : memref<768x384xbf16, #tpu.memory_space<vmem>>, vector<1x384xbf16>
    %18 = arith.extf %17 : vector<1x384xbf16> to vector<1x384xf32>
    %19 = arith.truncf %15 : vector<96x384xf32> to vector<96x384xbf16>
    %cst_8 = arith.constant dense<0.000000e+00> : vector<96x384xf32>
    %20 = tpu.matmul %19, %16, %cst_8 {dimension_numbers = #tpu.dot_dimension_numbers<[1], [0], [0], [1], [0, 0, 1, 1], [], []>} : vector<96x384xbf16>, vector<384x384xbf16>, vector<96x384xf32> -> vector<96x384xf32>
    %21 = vector.broadcast %18 : vector<1x384xf32> to vector<96x384xf32>
    %22 = arith.addf %20, %21 : vector<96x384xf32>
    %c384 = arith.constant 384 : index
    %c0_9 = arith.constant 0 : index
    %23 = vector.load %arg2[%c384, %c0_9] : memref<768x384xbf16, #tpu.memory_space<vmem>>, vector<128x384xbf16>
    %c720 = arith.constant 720 : index
    %c0_10 = arith.constant 0 : index
    %24 = vector.load %arg2[%c720, %c0_10] : memref<768x384xbf16, #tpu.memory_space<vmem>>, vector<1x384xbf16>
    %25 = arith.extf %24 : vector<1x384xbf16> to vector<1x384xf32>
    %26 = tpu.iota {dimensions = array<i32: 0>} : vector<8x1xi32>
    %cst_11 = arith.constant 0.000000e+00 : f32
    %27 = vector.broadcast %cst_11 : f32 to vector<8x128xf32>
    %28 = vector.extract_strided_slice %22 {offsets = [0, 0], sizes = [8, 384], strides = [1, 1]} : vector<96x384xf32> to vector<8x384xf32>
    %29 = arith.truncf %27 : vector<8x128xf32> to vector<8x128xbf16>
    %cst_12 = arith.constant dense<0.000000e+00> : vector<8x384xf32>
    %30 = tpu.matmul %29, %23, %cst_12 {dimension_numbers = #tpu.dot_dimension_numbers<[1], [0], [0], [1], [0, 0, 1, 1], [], []>} : vector<8x128xbf16>, vector<128x384xbf16>, vector<8x384xf32> -> vector<8x384xf32>
    %31 = vector.broadcast %25 : vector<1x384xf32> to vector<8x384xf32>
    %32 = arith.addf %30, %31 : vector<8x384xf32>
    %33 = vector.extract_strided_slice %28 {offsets = [0, 0], sizes = [8, 128], strides = [1, 1]} : vector<8x384xf32> to vector<8x128xf32>
    %34 = vector.extract_strided_slice %32 {offsets = [0, 0], sizes = [8, 128], strides = [1, 1]} : vector<8x384xf32> to vector<8x128xf32>
    %35 = arith.addf %33, %34 : vector<8x128xf32>
    %36 = arith.negf %35 : vector<8x128xf32>
    %37 = math.exp %36 : vector<8x128xf32>
    %cst_13 = arith.constant 1.000000e+00 : f32
    %38 = vector.broadcast %cst_13 : f32 to vector<8x128xf32>
    %39 = arith.addf %38, %37 : vector<8x128xf32>
    %40 = arith.divf %38, %39 : vector<8x128xf32>
    %41 = vector.extract_strided_slice %28 {offsets = [0, 128], sizes = [8, 128], strides = [1, 1]} : vector<8x384xf32> to vector<8x128xf32>
    %42 = vector.extract_strided_slice %32 {offsets = [0, 128], sizes = [8, 128], strides = [1, 1]} : vector<8x384xf32> to vector<8x128xf32>
    %43 = arith.addf %41, %42 : vector<8x128xf32>
    %44 = arith.negf %43 : vector<8x128xf32>
    %45 = math.exp %44 : vector<8x128xf32>
    %cst_14 = arith.constant 1.000000e+00 : f32
    %46 = vector.broadcast %cst_14 : f32 to vector<8x128xf32>
    %47 = arith.addf %46, %45 : vector<8x128xf32>
    %48 = arith.divf %46, %47 : vector<8x128xf32>
    %49 = vector.extract_strided_slice %28 {offsets = [0, 256], sizes = [8, 128], strides = [1, 1]} : vector<8x384xf32> to vector<8x128xf32>
    %50 = vector.extract_strided_slice %32 {offsets = [0, 256], sizes = [8, 128], strides = [1, 1]} : vector<8x384xf32> to vector<8x128xf32>
    %51 = arith.mulf %40, %50 : vector<8x128xf32>
    %52 = arith.addf %49, %51 : vector<8x128xf32>
    %53 = math.tanh %52 : vector<8x128xf32>
    %cst_15 = arith.constant 1.000000e+00 : f32
    %54 = vector.broadcast %cst_15 : f32 to vector<8x128xf32>
    %55 = arith.subf %54, %48 : vector<8x128xf32>
    %56 = arith.mulf %55, %53 : vector<8x128xf32>
    %57 = arith.mulf %48, %27 : vector<8x128xf32>
    %58 = arith.addf %56, %57 : vector<8x128xf32>
    %c0_16 = arith.constant 0 : index
    %c0_17 = arith.constant 0 : index
    %59 = vector.load %arg5[%c0_16, %c0_17] : memref<96x128xf32, #tpu.memory_space<vmem>>, vector<8x128xf32>
    tpu.vector_store %arg5[%c0_16, %c0_17], %58 {strides = array<i32>} : memref<96x128xf32, #tpu.memory_space<vmem>>, vector<8x128xf32>,
    %60 = vector.extract_strided_slice %22 {offsets = [8, 0], sizes = [8, 384], strides = [1, 1]} : vector<96x384xf32> to vector<8x384xf32>
    %61 = arith.truncf %58 : vector<8x128xf32> to vector<8x128xbf16>
    %cst_18 = arith.constant dense<0.000000e+00> : vector<8x384xf32>
    %62 = tpu.matmul %61, %23, %cst_18 {dimension_numbers = #tpu.dot_dimension_numbers<[1], [0], [0], [1], [0, 0, 1, 1], [], []>} : vector<8x128xbf16>, vector<128x384xbf16>, vector<8x384xf32> -> vector<8x384xf32>
    %63 = vector.broadcast %25 : vector<1x384xf32> to vector<8x384xf32>
    %64 = arith.addf %62, %63 : vector<8x384xf32>
    %65 = vector.extract_strided_slice %60 {offsets = [0, 0], sizes = [8, 128], strides = [1, 1]} : vector<8x384xf32> to vector<8x128xf32>
    %66 = vector.extract_strided_slice %64 {offsets = [0, 0], sizes = [8, 128], strides = [1, 1]} : vector<8x384xf32> to vector<8x128xf32>
    %67 = arith.addf %65, %66 : vector<8x128xf32>
    %68 = arith.negf %67 : vector<8x128xf32>
    %69 = math.exp %68 : vector<8x128xf32>
    %cst_19 = arith.constant 1.000000e+00 : f32
    %70 = vector.broadcast %cst_19 : f32 to vector<8x128xf32>
    %71 = arith.addf %70, %69 : vector<8x128xf32>
    %72 = arith.divf %70, %71 : vector<8x128xf32>
    %73 = vector.extract_strided_slice %60 {offsets = [0, 128], sizes = [8, 128], strides = [1, 1]} : vector<8x384xf32> to vector<8x128xf32>
    %74 = vector.extract_strided_slice %64 {offsets = [0, 128], sizes = [8, 128], strides = [1, 1]} : vector<8x384xf32> to vector<8x128xf32>
    %75 = arith.addf %73, %74 : vector<8x128xf32>
    %76 = arith.negf %75 : vector<8x128xf32>
    %77 = math.exp %76 : vector<8x128xf32>
    %cst_20 = arith.constant 1.000000e+00 : f32
    %78 = vector.broadcast %cst_20 : f32 to vector<8x128xf32>
    %79 = arith.addf %78, %77 : vector<8x128xf32>
    %80 = arith.divf %78, %79 : vector<8x128xf32>
    %81 = vector.extract_strided_slice %60 {offsets = [0, 256], sizes = [8, 128], strides = [1, 1]} : vector<8x384xf32> to vector<8x128xf32>
    %82 = vector.extract_strided_slice %64 {offsets = [0, 256], sizes = [8, 128], strides = [1, 1]} : vector<8x384xf32> to vector<8x128xf32>
    %83 = arith.mulf %72, %82 : vector<8x128xf32>
    %84 = arith.addf %81, %83 : vector<8x128xf32>
    %85 = math.tanh %84 : vector<8x128xf32>
    %cst_21 = arith.constant 1.000000e+00 : f32
    %86 = vector.broadcast %cst_21 : f32 to vector<8x128xf32>
    %87 = arith.subf %86, %80 : vector<8x128xf32>
    %88 = arith.mulf %87, %85 : vector<8x128xf32>
    %89 = arith.mulf %80, %58 : vector<8x128xf32>
    %90 = arith.addf %88, %89 : vector<8x128xf32>
    %c8 = arith.constant 8 : index
    %c0_22 = arith.constant 0 : index
    %91 = vector.load %arg5[%c8, %c0_22] : memref<96x128xf32, #tpu.memory_space<vmem>>, vector<8x128xf32>
    tpu.vector_store %arg5[%c8, %c0_22], %90 {strides = array<i32>} : memref<96x128xf32, #tpu.memory_space<vmem>>, vector<8x128xf32>,
    %92 = vector.extract_strided_slice %22 {offsets = [16, 0], sizes = [8, 384], strides = [1, 1]} : vector<96x384xf32> to vector<8x384xf32>
    %93 = arith.truncf %90 : vector<8x128xf32> to vector<8x128xbf16>
    %cst_23 = arith.constant dense<0.000000e+00> : vector<8x384xf32>
    %94 = tpu.matmul %93, %23, %cst_23 {dimension_numbers = #tpu.dot_dimension_numbers<[1], [0], [0], [1], [0, 0, 1, 1], [], []>} : vector<8x128xbf16>, vector<128x384xbf16>, vector<8x384xf32> -> vector<8x384xf32>
    %95 = vector.broadcast %25 : vector<1x384xf32> to vector<8x384xf32>
    %96 = arith.addf %94, %95 : vector<8x384xf32>
    %97 = vector.extract_strided_slice %92 {offsets = [0, 0], sizes = [8, 128], strides = [1, 1]} : vector<8x384xf32> to vector<8x128xf32>
    %98 = vector.extract_strided_slice %96 {offsets = [0, 0], sizes = [8, 128], strides = [1, 1]} : vector<8x384xf32> to vector<8x128xf32>
    %99 = arith.addf %97, %98 : vector<8x128xf32>
    %100 = arith.negf %99 : vector<8x128xf32>
    %101 = math.exp %100 : vector<8x128xf32>
    %cst_24 = arith.constant 1.000000e+00 : f32
    %102 = vector.broadcast %cst_24 : f32 to vector<8x128xf32>
    %103 = arith.addf %102, %101 : vector<8x128xf32>
    %104 = arith.divf %102, %103 : vector<8x128xf32>
    %105 = vector.extract_strided_slice %92 {offsets = [0, 128], sizes = [8, 128], strides = [1, 1]} : vector<8x384xf32> to vector<8x128xf32>
    %106 = vector.extract_strided_slice %96 {offsets = [0, 128], sizes = [8, 128], strides = [1, 1]} : vector<8x384xf32> to vector<8x128xf32>
    %107 = arith.addf %105, %106 : vector<8x128xf32>
    %108 = arith.negf %107 : vector<8x128xf32>
    %109 = math.exp %108 : vector<8x128xf32>
    %cst_25 = arith.constant 1.000000e+00 : f32
    %110 = vector.broadcast %cst_25 : f32 to vector<8x128xf32>
    %111 = arith.addf %110, %109 : vector<8x128xf32>
    %112 = arith.divf %110, %111 : vector<8x128xf32>
    %113 = vector.extract_strided_slice %92 {offsets = [0, 256], sizes = [8, 128], strides = [1, 1]} : vector<8x384xf32> to vector<8x128xf32>
    %114 = vector.extract_strided_slice %96 {offsets = [0, 256], sizes = [8, 128], strides = [1, 1]} : vector<8x384xf32> to vector<8x128xf32>
    %115 = arith.mulf %104, %114 : vector<8x128xf32>
    %116 = arith.addf %113, %115 : vector<8x128xf32>
    %117 = math.tanh %116 : vector<8x128xf32>
    %cst_26 = arith.constant 1.000000e+00 : f32
    %118 = vector.broadcast %cst_26 : f32 to vector<8x128xf32>
    %119 = arith.subf %118, %112 : vector<8x128xf32>
    %120 = arith.mulf %119, %117 : vector<8x128xf32>
    %121 = arith.mulf %112, %90 : vector<8x128xf32>
    %122 = arith.addf %120, %121 : vector<8x128xf32>
    %c16 = arith.constant 16 : index
    %c0_27 = arith.constant 0 : index
    %123 = vector.load %arg5[%c16, %c0_27] : memref<96x128xf32, #tpu.memory_space<vmem>>, vector<8x128xf32>
    tpu.vector_store %arg5[%c16, %c0_27], %122 {strides = array<i32>} : memref<96x128xf32, #tpu.memory_space<vmem>>, vector<8x128xf32>,
    %124 = vector.extract_strided_slice %22 {offsets = [24, 0], sizes = [8, 384], strides = [1, 1]} : vector<96x384xf32> to vector<8x384xf32>
    %125 = arith.truncf %122 : vector<8x128xf32> to vector<8x128xbf16>
    %cst_28 = arith.constant dense<0.000000e+00> : vector<8x384xf32>
    %126 = tpu.matmul %125, %23, %cst_28 {dimension_numbers = #tpu.dot_dimension_numbers<[1], [0], [0], [1], [0, 0, 1, 1], [], []>} : vector<8x128xbf16>, vector<128x384xbf16>, vector<8x384xf32> -> vector<8x384xf32>
    %127 = vector.broadcast %25 : vector<1x384xf32> to vector<8x384xf32>
    %128 = arith.addf %126, %127 : vector<8x384xf32>
    %129 = vector.extract_strided_slice %124 {offsets = [0, 0], sizes = [8, 128], strides = [1, 1]} : vector<8x384xf32> to vector<8x128xf32>
    %130 = vector.extract_strided_slice %128 {offsets = [0, 0], sizes = [8, 128], strides = [1, 1]} : vector<8x384xf32> to vector<8x128xf32>
    %131 = arith.addf %129, %130 : vector<8x128xf32>
    %132 = arith.negf %131 : vector<8x128xf32>
    %133 = math.exp %132 : vector<8x128xf32>
    %cst_29 = arith.constant 1.000000e+00 : f32
    %134 = vector.broadcast %cst_29 : f32 to vector<8x128xf32>
    %135 = arith.addf %134, %133 : vector<8x128xf32>
    %136 = arith.divf %134, %135 : vector<8x128xf32>
    %137 = vector.extract_strided_slice %124 {offsets = [0, 128], sizes = [8, 128], strides = [1, 1]} : vector<8x384xf32> to vector<8x128xf32>
    %138 = vector.extract_strided_slice %128 {offsets = [0, 128], sizes = [8, 128], strides = [1, 1]} : vector<8x384xf32> to vector<8x128xf32>
    %139 = arith.addf %137, %138 : vector<8x128xf32>
    %140 = arith.negf %139 : vector<8x128xf32>
    %141 = math.exp %140 : vector<8x128xf32>
    %cst_30 = arith.constant 1.000000e+00 : f32
    %142 = vector.broadcast %cst_30 : f32 to vector<8x128xf32>
    %143 = arith.addf %142, %141 : vector<8x128xf32>
    %144 = arith.divf %142, %143 : vector<8x128xf32>
    %145 = vector.extract_strided_slice %124 {offsets = [0, 256], sizes = [8, 128], strides = [1, 1]} : vector<8x384xf32> to vector<8x128xf32>
    %146 = vector.extract_strided_slice %128 {offsets = [0, 256], sizes = [8, 128], strides = [1, 1]} : vector<8x384xf32> to vector<8x128xf32>
    %147 = arith.mulf %136, %146 : vector<8x128xf32>
    %148 = arith.addf %145, %147 : vector<8x128xf32>
    %149 = math.tanh %148 : vector<8x128xf32>
    %cst_31 = arith.constant 1.000000e+00 : f32
    %150 = vector.broadcast %cst_31 : f32 to vector<8x128xf32>
    %151 = arith.subf %150, %144 : vector<8x128xf32>
    %152 = arith.mulf %151, %149 : vector<8x128xf32>
    %153 = arith.mulf %144, %122 : vector<8x128xf32>
    %154 = arith.addf %152, %153 : vector<8x128xf32>
    %c24 = arith.constant 24 : index
    %c0_32 = arith.constant 0 : index
    %155 = vector.load %arg5[%c24, %c0_32] : memref<96x128xf32, #tpu.memory_space<vmem>>, vector<8x128xf32>
    tpu.vector_store %arg5[%c24, %c0_32], %154 {strides = array<i32>} : memref<96x128xf32, #tpu.memory_space<vmem>>, vector<8x128xf32>,
    %156 = vector.extract_strided_slice %22 {offsets = [32, 0], sizes = [8, 384], strides = [1, 1]} : vector<96x384xf32> to vector<8x384xf32>
    %157 = arith.truncf %154 : vector<8x128xf32> to vector<8x128xbf16>
    %cst_33 = arith.constant dense<0.000000e+00> : vector<8x384xf32>
    %158 = tpu.matmul %157, %23, %cst_33 {dimension_numbers = #tpu.dot_dimension_numbers<[1], [0], [0], [1], [0, 0, 1, 1], [], []>} : vector<8x128xbf16>, vector<128x384xbf16>, vector<8x384xf32> -> vector<8x384xf32>
    %159 = vector.broadcast %25 : vector<1x384xf32> to vector<8x384xf32>
    %160 = arith.addf %158, %159 : vector<8x384xf32>
    %161 = vector.extract_strided_slice %156 {offsets = [0, 0], sizes = [8, 128], strides = [1, 1]} : vector<8x384xf32> to vector<8x128xf32>
    %162 = vector.extract_strided_slice %160 {offsets = [0, 0], sizes = [8, 128], strides = [1, 1]} : vector<8x384xf32> to vector<8x128xf32>
    %163 = arith.addf %161, %162 : vector<8x128xf32>
    %164 = arith.negf %163 : vector<8x128xf32>
    %165 = math.exp %164 : vector<8x128xf32>
    %cst_34 = arith.constant 1.000000e+00 : f32
    %166 = vector.broadcast %cst_34 : f32 to vector<8x128xf32>
    %167 = arith.addf %166, %165 : vector<8x128xf32>
    %168 = arith.divf %166, %167 : vector<8x128xf32>
    %169 = vector.extract_strided_slice %156 {offsets = [0, 128], sizes = [8, 128], strides = [1, 1]} : vector<8x384xf32> to vector<8x128xf32>
    %170 = vector.extract_strided_slice %160 {offsets = [0, 128], sizes = [8, 128], strides = [1, 1]} : vector<8x384xf32> to vector<8x128xf32>
    %171 = arith.addf %169, %170 : vector<8x128xf32>
    %172 = arith.negf %171 : vector<8x128xf32>
    %173 = math.exp %172 : vector<8x128xf32>
    %cst_35 = arith.constant 1.000000e+00 : f32
    %174 = vector.broadcast %cst_35 : f32 to vector<8x128xf32>
    %175 = arith.addf %174, %173 : vector<8x128xf32>
    %176 = arith.divf %174, %175 : vector<8x128xf32>
    %177 = vector.extract_strided_slice %156 {offsets = [0, 256], sizes = [8, 128], strides = [1, 1]} : vector<8x384xf32> to vector<8x128xf32>
    %178 = vector.extract_strided_slice %160 {offsets = [0, 256], sizes = [8, 128], strides = [1, 1]} : vector<8x384xf32> to vector<8x128xf32>
    %179 = arith.mulf %168, %178 : vector<8x128xf32>
    %180 = arith.addf %177, %179 : vector<8x128xf32>
    %181 = math.tanh %180 : vector<8x128xf32>
    %cst_36 = arith.constant 1.000000e+00 : f32
    %182 = vector.broadcast %cst_36 : f32 to vector<8x128xf32>
    %183 = arith.subf %182, %176 : vector<8x128xf32>
    %184 = arith.mulf %183, %181 : vector<8x128xf32>
    %185 = arith.mulf %176, %154 : vector<8x128xf32>
    %186 = arith.addf %184, %185 : vector<8x128xf32>
    %c32 = arith.constant 32 : index
    %c0_37 = arith.constant 0 : index
    %187 = vector.load %arg5[%c32, %c0_37] : memref<96x128xf32, #tpu.memory_space<vmem>>, vector<8x128xf32>
    tpu.vector_store %arg5[%c32, %c0_37], %186 {strides = array<i32>} : memref<96x128xf32, #tpu.memory_space<vmem>>, vector<8x128xf32>,
    %188 = vector.extract_strided_slice %22 {offsets = [40, 0], sizes = [8, 384], strides = [1, 1]} : vector<96x384xf32> to vector<8x384xf32>
    %189 = arith.truncf %186 : vector<8x128xf32> to vector<8x128xbf16>
    %cst_38 = arith.constant dense<0.000000e+00> : vector<8x384xf32>
    %190 = tpu.matmul %189, %23, %cst_38 {dimension_numbers = #tpu.dot_dimension_numbers<[1], [0], [0], [1], [0, 0, 1, 1], [], []>} : vector<8x128xbf16>, vector<128x384xbf16>, vector<8x384xf32> -> vector<8x384xf32>
    %191 = vector.broadcast %25 : vector<1x384xf32> to vector<8x384xf32>
    %192 = arith.addf %190, %191 : vector<8x384xf32>
    %193 = vector.extract_strided_slice %188 {offsets = [0, 0], sizes = [8, 128], strides = [1, 1]} : vector<8x384xf32> to vector<8x128xf32>
    %194 = vector.extract_strided_slice %192 {offsets = [0, 0], sizes = [8, 128], strides = [1, 1]} : vector<8x384xf32> to vector<8x128xf32>
    %195 = arith.addf %193, %194 : vector<8x128xf32>
    %196 = arith.negf %195 : vector<8x128xf32>
    %197 = math.exp %196 : vector<8x128xf32>
    %cst_39 = arith.constant 1.000000e+00 : f32
    %198 = vector.broadcast %cst_39 : f32 to vector<8x128xf32>
    %199 = arith.addf %198, %197 : vector<8x128xf32>
    %200 = arith.divf %198, %199 : vector<8x128xf32>
    %201 = vector.extract_strided_slice %188 {offsets = [0, 128], sizes = [8, 128], strides = [1, 1]} : vector<8x384xf32> to vector<8x128xf32>
    %202 = vector.extract_strided_slice %192 {offsets = [0, 128], sizes = [8, 128], strides = [1, 1]} : vector<8x384xf32> to vector<8x128xf32>
    %203 = arith.addf %201, %202 : vector<8x128xf32>
    %204 = arith.negf %203 : vector<8x128xf32>
    %205 = math.exp %204 : vector<8x128xf32>
    %cst_40 = arith.constant 1.000000e+00 : f32
    %206 = vector.broadcast %cst_40 : f32 to vector<8x128xf32>
    %207 = arith.addf %206, %205 : vector<8x128xf32>
    %208 = arith.divf %206, %207 : vector<8x128xf32>
    %209 = vector.extract_strided_slice %188 {offsets = [0, 256], sizes = [8, 128], strides = [1, 1]} : vector<8x384xf32> to vector<8x128xf32>
    %210 = vector.extract_strided_slice %192 {offsets = [0, 256], sizes = [8, 128], strides = [1, 1]} : vector<8x384xf32> to vector<8x128xf32>
    %211 = arith.mulf %200, %210 : vector<8x128xf32>
    %212 = arith.addf %209, %211 : vector<8x128xf32>
    %213 = math.tanh %212 : vector<8x128xf32>
    %cst_41 = arith.constant 1.000000e+00 : f32
    %214 = vector.broadcast %cst_41 : f32 to vector<8x128xf32>
    %215 = arith.subf %214, %208 : vector<8x128xf32>
    %216 = arith.mulf %215, %213 : vector<8x128xf32>
    %217 = arith.mulf %208, %186 : vector<8x128xf32>
    %218 = arith.addf %216, %217 : vector<8x128xf32>
    %c40 = arith.constant 40 : index
    %c0_42 = arith.constant 0 : index
    %219 = vector.load %arg5[%c40, %c0_42] : memref<96x128xf32, #tpu.memory_space<vmem>>, vector<8x128xf32>
    tpu.vector_store %arg5[%c40, %c0_42], %218 {strides = array<i32>} : memref<96x128xf32, #tpu.memory_space<vmem>>, vector<8x128xf32>,
    %220 = vector.extract_strided_slice %22 {offsets = [48, 0], sizes = [8, 384], strides = [1, 1]} : vector<96x384xf32> to vector<8x384xf32>
    %221 = arith.truncf %218 : vector<8x128xf32> to vector<8x128xbf16>
    %cst_43 = arith.constant dense<0.000000e+00> : vector<8x384xf32>
    %222 = tpu.matmul %221, %23, %cst_43 {dimension_numbers = #tpu.dot_dimension_numbers<[1], [0], [0], [1], [0, 0, 1, 1], [], []>} : vector<8x128xbf16>, vector<128x384xbf16>, vector<8x384xf32> -> vector<8x384xf32>
    %223 = vector.broadcast %25 : vector<1x384xf32> to vector<8x384xf32>
    %224 = arith.addf %222, %223 : vector<8x384xf32>
    %225 = vector.extract_strided_slice %220 {offsets = [0, 0], sizes = [8, 128], strides = [1, 1]} : vector<8x384xf32> to vector<8x128xf32>
    %226 = vector.extract_strided_slice %224 {offsets = [0, 0], sizes = [8, 128], strides = [1, 1]} : vector<8x384xf32> to vector<8x128xf32>
    %227 = arith.addf %225, %226 : vector<8x128xf32>
    %228 = arith.negf %227 : vector<8x128xf32>
    %229 = math.exp %228 : vector<8x128xf32>
    %cst_44 = arith.constant 1.000000e+00 : f32
    %230 = vector.broadcast %cst_44 : f32 to vector<8x128xf32>
    %231 = arith.addf %230, %229 : vector<8x128xf32>
    %232 = arith.divf %230, %231 : vector<8x128xf32>
    %233 = vector.extract_strided_slice %220 {offsets = [0, 128], sizes = [8, 128], strides = [1, 1]} : vector<8x384xf32> to vector<8x128xf32>
    %234 = vector.extract_strided_slice %224 {offsets = [0, 128], sizes = [8, 128], strides = [1, 1]} : vector<8x384xf32> to vector<8x128xf32>
    %235 = arith.addf %233, %234 : vector<8x128xf32>
    %236 = arith.negf %235 : vector<8x128xf32>
    %237 = math.exp %236 : vector<8x128xf32>
    %cst_45 = arith.constant 1.000000e+00 : f32
    %238 = vector.broadcast %cst_45 : f32 to vector<8x128xf32>
    %239 = arith.addf %238, %237 : vector<8x128xf32>
    %240 = arith.divf %238, %239 : vector<8x128xf32>
    %241 = vector.extract_strided_slice %220 {offsets = [0, 256], sizes = [8, 128], strides = [1, 1]} : vector<8x384xf32> to vector<8x128xf32>
    %242 = vector.extract_strided_slice %224 {offsets = [0, 256], sizes = [8, 128], strides = [1, 1]} : vector<8x384xf32> to vector<8x128xf32>
    %243 = arith.mulf %232, %242 : vector<8x128xf32>
    %244 = arith.addf %241, %243 : vector<8x128xf32>
    %245 = math.tanh %244 : vector<8x128xf32>
    %cst_46 = arith.constant 1.000000e+00 : f32
    %246 = vector.broadcast %cst_46 : f32 to vector<8x128xf32>
    %247 = arith.subf %246, %240 : vector<8x128xf32>
    %248 = arith.mulf %247, %245 : vector<8x128xf32>
    %249 = arith.mulf %240, %218 : vector<8x128xf32>
    %250 = arith.addf %248, %249 : vector<8x128xf32>
    %c48 = arith.constant 48 : index
    %c0_47 = arith.constant 0 : index
    %251 = vector.load %arg5[%c48, %c0_47] : memref<96x128xf32, #tpu.memory_space<vmem>>, vector<8x128xf32>
    tpu.vector_store %arg5[%c48, %c0_47], %250 {strides = array<i32>} : memref<96x128xf32, #tpu.memory_space<vmem>>, vector<8x128xf32>,
    %252 = vector.extract_strided_slice %22 {offsets = [56, 0], sizes = [8, 384], strides = [1, 1]} : vector<96x384xf32> to vector<8x384xf32>
    %253 = arith.truncf %250 : vector<8x128xf32> to vector<8x128xbf16>
    %cst_48 = arith.constant dense<0.000000e+00> : vector<8x384xf32>
    %254 = tpu.matmul %253, %23, %cst_48 {dimension_numbers = #tpu.dot_dimension_numbers<[1], [0], [0], [1], [0, 0, 1, 1], [], []>} : vector<8x128xbf16>, vector<128x384xbf16>, vector<8x384xf32> -> vector<8x384xf32>
    %255 = vector.broadcast %25 : vector<1x384xf32> to vector<8x384xf32>
    %256 = arith.addf %254, %255 : vector<8x384xf32>
    %257 = vector.extract_strided_slice %252 {offsets = [0, 0], sizes = [8, 128], strides = [1, 1]} : vector<8x384xf32> to vector<8x128xf32>
    %258 = vector.extract_strided_slice %256 {offsets = [0, 0], sizes = [8, 128], strides = [1, 1]} : vector<8x384xf32> to vector<8x128xf32>
    %259 = arith.addf %257, %258 : vector<8x128xf32>
    %260 = arith.negf %259 : vector<8x128xf32>
    %261 = math.exp %260 : vector<8x128xf32>
    %cst_49 = arith.constant 1.000000e+00 : f32
    %262 = vector.broadcast %cst_49 : f32 to vector<8x128xf32>
    %263 = arith.addf %262, %261 : vector<8x128xf32>
    %264 = arith.divf %262, %263 : vector<8x128xf32>
    %265 = vector.extract_strided_slice %252 {offsets = [0, 128], sizes = [8, 128], strides = [1, 1]} : vector<8x384xf32> to vector<8x128xf32>
    %266 = vector.extract_strided_slice %256 {offsets = [0, 128], sizes = [8, 128], strides = [1, 1]} : vector<8x384xf32> to vector<8x128xf32>
    %267 = arith.addf %265, %266 : vector<8x128xf32>
    %268 = arith.negf %267 : vector<8x128xf32>
    %269 = math.exp %268 : vector<8x128xf32>
    %cst_50 = arith.constant 1.000000e+00 : f32
    %270 = vector.broadcast %cst_50 : f32 to vector<8x128xf32>
    %271 = arith.addf %270, %269 : vector<8x128xf32>
    %272 = arith.divf %270, %271 : vector<8x128xf32>
    %273 = vector.extract_strided_slice %252 {offsets = [0, 256], sizes = [8, 128], strides = [1, 1]} : vector<8x384xf32> to vector<8x128xf32>
    %274 = vector.extract_strided_slice %256 {offsets = [0, 256], sizes = [8, 128], strides = [1, 1]} : vector<8x384xf32> to vector<8x128xf32>
    %275 = arith.mulf %264, %274 : vector<8x128xf32>
    %276 = arith.addf %273, %275 : vector<8x128xf32>
    %277 = math.tanh %276 : vector<8x128xf32>
    %cst_51 = arith.constant 1.000000e+00 : f32
    %278 = vector.broadcast %cst_51 : f32 to vector<8x128xf32>
    %279 = arith.subf %278, %272 : vector<8x128xf32>
    %280 = arith.mulf %279, %277 : vector<8x128xf32>
    %281 = arith.mulf %272, %250 : vector<8x128xf32>
    %282 = arith.addf %280, %281 : vector<8x128xf32>
    %c56 = arith.constant 56 : index
    %c0_52 = arith.constant 0 : index
    %283 = vector.load %arg5[%c56, %c0_52] : memref<96x128xf32, #tpu.memory_space<vmem>>, vector<8x128xf32>
    tpu.vector_store %arg5[%c56, %c0_52], %282 {strides = array<i32>} : memref<96x128xf32, #tpu.memory_space<vmem>>, vector<8x128xf32>,
    %284 = vector.extract_strided_slice %22 {offsets = [64, 0], sizes = [8, 384], strides = [1, 1]} : vector<96x384xf32> to vector<8x384xf32>
    %285 = arith.truncf %282 : vector<8x128xf32> to vector<8x128xbf16>
    %cst_53 = arith.constant dense<0.000000e+00> : vector<8x384xf32>
    %286 = tpu.matmul %285, %23, %cst_53 {dimension_numbers = #tpu.dot_dimension_numbers<[1], [0], [0], [1], [0, 0, 1, 1], [], []>} : vector<8x128xbf16>, vector<128x384xbf16>, vector<8x384xf32> -> vector<8x384xf32>
    %287 = vector.broadcast %25 : vector<1x384xf32> to vector<8x384xf32>
    %288 = arith.addf %286, %287 : vector<8x384xf32>
    %289 = vector.extract_strided_slice %284 {offsets = [0, 0], sizes = [8, 128], strides = [1, 1]} : vector<8x384xf32> to vector<8x128xf32>
    %290 = vector.extract_strided_slice %288 {offsets = [0, 0], sizes = [8, 128], strides = [1, 1]} : vector<8x384xf32> to vector<8x128xf32>
    %291 = arith.addf %289, %290 : vector<8x128xf32>
    %292 = arith.negf %291 : vector<8x128xf32>
    %293 = math.exp %292 : vector<8x128xf32>
    %cst_54 = arith.constant 1.000000e+00 : f32
    %294 = vector.broadcast %cst_54 : f32 to vector<8x128xf32>
    %295 = arith.addf %294, %293 : vector<8x128xf32>
    %296 = arith.divf %294, %295 : vector<8x128xf32>
    %297 = vector.extract_strided_slice %284 {offsets = [0, 128], sizes = [8, 128], strides = [1, 1]} : vector<8x384xf32> to vector<8x128xf32>
    %298 = vector.extract_strided_slice %288 {offsets = [0, 128], sizes = [8, 128], strides = [1, 1]} : vector<8x384xf32> to vector<8x128xf32>
    %299 = arith.addf %297, %298 : vector<8x128xf32>
    %300 = arith.negf %299 : vector<8x128xf32>
    %301 = math.exp %300 : vector<8x128xf32>
    %cst_55 = arith.constant 1.000000e+00 : f32
    %302 = vector.broadcast %cst_55 : f32 to vector<8x128xf32>
    %303 = arith.addf %302, %301 : vector<8x128xf32>
    %304 = arith.divf %302, %303 : vector<8x128xf32>
    %305 = vector.extract_strided_slice %284 {offsets = [0, 256], sizes = [8, 128], strides = [1, 1]} : vector<8x384xf32> to vector<8x128xf32>
    %306 = vector.extract_strided_slice %288 {offsets = [0, 256], sizes = [8, 128], strides = [1, 1]} : vector<8x384xf32> to vector<8x128xf32>
    %307 = arith.mulf %296, %306 : vector<8x128xf32>
    %308 = arith.addf %305, %307 : vector<8x128xf32>
    %309 = math.tanh %308 : vector<8x128xf32>
    %cst_56 = arith.constant 1.000000e+00 : f32
    %310 = vector.broadcast %cst_56 : f32 to vector<8x128xf32>
    %311 = arith.subf %310, %304 : vector<8x128xf32>
    %312 = arith.mulf %311, %309 : vector<8x128xf32>
    %313 = arith.mulf %304, %282 : vector<8x128xf32>
    %314 = arith.addf %312, %313 : vector<8x128xf32>
    %c64 = arith.constant 64 : index
    %c0_57 = arith.constant 0 : index
    %315 = vector.load %arg5[%c64, %c0_57] : memref<96x128xf32, #tpu.memory_space<vmem>>, vector<8x128xf32>
    tpu.vector_store %arg5[%c64, %c0_57], %314 {strides = array<i32>} : memref<96x128xf32, #tpu.memory_space<vmem>>, vector<8x128xf32>,
    %316 = vector.extract_strided_slice %22 {offsets = [72, 0], sizes = [8, 384], strides = [1, 1]} : vector<96x384xf32> to vector<8x384xf32>
    %317 = arith.truncf %314 : vector<8x128xf32> to vector<8x128xbf16>
    %cst_58 = arith.constant dense<0.000000e+00> : vector<8x384xf32>
    %318 = tpu.matmul %317, %23, %cst_58 {dimension_numbers = #tpu.dot_dimension_numbers<[1], [0], [0], [1], [0, 0, 1, 1], [], []>} : vector<8x128xbf16>, vector<128x384xbf16>, vector<8x384xf32> -> vector<8x384xf32>
    %319 = vector.broadcast %25 : vector<1x384xf32> to vector<8x384xf32>
    %320 = arith.addf %318, %319 : vector<8x384xf32>
    %321 = vector.extract_strided_slice %316 {offsets = [0, 0], sizes = [8, 128], strides = [1, 1]} : vector<8x384xf32> to vector<8x128xf32>
    %322 = vector.extract_strided_slice %320 {offsets = [0, 0], sizes = [8, 128], strides = [1, 1]} : vector<8x384xf32> to vector<8x128xf32>
    %323 = arith.addf %321, %322 : vector<8x128xf32>
    %324 = arith.negf %323 : vector<8x128xf32>
    %325 = math.exp %324 : vector<8x128xf32>
    %cst_59 = arith.constant 1.000000e+00 : f32
    %326 = vector.broadcast %cst_59 : f32 to vector<8x128xf32>
    %327 = arith.addf %326, %325 : vector<8x128xf32>
    %328 = arith.divf %326, %327 : vector<8x128xf32>
    %329 = vector.extract_strided_slice %316 {offsets = [0, 128], sizes = [8, 128], strides = [1, 1]} : vector<8x384xf32> to vector<8x128xf32>
    %330 = vector.extract_strided_slice %320 {offsets = [0, 128], sizes = [8, 128], strides = [1, 1]} : vector<8x384xf32> to vector<8x128xf32>
    %331 = arith.addf %329, %330 : vector<8x128xf32>
    %332 = arith.negf %331 : vector<8x128xf32>
    %333 = math.exp %332 : vector<8x128xf32>
    %cst_60 = arith.constant 1.000000e+00 : f32
    %334 = vector.broadcast %cst_60 : f32 to vector<8x128xf32>
    %335 = arith.addf %334, %333 : vector<8x128xf32>
    %336 = arith.divf %334, %335 : vector<8x128xf32>
    %337 = vector.extract_strided_slice %316 {offsets = [0, 256], sizes = [8, 128], strides = [1, 1]} : vector<8x384xf32> to vector<8x128xf32>
    %338 = vector.extract_strided_slice %320 {offsets = [0, 256], sizes = [8, 128], strides = [1, 1]} : vector<8x384xf32> to vector<8x128xf32>
    %339 = arith.mulf %328, %338 : vector<8x128xf32>
    %340 = arith.addf %337, %339 : vector<8x128xf32>
    %341 = math.tanh %340 : vector<8x128xf32>
    %cst_61 = arith.constant 1.000000e+00 : f32
    %342 = vector.broadcast %cst_61 : f32 to vector<8x128xf32>
    %343 = arith.subf %342, %336 : vector<8x128xf32>
    %344 = arith.mulf %343, %341 : vector<8x128xf32>
    %345 = arith.mulf %336, %314 : vector<8x128xf32>
    %346 = arith.addf %344, %345 : vector<8x128xf32>
    %c72 = arith.constant 72 : index
    %c0_62 = arith.constant 0 : index
    %347 = vector.load %arg5[%c72, %c0_62] : memref<96x128xf32, #tpu.memory_space<vmem>>, vector<8x128xf32>
    tpu.vector_store %arg5[%c72, %c0_62], %346 {strides = array<i32>} : memref<96x128xf32, #tpu.memory_space<vmem>>, vector<8x128xf32>,
    %348 = vector.extract_strided_slice %22 {offsets = [80, 0], sizes = [8, 384], strides = [1, 1]} : vector<96x384xf32> to vector<8x384xf32>
    %349 = arith.truncf %346 : vector<8x128xf32> to vector<8x128xbf16>
    %cst_63 = arith.constant dense<0.000000e+00> : vector<8x384xf32>
    %350 = tpu.matmul %349, %23, %cst_63 {dimension_numbers = #tpu.dot_dimension_numbers<[1], [0], [0], [1], [0, 0, 1, 1], [], []>} : vector<8x128xbf16>, vector<128x384xbf16>, vector<8x384xf32> -> vector<8x384xf32>
    %351 = vector.broadcast %25 : vector<1x384xf32> to vector<8x384xf32>
    %352 = arith.addf %350, %351 : vector<8x384xf32>
    %353 = vector.extract_strided_slice %348 {offsets = [0, 0], sizes = [8, 128], strides = [1, 1]} : vector<8x384xf32> to vector<8x128xf32>
    %354 = vector.extract_strided_slice %352 {offsets = [0, 0], sizes = [8, 128], strides = [1, 1]} : vector<8x384xf32> to vector<8x128xf32>
    %355 = arith.addf %353, %354 : vector<8x128xf32>
    %356 = arith.negf %355 : vector<8x128xf32>
    %357 = math.exp %356 : vector<8x128xf32>
    %cst_64 = arith.constant 1.000000e+00 : f32
    %358 = vector.broadcast %cst_64 : f32 to vector<8x128xf32>
    %359 = arith.addf %358, %357 : vector<8x128xf32>
    %360 = arith.divf %358, %359 : vector<8x128xf32>
    %361 = vector.extract_strided_slice %348 {offsets = [0, 128], sizes = [8, 128], strides = [1, 1]} : vector<8x384xf32> to vector<8x128xf32>
    %362 = vector.extract_strided_slice %352 {offsets = [0, 128], sizes = [8, 128], strides = [1, 1]} : vector<8x384xf32> to vector<8x128xf32>
    %363 = arith.addf %361, %362 : vector<8x128xf32>
    %364 = arith.negf %363 : vector<8x128xf32>
    %365 = math.exp %364 : vector<8x128xf32>
    %cst_65 = arith.constant 1.000000e+00 : f32
    %366 = vector.broadcast %cst_65 : f32 to vector<8x128xf32>
    %367 = arith.addf %366, %365 : vector<8x128xf32>
    %368 = arith.divf %366, %367 : vector<8x128xf32>
    %369 = vector.extract_strided_slice %348 {offsets = [0, 256], sizes = [8, 128], strides = [1, 1]} : vector<8x384xf32> to vector<8x128xf32>
    %370 = vector.extract_strided_slice %352 {offsets = [0, 256], sizes = [8, 128], strides = [1, 1]} : vector<8x384xf32> to vector<8x128xf32>
    %371 = arith.mulf %360, %370 : vector<8x128xf32>
    %372 = arith.addf %369, %371 : vector<8x128xf32>
    %373 = math.tanh %372 : vector<8x128xf32>
    %cst_66 = arith.constant 1.000000e+00 : f32
    %374 = vector.broadcast %cst_66 : f32 to vector<8x128xf32>
    %375 = arith.subf %374, %368 : vector<8x128xf32>
    %376 = arith.mulf %375, %373 : vector<8x128xf32>
    %377 = arith.mulf %368, %346 : vector<8x128xf32>
    %378 = arith.addf %376, %377 : vector<8x128xf32>
    %c4_i32 = arith.constant 4 : i32
    %379 = vector.broadcast %c4_i32 : i32 to vector<8x1xi32>
    %380 = arith.cmpi slt, %26, %379 : vector<8x1xi32>
    %381 = vector.shape_cast %380 : vector<8x1xi1> to vector<8x1xi1>
    %382 = vector.broadcast %381 : vector<8x1xi1> to vector<8x128xi1>
    %383 = arith.select %382, %378, %346 : vector<8x128xi1>, vector<8x128xf32>
    %c80 = arith.constant 80 : index
    %c0_67 = arith.constant 0 : index
    %384 = vector.load %arg5[%c80, %c0_67] : memref<96x128xf32, #tpu.memory_space<vmem>>, vector<8x128xf32>
    tpu.vector_store %arg5[%c80, %c0_67], %383 {strides = array<i32>} : memref<96x128xf32, #tpu.memory_space<vmem>>, vector<8x128xf32>,
    %385 = vector.extract_strided_slice %22 {offsets = [88, 0], sizes = [8, 384], strides = [1, 1]} : vector<96x384xf32> to vector<8x384xf32>
    %386 = arith.truncf %383 : vector<8x128xf32> to vector<8x128xbf16>
    %cst_68 = arith.constant dense<0.000000e+00> : vector<8x384xf32>
    %387 = tpu.matmul %386, %23, %cst_68 {dimension_numbers = #tpu.dot_dimension_numbers<[1], [0], [0], [1], [0, 0, 1, 1], [], []>} : vector<8x128xbf16>, vector<128x384xbf16>, vector<8x384xf32> -> vector<8x384xf32>
    %388 = vector.broadcast %25 : vector<1x384xf32> to vector<8x384xf32>
    %389 = arith.addf %387, %388 : vector<8x384xf32>
    %390 = vector.extract_strided_slice %385 {offsets = [0, 0], sizes = [8, 128], strides = [1, 1]} : vector<8x384xf32> to vector<8x128xf32>
    %391 = vector.extract_strided_slice %389 {offsets = [0, 0], sizes = [8, 128], strides = [1, 1]} : vector<8x384xf32> to vector<8x128xf32>
    %392 = arith.addf %390, %391 : vector<8x128xf32>
    %393 = arith.negf %392 : vector<8x128xf32>
    %394 = math.exp %393 : vector<8x128xf32>
    %cst_69 = arith.constant 1.000000e+00 : f32
    %395 = vector.broadcast %cst_69 : f32 to vector<8x128xf32>
    %396 = arith.addf %395, %394 : vector<8x128xf32>
    %397 = arith.divf %395, %396 : vector<8x128xf32>
    %398 = vector.extract_strided_slice %385 {offsets = [0, 128], sizes = [8, 128], strides = [1, 1]} : vector<8x384xf32> to vector<8x128xf32>
    %399 = vector.extract_strided_slice %389 {offsets = [0, 128], sizes = [8, 128], strides = [1, 1]} : vector<8x384xf32> to vector<8x128xf32>
    %400 = arith.addf %398, %399 : vector<8x128xf32>
    %401 = arith.negf %400 : vector<8x128xf32>
    %402 = math.exp %401 : vector<8x128xf32>
    %cst_70 = arith.constant 1.000000e+00 : f32
    %403 = vector.broadcast %cst_70 : f32 to vector<8x128xf32>
    %404 = arith.addf %403, %402 : vector<8x128xf32>
    %405 = arith.divf %403, %404 : vector<8x128xf32>
    %406 = vector.extract_strided_slice %385 {offsets = [0, 256], sizes = [8, 128], strides = [1, 1]} : vector<8x384xf32> to vector<8x128xf32>
    %407 = vector.extract_strided_slice %389 {offsets = [0, 256], sizes = [8, 128], strides = [1, 1]} : vector<8x384xf32> to vector<8x128xf32>
    %408 = arith.mulf %397, %407 : vector<8x128xf32>
    %409 = arith.addf %406, %408 : vector<8x128xf32>
    %410 = math.tanh %409 : vector<8x128xf32>
    %cst_71 = arith.constant 1.000000e+00 : f32
    %411 = vector.broadcast %cst_71 : f32 to vector<8x128xf32>
    %412 = arith.subf %411, %405 : vector<8x128xf32>
    %413 = arith.mulf %412, %410 : vector<8x128xf32>
    %414 = arith.mulf %405, %383 : vector<8x128xf32>
    %415 = arith.addf %413, %414 : vector<8x128xf32>
    %c2_i32 = arith.constant 2 : i32
    %416 = vector.broadcast %c2_i32 : i32 to vector<8x1xi32>
    %417 = arith.cmpi slt, %26, %416 : vector<8x1xi32>
    %418 = vector.shape_cast %417 : vector<8x1xi1> to vector<8x1xi1>
    %419 = vector.broadcast %418 : vector<8x1xi1> to vector<8x128xi1>
    %420 = arith.select %419, %415, %383 : vector<8x128xi1>, vector<8x128xf32>
    %c88 = arith.constant 88 : index
    %c0_72 = arith.constant 0 : index
    %421 = vector.load %arg5[%c88, %c0_72] : memref<96x128xf32, #tpu.memory_space<vmem>>, vector<8x128xf32>
    tpu.vector_store %arg5[%c88, %c0_72], %420 {strides = array<i32>} : memref<96x128xf32, #tpu.memory_space<vmem>>, vector<8x128xf32>,
    %c0_73 = arith.constant 0 : index
    %c0_74 = arith.constant 0 : index
    %422 = vector.load %arg5[%c0_73, %c0_74] : memref<96x128xf32, #tpu.memory_space<vmem>>, vector<96x128xf32>
    %423 = vector.shape_cast %422 : vector<96x128xf32> to vector<12x8x128xf32>
    %424 = vector.shape_cast %420 : vector<8x128xf32> to vector<1x8x128xf32>
    %425 = vector.broadcast %424 : vector<1x8x128xf32> to vector<12x8x128xf32>
    %426 = arith.mulf %423, %425 : vector<12x8x128xf32>
    %427 = vector.shape_cast %426 : vector<12x8x128xf32> to vector<96x128xf32>
    %c96 = arith.constant 96 : index
    %c0_75 = arith.constant 0 : index
    %428 = vector.load %arg3[%c96, %c0_75] : memref<368x128xf32, #tpu.memory_space<vmem>>, vector<128x4xf32>
    %c0_76 = arith.constant 0 : index
    %c0_77 = arith.constant 0 : index
    %429 = vector.load %arg3[%c0_76, %c0_77] : memref<368x128xf32, #tpu.memory_space<vmem>>, vector<96x4xf32>
    %cst_78 = arith.constant dense<0.000000e+00> : vector<96x4xf32>
    %430 = tpu.matmul %427, %428, %cst_78 {dimension_numbers = #tpu.dot_dimension_numbers<[1], [0], [0], [1], [0, 0, 1, 1], [], []>} : vector<96x128xf32>, vector<128x4xf32>, vector<96x4xf32> -> vector<96x4xf32>
    %431 = arith.addf %430, %429 : vector<96x4xf32>
    %432 = vector.shape_cast %431 : vector<96x4xf32> to vector<12x8x4xf32>
    %cst_79 = arith.constant dense<0xFF800000> : vector<8x4xf32>
    %433 = vector.multi_reduction <maximumf>, %432, %cst_79 [0] : vector<12x8x4xf32> to vector<8x4xf32>
    %434 = vector.shape_cast %433 : vector<8x4xf32> to vector<1x8x4xf32>
    %435 = vector.broadcast %434 : vector<1x8x4xf32> to vector<12x8x4xf32>
    %436 = arith.subf %432, %435 : vector<12x8x4xf32>
    %437 = math.exp %436 : vector<12x8x4xf32>
    %cst_80 = arith.constant dense<0.000000e+00> : vector<8x4xf32>
    %438 = vector.multi_reduction <add>, %437, %cst_80 [0] : vector<12x8x4xf32> to vector<8x4xf32>
    %439 = vector.shape_cast %438 : vector<8x4xf32> to vector<1x8x4xf32>
    %440 = vector.broadcast %439 : vector<1x8x4xf32> to vector<12x8x4xf32>
    %441 = arith.divf %437, %440 : vector<12x8x4xf32>
    %c224 = arith.constant 224 : index
    %c0_81 = arith.constant 0 : index
    %442 = vector.load %arg3[%c224, %c0_81] : memref<368x128xf32, #tpu.memory_space<vmem>>, vector<4x128xf32>
    %443 = vector.shape_cast %441 : vector<12x8x4xf32> to vector<96x4xf32>
    %cst_82 = arith.constant dense<0.000000e+00> : vector<96x128xf32>
    %444 = tpu.matmul %443, %442, %cst_82 {dimension_numbers = #tpu.dot_dimension_numbers<[1], [0], [0], [1], [0, 0, 1, 1], [], []>} : vector<96x4xf32>, vector<4x128xf32>, vector<96x128xf32> -> vector<96x128xf32>
    %445 = vector.shape_cast %444 : vector<96x128xf32> to vector<12x8x128xf32>
    %446 = arith.mulf %445, %423 : vector<12x8x128xf32>
    %cst_83 = arith.constant dense<0.000000e+00> : vector<8x128xf32>
    %447 = vector.multi_reduction <add>, %446, %cst_83 [0] : vector<12x8x128xf32> to vector<8x128xf32>
    %c232 = arith.constant 232 : index
    %c0_84 = arith.constant 0 : index
    %448 = vector.load %arg3[%c232, %c0_84] : memref<368x128xf32, #tpu.memory_space<vmem>>, vector<8x128xf32>
    %449 = arith.mulf %447, %448 : vector<8x128xf32>
    %450 = vector.extract_strided_slice %449 {offsets = [0, 0], sizes = [2, 128], strides = [1, 1]} : vector<8x128xf32> to vector<2x128xf32>
    %451 = vector.extract_strided_slice %449 {offsets = [2, 0], sizes = [2, 128], strides = [1, 1]} : vector<8x128xf32> to vector<2x128xf32>
    %452 = arith.addf %450, %451 : vector<2x128xf32>
    %453 = vector.extract_strided_slice %449 {offsets = [4, 0], sizes = [2, 128], strides = [1, 1]} : vector<8x128xf32> to vector<2x128xf32>
    %454 = arith.addf %452, %453 : vector<2x128xf32>
    %455 = vector.extract_strided_slice %454 {offsets = [0, 0], sizes = [2, 32], strides = [1, 1]} : vector<2x128xf32> to vector<2x32xf32>
    %456 = vector.extract_strided_slice %454 {offsets = [0, 32], sizes = [2, 32], strides = [1, 1]} : vector<2x128xf32> to vector<2x32xf32>
    %457 = arith.addf %455, %456 : vector<2x32xf32>
    %458 = vector.extract_strided_slice %454 {offsets = [0, 64], sizes = [2, 32], strides = [1, 1]} : vector<2x128xf32> to vector<2x32xf32>
    %459 = arith.addf %457, %458 : vector<2x32xf32>
    %460 = vector.extract_strided_slice %454 {offsets = [0, 96], sizes = [2, 32], strides = [1, 1]} : vector<2x128xf32> to vector<2x32xf32>
    %c0_85 = arith.constant 0 : index
    %c0_86 = arith.constant 0 : index
    %461 = vector.load %arg1[%c0_85, %c0_86] : memref<2x8xf32, #tpu.memory_space<vmem>>, vector<2x8xf32>
    %c240 = arith.constant 240 : index
    %c0_87 = arith.constant 0 : index
    %462 = vector.load %arg3[%c240, %c0_87] : memref<368x128xf32, #tpu.memory_space<vmem>>, vector<8x32xf32>
    %cst_88 = arith.constant dense<0.000000e+00> : vector<2x32xf32>
    %463 = tpu.matmul %461, %462, %cst_88 {dimension_numbers = #tpu.dot_dimension_numbers<[1], [0], [0], [1], [0, 0, 1, 1], [], []>} : vector<2x8xf32>, vector<8x32xf32>, vector<2x32xf32> -> vector<2x32xf32>
    %c248 = arith.constant 248 : index
    %c0_89 = arith.constant 0 : index
    %464 = vector.load %arg3[%c248, %c0_89] : memref<368x128xf32, #tpu.memory_space<vmem>>, vector<1x32xf32>
    %465 = vector.broadcast %464 : vector<1x32xf32> to vector<2x32xf32>
    %466 = arith.addf %463, %465 : vector<2x32xf32>
    %467 = tpu.concatenate %459, %466 in 1 : vector<2x32xf32>, vector<2x32xf32> -> vector<2x64xf32>
    %c256 = arith.constant 256 : index
    %c0_90 = arith.constant 0 : index
    %468 = vector.load %arg3[%c256, %c0_90] : memref<368x128xf32, #tpu.memory_space<vmem>>, vector<64x32xf32>
    %cst_91 = arith.constant dense<0.000000e+00> : vector<2x32xf32>
    %469 = tpu.matmul %467, %468, %cst_91 {dimension_numbers = #tpu.dot_dimension_numbers<[1], [0], [0], [1], [0, 0, 1, 1], [], []>} : vector<2x64xf32>, vector<64x32xf32>, vector<2x32xf32> -> vector<2x32xf32>
    %c320 = arith.constant 320 : index
    %c0_92 = arith.constant 0 : index
    %470 = vector.load %arg3[%c320, %c0_92] : memref<368x128xf32, #tpu.memory_space<vmem>>, vector<1x32xf32>
    %471 = vector.broadcast %470 : vector<1x32xf32> to vector<2x32xf32>
    %472 = arith.addf %469, %471 : vector<2x32xf32>
    %473 = arith.negf %472 : vector<2x32xf32>
    %474 = math.exp %473 : vector<2x32xf32>
    %cst_93 = arith.constant 1.000000e+00 : f32
    %475 = vector.broadcast %cst_93 : f32 to vector<2x32xf32>
    %476 = arith.addf %475, %474 : vector<2x32xf32>
    %477 = arith.divf %475, %476 : vector<2x32xf32>
    %478 = arith.mulf %477, %459 : vector<2x32xf32>
    %cst_94 = arith.constant 1.000000e+00 : f32
    %479 = vector.broadcast %cst_94 : f32 to vector<2x32xf32>
    %480 = arith.subf %479, %477 : vector<2x32xf32>
    %481 = arith.mulf %480, %460 : vector<2x32xf32>
    %482 = arith.addf %478, %481 : vector<2x32xf32>
    %c328 = arith.constant 328 : index
    %c0_95 = arith.constant 0 : index
    %483 = vector.load %arg3[%c328, %c0_95] : memref<368x128xf32, #tpu.memory_space<vmem>>, vector<32x2xf32>
    %cst_96 = arith.constant dense<0.000000e+00> : vector<2x2xf32>
    %484 = tpu.matmul %482, %483, %cst_96 {dimension_numbers = #tpu.dot_dimension_numbers<[1], [0], [0], [1], [0, 0, 1, 1], [], []>} : vector<2x32xf32>, vector<32x2xf32>, vector<2x2xf32> -> vector<2x2xf32>
    %c360 = arith.constant 360 : index
    %c0_97 = arith.constant 0 : index
    %485 = vector.load %arg3[%c360, %c0_97] : memref<368x128xf32, #tpu.memory_space<vmem>>, vector<1x2xf32>
    %486 = vector.broadcast %485 : vector<1x2xf32> to vector<2x2xf32>
    %487 = arith.addf %484, %486 : vector<2x2xf32>
    %c0_98 = arith.constant 0 : index
    %c0_99 = arith.constant 0 : index
    %488 = vector.load %arg4[%c0_98, %c0_99] : memref<2x2xf32, #tpu.memory_space<vmem>>, vector<2x2xf32>
    tpu.vector_store %arg4[%c0_98, %c0_99], %487 {strides = array<i32>} : memref<2x2xf32, #tpu.memory_space<vmem>>, vector<2x2xf32>,
    return
  }
}

</mosaic_0001>

<llo_original>
// kernel: deep_basic_forward.1
$region0: #{deep_basic_forward.1}
  #allocation0 [shape = 'u32[]', space=smem, size = 0x4, offset = 0x4, fixed_abs, tag = 'smem constant byte address 0x4 - core index']
  #allocation1 [shape = 'u32[144,128]{1,0:T(1,128)}', space=vmem, size = 0x12000, scoped, tag = 'internal scratch']
  #allocation2 [shape = 'f32[96,128]{1,0:T(8,128)}', space=vmem, size = 0xc000, scoped, tag = 'scratch operand']
  %s0 = inlined_call_operand.vmem [shape: bf16[96,192], index: 0, kind: input, shape index: {}]
  %s1 = inlined_call_operand.vmem [shape: f32[2,8], index: 1, kind: input, shape index: {}]
  %s2 = inlined_call_operand.vmem [shape: bf16[768,384], index: 2, kind: input, shape index: {}]
  %s3 = inlined_call_operand.vmem [shape: f32[368,128], index: 3, kind: input, shape index: {}]
  %s4 = inlined_call_operand.hbm [shape: f32[2,2], index: 4, kind: output, shape index: {}]
  %s5 = sld [smem:[#allocation0]]
  $region26: #{deep_basic_forward.1} parent=0
    _
  %s7 = ssub.s32 1, %s5
  %s8 = scalar_select 0, %s7, %s5
  $region1: #{deep_basic_forward.1} parent=0
    #allocation3 [shape = 'u8[1024]{0}', space=vmem, size = 0x400, scoped, tag = 'output window, operand 0, single buffered']
    #allocation4 [shape = 's32[1]{0}', space=sflag, size = 0x4, scoped, tag = 'scoped memory for deep_basic_forward.1']
    %9 = vsyncpa [#allocation4], 0
    // Predicated region
    $region2: #{deep_basic_forward.1} parent=1 // pred_check
      _
    $region3: #{deep_basic_forward.1} parent=1 // pred_check_branch
      %11 = sbr.rel (0) target = $region5
    $region4: #{deep_basic_forward.1} parent=1 // pred_region
      _
    $region5: #{deep_basic_forward.1} parent=1 // pred_fallthru
      _
    // Predicated region
    $region6: #{deep_basic_forward.1} parent=1 // pred_check
      _
    $region7: #{deep_basic_forward.1} parent=1 // pred_check_branch
      %13 = sbr.rel (0) target = $region9
    $region8: #{deep_basic_forward.1} parent=1 // pred_region
      _
    $region9: #{deep_basic_forward.1} parent=1 // pred_fallthru
      _
    // Predicated region
    $region10: #{deep_basic_forward.1} parent=1 // pred_check
      _
    $region11: #{deep_basic_forward.1} parent=1 // pred_check_branch
      %15 = sbr.rel (0) target = $region13
    $region12: #{deep_basic_forward.1} parent=1 // pred_region
      _
    $region13: #{deep_basic_forward.1} parent=1 // pred_fallthru
      _
    // Predicated region
    $region14: #{deep_basic_forward.1} parent=1 // pred_check
      _
    $region15: #{deep_basic_forward.1} parent=1 // pred_check_branch
      %17 = sbr.rel (0) target = $region17
    $region16: #{deep_basic_forward.1} parent=1 // pred_region
      _
    $region17: #{deep_basic_forward.1} parent=1 // pred_fallthru
      _
    %v19 = vld [vmem:[%s0] sm:$0xff]
    %v20 = vld [vmem:[%s0 + $0x8] sm:$0xff]
    %v21 = vld [vmem:[%s0 + $0x10] sm:$0xff]
    %v22 = vld [vmem:[%s0 + $0x18] sm:$0xff]
    %v23 = vld [vmem:[%s0 + $0x20] sm:$0xff]
    %v24 = vld [vmem:[%s0 + $0x28] sm:$0xff]
    %v25 = vld [vmem:[%s0 + $0x30] sm:$0xff]
    %v26 = vld [vmem:[%s0 + $0x38] sm:$0xff]
    %v27 = vld [vmem:[%s0 + $0x40] sm:$0xff]
    %v28 = vld [vmem:[%s0 + $0x48] sm:$0xff]
    %v29 = vld [vmem:[%s0 + $0x50] sm:$0xff]
    %v30 = vld [vmem:[%s0 + $0x58] sm:$0xff]
    %v31 = vld [vmem:[%s2 + $0x300] sm:$0xff]
    %v32 = vld [vmem:[%s2 + $0x308] sm:$0xf]
    %v33 = vld [vmem:[%s2 + $0x30c] sm:$0xff]
    %v34 = vld [vmem:[%s2 + $0x314] sm:$0xf]
    %v35 = vld [vmem:[%s2 + $0x318] sm:$0xff]
    %v36 = vld [vmem:[%s2 + $0x320] sm:$0xf]
    %v37 = vld [vmem:[%s2 + $0x324] sm:$0xff]
    %v38 = vld [vmem:[%s2 + $0x32c] sm:$0xf]
    %v39 = vld [vmem:[%s2 + $0x330] sm:$0xff]
    %v40 = vld [vmem:[%s2 + $0x338] sm:$0xf]
    %v41 = vld [vmem:[%s2 + $0x33c] sm:$0xff]
    %v42 = vld [vmem:[%s2 + $0x344] sm:$0xf]
    %v43 = vld [vmem:[%s2 + $0x348] sm:$0xff]
    %v44 = vld [vmem:[%s2 + $0x350] sm:$0xf]
    %v45 = vld [vmem:[%s2 + $0x354] sm:$0xff]
    %v46 = vld [vmem:[%s2 + $0x35c] sm:$0xf]
    %v47 = vld [vmem:[%s2 + $0x360] sm:$0xff]
    %v48 = vld [vmem:[%s2 + $0x368] sm:$0xf]
    %v49 = vld [vmem:[%s2 + $0x36c] sm:$0xff]
    %v50 = vld [vmem:[%s2 + $0x374] sm:$0xf]
    %v51 = vld [vmem:[%s2 + $0x378] sm:$0xff]
    %v52 = vld [vmem:[%s2 + $0x380] sm:$0xf]
    %v53 = vld [vmem:[%s2 + $0x384] sm:$0xff]
    %v54 = vld [vmem:[%s2 + $0x38c] sm:$0xf]
    %v55 = vld [vmem:[%s2 + $0x390] sm:$0xff]
    %v56 = vld [vmem:[%s2 + $0x398] sm:$0xf]
    %v57 = vld [vmem:[%s2 + $0x39c] sm:$0xff]
    %v58 = vld [vmem:[%s2 + $0x3a4] sm:$0xf]
    %v59 = vld [vmem:[%s2 + $0x3a8] sm:$0xff]
    %v60 = vld [vmem:[%s2 + $0x3b0] sm:$0xf]
    %v61 = vld [vmem:[%s2 + $0x3b4] sm:$0xff]
    %v62 = vld [vmem:[%s2 + $0x3bc] sm:$0xf]
    %v63 = vld [vmem:[%s2 + $0x3c0] sm:$0xff]
    %v64 = vld [vmem:[%s2 + $0x3c8] sm:$0xf]
    %v65 = vld [vmem:[%s2 + $0x3cc] sm:$0xff]
    %v66 = vld [vmem:[%s2 + $0x3d4] sm:$0xf]
    %v67 = vld [vmem:[%s2 + $0x3d8] sm:$0xff]
    %v68 = vld [vmem:[%s2 + $0x3e0] sm:$0xf]
    %v69 = vld [vmem:[%s2 + $0x3e4] sm:$0xff]
    %v70 = vld [vmem:[%s2 + $0x3ec] sm:$0xf]
    %v71 = vld [vmem:[%s2 + $0x3f0] sm:$0xff]
    %v72 = vld [vmem:[%s2 + $0x3f8] sm:$0xf]
    %v73 = vld [vmem:[%s2 + $0x3fc] sm:$0xff]
    %v74 = vld [vmem:[%s2 + $0x404] sm:$0xf]
    %v75 = vld [vmem:[%s2 + $0x408] sm:$0xff]
    %v76 = vld [vmem:[%s2 + $0x410] sm:$0xf]
    %v77 = vld [vmem:[%s2 + $0x414] sm:$0xff]
    %v78 = vld [vmem:[%s2 + $0x41c] sm:$0xf]
    %v79 = vld [vmem:[%s2 + $0x450] sm:$0x11]
    %v80 = vld [vmem:[%s2 + $0x458] sm:$0x1]
    %v81 = vunpack.c.l.bf16 %v79
    %v82 = vunpack.c.h.bf16 %v79
    %v83 = vunpack.c.l.bf16 %v80
    %v84 = vlaneseq
    %v85 = vshrl.u32 %v84, 7
    %v86 = vsub.s32 0, %v85
    %v87 = vrot.slane %v81, %v86
    %v88 = vlaneseq
    %v89 = vshrl.u32 %v88, 7
    %v90 = vsub.s32 0, %v89
    %v91 = vrot.slane %v82, %v90
    %v92 = vlaneseq
    %v93 = vshrl.u32 %v92, 7
    %v94 = vsub.s32 0, %v93
    %v95 = vrot.slane %v83, %v94
    %v108 = vunpack.c.l.b16 %v19
    %v109 = vunpack.c.h.b16 %v19
    %v110 = vunpack.c.l.b16 %v20
    %v111 = vunpack.c.h.b16 %v20
    %v112 = vunpack.c.l.b16 %v21
    %v113 = vunpack.c.h.b16 %v21
    %v114 = vunpack.c.l.b16 %v22
    %v115 = vunpack.c.h.b16 %v22
    %v116 = vunpack.c.l.b16 %v23
    %v117 = vunpack.c.h.b16 %v23
    %v118 = vunpack.c.l.b16 %v24
    %v119 = vunpack.c.h.b16 %v24
    %v120 = vunpack.c.l.b16 %v25
    %v121 = vunpack.c.h.b16 %v25
    %v122 = vunpack.c.l.b16 %v26
    %v123 = vunpack.c.h.b16 %v26
    %v124 = vunpack.c.l.b16 %v27
    %v125 = vunpack.c.h.b16 %v27
    %v126 = vunpack.c.l.b16 %v28
    %v127 = vunpack.c.h.b16 %v28
    %v128 = vunpack.c.l.b16 %v29
    %v129 = vunpack.c.h.b16 %v29
    %v130 = vunpack.c.l.b16 %v30
    %v131 = vunpack.c.h.b16 %v30
    %v132 = vpack.c.b16 %v110, %v108
    %v133 = vpack.c.b16 %v111, %v109
    %v134 = vpack.c.b16 %v114, %v112
    %v135 = vpack.c.b16 %v115, %v113
    %v136 = vpack.c.b16 %v118, %v116
    %v137 = vpack.c.b16 %v119, %v117
    %v138 = vpack.c.b16 %v122, %v120
    %v139 = vpack.c.b16 %v123, %v121
    %v140 = vpack.c.b16 %v126, %v124
    %v141 = vpack.c.b16 %v127, %v125
    %v142 = vpack.c.b16 %v130, %v128
    %v143 = vpack.c.b16 %v131, %v129
    %v198 = vunpack.c.l.b16 %v31
    %v199 = vunpack.c.h.b16 %v31
    %v200 = vunpack.c.l.b16 %v32
    %v201 = vunpack.c.l.b16 %v33
    %v202 = vunpack.c.h.b16 %v33
    %v203 = vunpack.c.l.b16 %v34
    %v204 = vunpack.c.l.b16 %v35
    %v205 = vunpack.c.h.b16 %v35
    %v206 = vunpack.c.l.b16 %v36
    %v207 = vunpack.c.l.b16 %v37
    %v208 = vunpack.c.h.b16 %v37
    %v209 = vunpack.c.l.b16 %v38
    %v210 = vunpack.c.l.b16 %v39
    %v211 = vunpack.c.h.b16 %v39
    %v212 = vunpack.c.l.b16 %v40
    %v213 = vunpack.c.l.b16 %v41
    %v214 = vunpack.c.h.b16 %v41
    %v215 = vunpack.c.l.b16 %v42
    %v216 = vunpack.c.l.b16 %v43
    %v217 = vunpack.c.h.b16 %v43
    %v218 = vunpack.c.l.b16 %v44
    %v219 = vunpack.c.l.b16 %v45
    %v220 = vunpack.c.h.b16 %v45
    %v221 = vunpack.c.l.b16 %v46
    %v222 = vunpack.c.l.b16 %v47
    %v223 = vunpack.c.h.b16 %v47
    %v224 = vunpack.c.l.b16 %v48
    %v225 = vunpack.c.l.b16 %v49
    %v226 = vunpack.c.h.b16 %v49
    %v227 = vunpack.c.l.b16 %v50
    %v228 = vunpack.c.l.b16 %v51
    %v229 = vunpack.c.h.b16 %v51
    %v230 = vunpack.c.l.b16 %v52
    %v231 = vunpack.c.l.b16 %v53
    %v232 = vunpack.c.h.b16 %v53
    %v233 = vunpack.c.l.b16 %v54
    %v234 = vunpack.c.l.b16 %v55
    %v235 = vunpack.c.h.b16 %v55
    %v236 = vunpack.c.l.b16 %v56
    %v237 = vunpack.c.l.b16 %v57
    %v238 = vunpack.c.h.b16 %v57
    %v239 = vunpack.c.l.b16 %v58
    %v240 = vunpack.c.l.b16 %v59
    %v241 = vunpack.c.h.b16 %v59
    %v242 = vunpack.c.l.b16 %v60
    %v243 = vunpack.c.l.b16 %v61
    %v244 = vunpack.c.h.b16 %v61
    %v245 = vunpack.c.l.b16 %v62
    %v246 = vunpack.c.l.b16 %v63
    %v247 = vunpack.c.h.b16 %v63
    %v248 = vunpack.c.l.b16 %v64
    %v249 = vunpack.c.l.b16 %v65
    %v250 = vunpack.c.h.b16 %v65
    %v251 = vunpack.c.l.b16 %v66
    %v252 = vunpack.c.l.b16 %v67
    %v253 = vunpack.c.h.b16 %v67
    %v254 = vunpack.c.l.b16 %v68
    %v255 = vunpack.c.l.b16 %v69
    %v256 = vunpack.c.h.b16 %v69
    %v257 = vunpack.c.l.b16 %v70
    %v258 = vunpack.c.l.b16 %v71
    %v259 = vunpack.c.h.b16 %v71
    %v260 = vunpack.c.l.b16 %v72
    %v261 = vunpack.c.l.b16 %v73
    %v262 = vunpack.c.h.b16 %v73
    %v263 = vunpack.c.l.b16 %v74
    %v264 = vunpack.c.l.b16 %v75
    %v265 = vunpack.c.h.b16 %v75
    %v266 = vunpack.c.l.b16 %v76
    %v267 = vunpack.c.l.b16 %v77
    %v268 = vunpack.c.h.b16 %v77
    %v269 = vunpack.c.l.b16 %v78
    %v270 = vpack.c.b16 %v201, %v198
    %v271 = vpack.c.b16 %v202, %v199
    %v272 = vpack.c.b16 %v203, %v200
    %v273 = vpack.c.b16 %v207, %v204
    %v274 = vpack.c.b16 %v208, %v205
    %v275 = vpack.c.b16 %v209, %v206
    %v276 = vpack.c.b16 %v213, %v210
    %v277 = vpack.c.b16 %v214, %v211
    %v278 = vpack.c.b16 %v215, %v212
    %v279 = vpack.c.b16 %v219, %v216
    %v280 = vpack.c.b16 %v220, %v217
    %v281 = vpack.c.b16 %v221, %v218
    %v282 = vpack.c.b16 %v225, %v222
    %v283 = vpack.c.b16 %v226, %v223
    %v284 = vpack.c.b16 %v227, %v224
    %v285 = vpack.c.b16 %v231, %v228
    %v286 = vpack.c.b16 %v232, %v229
    %v287 = vpack.c.b16 %v233, %v230
    %v288 = vpack.c.b16 %v237, %v234
    %v289 = vpack.c.b16 %v238, %v235
    %v290 = vpack.c.b16 %v239, %v236
    %v291 = vpack.c.b16 %v243, %v240
    %v292 = vpack.c.b16 %v244, %v241
    %v293 = vpack.c.b16 %v245, %v242
    %v294 = vpack.c.b16 %v249, %v246
    %v295 = vpack.c.b16 %v250, %v247
    %v296 = vpack.c.b16 %v251, %v248
    %v297 = vpack.c.b16 %v255, %v252
    %v298 = vpack.c.b16 %v256, %v253
    %v299 = vpack.c.b16 %v257, %v254
    %v300 = vpack.c.b16 %v261, %v258
    %v301 = vpack.c.b16 %v262, %v259
    %v302 = vpack.c.b16 %v263, %v260
    %v303 = vpack.c.b16 %v267, %v264
    %v304 = vpack.c.b16 %v268, %v265
    %v305 = vpack.c.b16 %v269, %v266
    %vm342 = vcmask 523264
    %v344 = vsel %vm342, %v133, 0
    %v347 = vsel %vm342, %v135, 0
    %v350 = vsel %vm342, %v137, 0
    %v353 = vsel %vm342, %v139, 0
    %v356 = vsel %vm342, %v141, 0
    %v359 = vsel %vm342, %v143, 0
    %361 = vmatprep.subr.bf16.mxu0 %v271
    %362 = vmatpush1.bf16.msra.mxu0 %v270
    %363 = vmatprep.subr.bf16.mxu0 %v274
    %364 = vmatpush1.bf16.msra.mxu0 %v273
    %365 = vmatprep.subr.bf16.mxu0 %v277
    %366 = vmatpush1.bf16.msra.mxu0 %v276
    %367 = vmatprep.subr.bf16.mxu0 %v280
    %368 = vmatpush1.bf16.msra.mxu0 %v279
    %369 = vmatprep.subr.bf16.mxu0 %v283
    %370 = vmatpush1.bf16.msra.mxu0 %v282
    %371 = vmatprep.subr.bf16.mxu0 %v286
    %372 = vmatpush1.bf16.msra.mxu0 %v285
    %373 = vmatprep.subr.bf16.mxu0 %v289
    %374 = vmatpush1.bf16.msra.mxu0 %v288
    %375 = vmatprep.subr.bf16.mxu0 %v292
    %376 = vmatpush1.bf16.msra.mxu0 %v291
    %377 = vmatprep.subr.bf16.mxu0 %v295
    %378 = vmatpush1.bf16.msra.mxu0 %v294
    %379 = vmatprep.subr.bf16.mxu0 %v298
    %380 = vmatpush1.bf16.msra.mxu0 %v297
    %381 = vmatprep.subr.bf16.mxu0 %v301
    %382 = vmatpush1.bf16.msra.mxu0 %v300
    %383 = vmatprep.subr.bf16.mxu0 %v304
    %384 = vmatpush1.bf16.msra.mxu0 %v303
    %385 = vmatprep.subr.bf16.mxu0 0
    %386 = vmatpush1.bf16.msra.mxu0 0
    %387 = vmatprep.subr.bf16.mxu0 0
    %388 = vmatpush1.bf16.msra.mxu0 0
    %389 = vmatprep.subr.bf16.mxu0 0
    %390 = vmatpush1.bf16.msra.mxu0 0
    %391 = vmatprep.subr.bf16.mxu0 0
    %392 = vmatpush1.bf16.msra.mxu0 0
    %393 = vmatprep.mubr.bf16.mxu0 %v344
    %394 = vmatmul.mubr.bf16.gmra.mrb[0].mxu0 %v132
    %v395 = vpop.f32.mrb[0].mxu0
    %v396 = vadd.f32 %v87, %v395
    %v397 = vpop.f32.mrb[0].mxu0
    %v398 = vadd.f32 %v91, %v397
    %v399 = vpop.f32.mrb[0].mxu0
    %v400 = vadd.f32 %v87, %v399
    %v401 = vpop.f32.mrb[0].mxu0
    %v402 = vadd.f32 %v91, %v401
    %403 = vmatprep.mubr.bf16.mxu0 %v347
    %404 = vmatmul.mubr.bf16.gmra.mrb[0].mxu0 %v134
    %v405 = vpop.f32.mrb[0].mxu0
    %v406 = vadd.f32 %v87, %v405
    %v407 = vpop.f32.mrb[0].mxu0
    %v408 = vadd.f32 %v91, %v407
    %v409 = vpop.f32.mrb[0].mxu0
    %v410 = vadd.f32 %v87, %v409
    %v411 = vpop.f32.mrb[0].mxu0
    %v412 = vadd.f32 %v91, %v411
    %413 = vmatprep.mubr.bf16.mxu0 %v350
    %414 = vmatmul.mubr.bf16.gmra.mrb[0].mxu0 %v136
    %v415 = vpop.f32.mrb[0].mxu0
    %v416 = vadd.f32 %v87, %v415
    %v417 = vpop.f32.mrb[0].mxu0
    %v418 = vadd.f32 %v91, %v417
    %v419 = vpop.f32.mrb[0].mxu0
    %v420 = vadd.f32 %v87, %v419
    %v421 = vpop.f32.mrb[0].mxu0
    %v422 = vadd.f32 %v91, %v421
    %423 = vmatprep.mubr.bf16.mxu0 %v353
    %424 = vmatmul.mubr.bf16.gmra.mrb[0].mxu0 %v138
    %v425 = vpop.f32.mrb[0].mxu0
    %v426 = vadd.f32 %v87, %v425
    %v427 = vpop.f32.mrb[0].mxu0
    %v428 = vadd.f32 %v91, %v427
    %v429 = vpop.f32.mrb[0].mxu0
    %v430 = vadd.f32 %v87, %v429
    %v431 = vpop.f32.mrb[0].mxu0
    %v432 = vadd.f32 %v91, %v431
    %433 = vmatprep.mubr.bf16.mxu0 %v356
    %434 = vmatmul.mubr.bf16.gmra.mrb[0].mxu0 %v140
    %v435 = vpop.f32.mrb[0].mxu0
    %v436 = vadd.f32 %v87, %v435
    %v437 = vpop.f32.mrb[0].mxu0
    %v438 = vadd.f32 %v91, %v437
    %v439 = vpop.f32.mrb[0].mxu0
    %v440 = vadd.f32 %v87, %v439
    %v441 = vpop.f32.mrb[0].mxu0
    %v442 = vadd.f32 %v91, %v441
    %443 = vmatprep.mubr.bf16.mxu0 %v359
    %444 = vmatmul.mubr.bf16.gmra.mrb[0].mxu0 %v142
    %v445 = vpop.f32.mrb[0].mxu0
    %v446 = vadd.f32 %v87, %v445
    %v447 = vpop.f32.mrb[0].mxu0
    %v448 = vadd.f32 %v91, %v447
    %v449 = vpop.f32.mrb[0].mxu0
    %v450 = vadd.f32 %v87, %v449
    %v451 = vpop.f32.mrb[0].mxu0
    %v452 = vadd.f32 %v91, %v451
    %453 = vdwg.mxu0
    %454 = vmatprep.subr.bf16.mxu0 0
    %455 = vmatpush1.bf16.msra.mxu0 %v272
    %456 = vmatprep.subr.bf16.mxu0 0
    %457 = vmatpush1.bf16.msra.mxu0 %v275
    %458 = vmatprep.subr.bf16.mxu0 0
    %459 = vmatpush1.bf16.msra.mxu0 %v278
    %460 = vmatprep.subr.bf16.mxu0 0
    %461 = vmatpush1.bf16.msra.mxu0 %v281
    %462 = vmatprep.subr.bf16.mxu0 0
    %463 = vmatpush1.bf16.msra.mxu0 %v284
    %464 = vmatprep.subr.bf16.mxu0 0
    %465 = vmatpush1.bf16.msra.mxu0 %v287
    %466 = vmatprep.subr.bf16.mxu0 0
    %467 = vmatpush1.bf16.msra.mxu0 %v290
    %468 = vmatprep.subr.bf16.mxu0 0
    %469 = vmatpush1.bf16.msra.mxu0 %v293
    %470 = vmatprep.subr.bf16.mxu0 0
    %471 = vmatpush1.bf16.msra.mxu0 %v296
    %472 = vmatprep.subr.bf16.mxu0 0
    %473 = vmatpush1.bf16.msra.mxu0 %v299
    %474 = vmatprep.subr.bf16.mxu0 0
    %475 = vmatpush1.bf16.msra.mxu0 %v302
    %476 = vmatprep.subr.bf16.mxu0 0
    %477 = vmatpush1.bf16.msra.mxu0 %v305
    %478 = vmatprep.subr.bf16.mxu0 0
    %479 = vmatpush1.bf16.msra.mxu0 0
    %480 = vmatprep.subr.bf16.mxu0 0
    %481 = vmatpush1.bf16.msra.mxu0 0
    %482 = vmatprep.subr.bf16.mxu0 0
    %483 = vmatpush1.bf16.msra.mxu0 0
    %484 = vmatprep.subr.bf16.mxu0 0
    %485 = vmatpush1.bf16.msra.mxu0 0
    %486 = vmatprep.mubr.bf16.mxu0 %v344
    %487 = vmatmul.mubr.bf16.gmra.mrb[0].mxu0 %v132
    %v488 = vpop.f32.mrb[0].mxu0
    %v489 = vadd.f32 %v95, %v488
    %v490 = vpop.f32.mrb[0].mxu0
    %v491 = vpop.f32.mrb[0].mxu0
    %v492 = vadd.f32 %v95, %v491
    %v493 = vpop.f32.mrb[0].mxu0
    %494 = vmatprep.mubr.bf16.mxu0 %v347
    %495 = vmatmul.mubr.bf16.gmra.mrb[0].mxu0 %v134
    %v496 = vpop.f32.mrb[0].mxu0
    %v497 = vadd.f32 %v95, %v496
    %v498 = vpop.f32.mrb[0].mxu0
    %v499 = vpop.f32.mrb[0].mxu0
    %v500 = vadd.f32 %v95, %v499
    %v501 = vpop.f32.mrb[0].mxu0
    %502 = vmatprep.mubr.bf16.mxu0 %v350
    %503 = vmatmul.mubr.bf16.gmra.mrb[0].mxu0 %v136
    %v504 = vpop.f32.mrb[0].mxu0
    %v505 = vadd.f32 %v95, %v504
    %v506 = vpop.f32.mrb[0].mxu0
    %v507 = vpop.f32.mrb[0].mxu0
    %v508 = vadd.f32 %v95, %v507
    %v509 = vpop.f32.mrb[0].mxu0
    %510 = vmatprep.mubr.bf16.mxu0 %v353
    %511 = vmatmul.mubr.bf16.gmra.mrb[0].mxu0 %v138
    %v512 = vpop.f32.mrb[0].mxu0
    %v513 = vadd.f32 %v95, %v512
    %v514 = vpop.f32.mrb[0].mxu0
    %v515 = vpop.f32.mrb[0].mxu0
    %v516 = vadd.f32 %v95, %v515
    %v517 = vpop.f32.mrb[0].mxu0
    %518 = vmatprep.mubr.bf16.mxu0 %v356
    %519 = vmatmul.mubr.bf16.gmra.mrb[0].mxu0 %v140
    %v520 = vpop.f32.mrb[0].mxu0
    %v521 = vadd.f32 %v95, %v520
    %v522 = vpop.f32.mrb[0].mxu0
    %v523 = vpop.f32.mrb[0].mxu0
    %v524 = vadd.f32 %v95, %v523
    %v525 = vpop.f32.mrb[0].mxu0
    %526 = vmatprep.mubr.bf16.mxu0 %v359
    %527 = vmatmul.mubr.bf16.gmra.mrb[0].mxu0 %v142
    %v528 = vpop.f32.mrb[0].mxu0
    %v529 = vadd.f32 %v95, %v528
    %v530 = vpop.f32.mrb[0].mxu0
    %v531 = vpop.f32.mrb[0].mxu0
    %v532 = vadd.f32 %v95, %v531
    %v533 = vpop.f32.mrb[0].mxu0
    %534 = vdwg.mxu0
    %v535 = vmax.f32 %v396, 0.0
    %v536 = vmax.f32 %v398, 0.0
    %v537 = vmax.f32 %v489, 0.0
    %v538 = vmax.f32 %v400, 0.0
    %v539 = vmax.f32 %v402, 0.0
    %v540 = vmax.f32 %v492, 0.0
    %v541 = vmax.f32 %v406, 0.0
    %v542 = vmax.f32 %v408, 0.0
    %v543 = vmax.f32 %v497, 0.0
    %v544 = vmax.f32 %v410, 0.0
    %v545 = vmax.f32 %v412, 0.0
    %v546 = vmax.f32 %v500, 0.0
    %v547 = vmax.f32 %v416, 0.0
    %v548 = vmax.f32 %v418, 0.0
    %v549 = vmax.f32 %v505, 0.0
    %v550 = vmax.f32 %v420, 0.0
    %v551 = vmax.f32 %v422, 0.0
    %v552 = vmax.f32 %v508, 0.0
    %v553 = vmax.f32 %v426, 0.0
    %v554 = vmax.f32 %v428, 0.0
    %v555 = vmax.f32 %v513, 0.0
    %v556 = vmax.f32 %v430, 0.0
    %v557 = vmax.f32 %v432, 0.0
    %v558 = vmax.f32 %v516, 0.0
    %v559 = vmax.f32 %v436, 0.0
    %v560 = vmax.f32 %v438, 0.0
    %v561 = vmax.f32 %v521, 0.0
    %v562 = vmax.f32 %v440, 0.0
    %v563 = vmax.f32 %v442, 0.0
    %v564 = vmax.f32 %v524, 0.0
    %v565 = vmax.f32 %v446, 0.0
    %v566 = vmax.f32 %v448, 0.0
    %v567 = vmax.f32 %v529, 0.0
    %v568 = vmax.f32 %v450, 0.0
    %v569 = vmax.f32 %v452, 0.0
    %v570 = vmax.f32 %v532, 0.0
    %v571 = vld [vmem:[%s2 + $0x468] sm:$0xff]
    %v572 = vld [vmem:[%s2 + $0x470] sm:$0xf]
    %v573 = vunpack.c.l.bf16 %v571
    %v574 = vunpack.c.h.bf16 %v571
    %v575 = vunpack.c.l.bf16 %v572
    %v576 = vmul.f32 %v535, %v573
    %v577 = vmul.f32 %v536, %v574
    %v578 = vmul.f32 %v537, %v575
    %v579 = vmul.f32 %v538, %v573
    %v580 = vmul.f32 %v539, %v574
    %v581 = vmul.f32 %v540, %v575
    %v582 = vmul.f32 %v541, %v573
    %v583 = vmul.f32 %v542, %v574
    %v584 = vmul.f32 %v543, %v575
    %v585 = vmul.f32 %v544, %v573
    %v586 = vmul.f32 %v545, %v574
    %v587 = vmul.f32 %v546, %v575
    %v588 = vmul.f32 %v547, %v573
    %v589 = vmul.f32 %v548, %v574
    %v590 = vmul.f32 %v549, %v575
    %v591 = vmul.f32 %v550, %v573
    %v592 = vmul.f32 %v551, %v574
    %v593 = vmul.f32 %v552, %v575
    %v594 = vmul.f32 %v553, %v573
    %v595 = vmul.f32 %v554, %v574
    %v596 = vmul.f32 %v555, %v575
    %v597 = vmul.f32 %v556, %v573
    %v598 = vmul.f32 %v557, %v574
    %v599 = vmul.f32 %v558, %v575
    %v600 = vmul.f32 %v559, %v573
    %v601 = vmul.f32 %v560, %v574
    %v602 = vmul.f32 %v561, %v575
    %v603 = vmul.f32 %v562, %v573
    %v604 = vmul.f32 %v563, %v574
    %v605 = vmul.f32 %v564, %v575
    %v606 = vmul.f32 %v565, %v573
    %v607 = vmul.f32 %v566, %v574
    %v608 = vmul.f32 %v567, %v575
    %v609 = vmul.f32 %v568, %v573
    %v610 = vmul.f32 %v569, %v574
    %v611 = vmul.f32 %v570, %v575
    %v612 = vld [vmem:[%s2] sm:$0xff]
    %v613 = vld [vmem:[%s2 + $0x8] sm:$0xf]
    %v614 = vld [vmem:[%s2 + $0xc] sm:$0xff]
    %v615 = vld [vmem:[%s2 + $0x14] sm:$0xf]
    %v616 = vld [vmem:[%s2 + $0x18] sm:$0xff]
    %v617 = vld [vmem:[%s2 + $0x20] sm:$0xf]
    %v618 = vld [vmem:[%s2 + $0x24] sm:$0xff]
    %v619 = vld [vmem:[%s2 + $0x2c] sm:$0xf]
    %v620 = vld [vmem:[%s2 + $0x30] sm:$0xff]
    %v621 = vld [vmem:[%s2 + $0x38] sm:$0xf]
    %v622 = vld [vmem:[%s2 + $0x3c] sm:$0xff]
    %v623 = vld [vmem:[%s2 + $0x44] sm:$0xf]
    %v624 = vld [vmem:[%s2 + $0x48] sm:$0xff]
    %v625 = vld [vmem:[%s2 + $0x50] sm:$0xf]
    %v626 = vld [vmem:[%s2 + $0x54] sm:$0xff]
    %v627 = vld [vmem:[%s2 + $0x5c] sm:$0xf]
    %v628 = vld [vmem:[%s2 + $0x60] sm:$0xff]
    %v629 = vld [vmem:[%s2 + $0x68] sm:$0xf]
    %v630 = vld [vmem:[%s2 + $0x6c] sm:$0xff]
    %v631 = vld [vmem:[%s2 + $0x74] sm:$0xf]
    %v632 = vld [vmem:[%s2 + $0x78] sm:$0xff]
    %v633 = vld [vmem:[%s2 + $0x80] sm:$0xf]
    %v634 = vld [vmem:[%s2 + $0x84] sm:$0xff]
    %v635 = vld [vmem:[%s2 + $0x8c] sm:$0xf]
    %v636 = vld [vmem:[%s2 + $0x90] sm:$0xff]
    %v637 = vld [vmem:[%s2 + $0x98] sm:$0xf]
    %v638 = vld [vmem:[%s2 + $0x9c] sm:$0xff]
    %v639 = vld [vmem:[%s2 + $0xa4] sm:$0xf]
    %v640 = vld [vmem:[%s2 + $0xa8] sm:$0xff]
    %v641 = vld [vmem:[%s2 + $0xb0] sm:$0xf]
    %v642 = vld [vmem:[%s2 + $0xb4] sm:$0xff]
    %v643 = vld [vmem:[%s2 + $0xbc] sm:$0xf]
    %v644 = vld [vmem:[%s2 + $0xc0] sm:$0xff]
    %v645 = vld [vmem:[%s2 + $0xc8] sm:$0xf]
    %v646 = vld [vmem:[%s2 + $0xcc] sm:$0xff]
    %v647 = vld [vmem:[%s2 + $0xd4] sm:$0xf]
    %v648 = vld [vmem:[%s2 + $0xd8] sm:$0xff]
    %v649 = vld [vmem:[%s2 + $0xe0] sm:$0xf]
    %v650 = vld [vmem:[%s2 + $0xe4] sm:$0xff]
    %v651 = vld [vmem:[%s2 + $0xec] sm:$0xf]
    %v652 = vld [vmem:[%s2 + $0xf0] sm:$0xff]
    %v653 = vld [vmem:[%s2 + $0xf8] sm:$0xf]
    %v654 = vld [vmem:[%s2 + $0xfc] sm:$0xff]
    %v655 = vld [vmem:[%s2 + $0x104] sm:$0xf]
    %v656 = vld [vmem:[%s2 + $0x108] sm:$0xff]
    %v657 = vld [vmem:[%s2 + $0x110] sm:$0xf]
    %v658 = vld [vmem:[%s2 + $0x114] sm:$0xff]
    %v659 = vld [vmem:[%s2 + $0x11c] sm:$0xf]
    %v660 = vld [vmem:[%s2 + $0x120] sm:$0xff]
    %v661 = vld [vmem:[%s2 + $0x128] sm:$0xf]
    %v662 = vld [vmem:[%s2 + $0x12c] sm:$0xff]
    %v663 = vld [vmem:[%s2 + $0x134] sm:$0xf]
    %v664 = vld [vmem:[%s2 + $0x138] sm:$0xff]
    %v665 = vld [vmem:[%s2 + $0x140] sm:$0xf]
    %v666 = vld [vmem:[%s2 + $0x144] sm:$0xff]
    %v667 = vld [vmem:[%s2 + $0x14c] sm:$0xf]
    %v668 = vld [vmem:[%s2 + $0x150] sm:$0xff]
    %v669 = vld [vmem:[%s2 + $0x158] sm:$0xf]
    %v670 = vld [vmem:[%s2 + $0x15c] sm:$0xff]
    %v671 = vld [vmem:[%s2 + $0x164] sm:$0xf]
    %v672 = vld [vmem:[%s2 + $0x168] sm:$0xff]
    %v673 = vld [vmem:[%s2 + $0x170] sm:$0xf]
    %v674 = vld [vmem:[%s2 + $0x174] sm:$0xff]
    %v675 = vld [vmem:[%s2 + $0x17c] sm:$0xf]
    %v676 = vld [vmem:[%s2 + $0x180] sm:$0xff]
    %v677 = vld [vmem:[%s2 + $0x188] sm:$0xf]
    %v678 = vld [vmem:[%s2 + $0x18c] sm:$0xff]
    %v679 = vld [vmem:[%s2 + $0x194] sm:$0xf]
    %v680 = vld [vmem:[%s2 + $0x198] sm:$0xff]
    %v681 = vld [vmem:[%s2 + $0x1a0] sm:$0xf]
    %v682 = vld [vmem:[%s2 + $0x1a4] sm:$0xff]
    %v683 = vld [vmem:[%s2 + $0x1ac] sm:$0xf]
    %v684 = vld [vmem:[%s2 + $0x1b0] sm:$0xff]
    %v685 = vld [vmem:[%s2 + $0x1b8] sm:$0xf]
    %v686 = vld [vmem:[%s2 + $0x1bc] sm:$0xff]
    %v687 = vld [vmem:[%s2 + $0x1c4] sm:$0xf]
    %v688 = vld [vmem:[%s2 + $0x1c8] sm:$0xff]
    %v689 = vld [vmem:[%s2 + $0x1d0] sm:$0xf]
    %v690 = vld [vmem:[%s2 + $0x1d4] sm:$0xff]
    %v691 = vld [vmem:[%s2 + $0x1dc] sm:$0xf]
    %v692 = vld [vmem:[%s2 + $0x1e0] sm:$0xff]
    %v693 = vld [vmem:[%s2 + $0x1e8] sm:$0xf]
    %v694 = vld [vmem:[%s2 + $0x1ec] sm:$0xff]
    %v695 = vld [vmem:[%s2 + $0x1f4] sm:$0xf]
    %v696 = vld [vmem:[%s2 + $0x1f8] sm:$0xff]
    %v697 = vld [vmem:[%s2 + $0x200] sm:$0xf]
    %v698 = vld [vmem:[%s2 + $0x204] sm:$0xff]
    %v699 = vld [vmem:[%s2 + $0x20c] sm:$0xf]
    %v700 = vld [vmem:[%s2 + $0x210] sm:$0xff]
    %v701 = vld [vmem:[%s2 + $0x218] sm:$0xf]
    %v702 = vld [vmem:[%s2 + $0x21c] sm:$0xff]
    %v703 = vld [vmem:[%s2 + $0x224] sm:$0xf]
    %v704 = vld [vmem:[%s2 + $0x228] sm:$0xff]
    %v705 = vld [vmem:[%s2 + $0x230] sm:$0xf]
    %v706 = vld [vmem:[%s2 + $0x234] sm:$0xff]
    %v707 = vld [vmem:[%s2 + $0x23c] sm:$0xf]
    %v708 = vld [vmem:[%s2 + $0x420] sm:$0x11]
    %v709 = vld [vmem:[%s2 + $0x428] sm:$0x1]
    %v710 = vunpack.c.l.bf16 %v708
    %v711 = vunpack.c.h.bf16 %v708
    %v712 = vunpack.c.l.bf16 %v709
    %v713 = vpack.c.bf16 %v579, %v576
    %v714 = vpack.c.bf16 %v580, %v577
    %v715 = vpack.c.bf16 %v581, %v578
    %v716 = vpack.c.bf16 %v585, %v582
    %v717 = vpack.c.bf16 %v586, %v583
    %v718 = vpack.c.bf16 %v587, %v584
    %v719 = vpack.c.bf16 %v591, %v588
    %v720 = vpack.c.bf16 %v592, %v589
    %v721 = vpack.c.bf16 %v593, %v590
    %v722 = vpack.c.bf16 %v597, %v594
    %v723 = vpack.c.bf16 %v598, %v595
    %v724 = vpack.c.bf16 %v599, %v596
    %v725 = vpack.c.bf16 %v603, %v600
    %v726 = vpack.c.bf16 %v604, %v601
    %v727 = vpack.c.bf16 %v605, %v602
    %v728 = vpack.c.bf16 %v609, %v606
    %v729 = vpack.c.bf16 %v610, %v607
    %v730 = vpack.c.bf16 %v611, %v608
    %v731 = vlaneseq
    %v732 = vshrl.u32 %v731, 7
    %v733 = vsub.s32 0, %v732
    %v734 = vrot.slane %v710, %v733
    %v735 = vlaneseq
    %v736 = vshrl.u32 %v735, 7
    %v737 = vsub.s32 0, %v736
    %v738 = vrot.slane %v711, %v737
    %v739 = vlaneseq
    %v740 = vshrl.u32 %v739, 7
    %v741 = vsub.s32 0, %v740
    %v742 = vrot.slane %v712, %v741
    %v839 = vunpack.c.l.b16 %v612
    %v840 = vunpack.c.h.b16 %v612
    %v841 = vunpack.c.l.b16 %v613
    %v842 = vunpack.c.l.b16 %v614
    %v843 = vunpack.c.h.b16 %v614
    %v844 = vunpack.c.l.b16 %v615
    %v845 = vunpack.c.l.b16 %v616
    %v846 = vunpack.c.h.b16 %v616
    %v847 = vunpack.c.l.b16 %v617
    %v848 = vunpack.c.l.b16 %v618
    %v849 = vunpack.c.h.b16 %v618
    %v850 = vunpack.c.l.b16 %v619
    %v851 = vunpack.c.l.b16 %v620
    %v852 = vunpack.c.h.b16 %v620
    %v853 = vunpack.c.l.b16 %v621
    %v854 = vunpack.c.l.b16 %v622
    %v855 = vunpack.c.h.b16 %v622
    %v856 = vunpack.c.l.b16 %v623
    %v857 = vunpack.c.l.b16 %v624
    %v858 = vunpack.c.h.b16 %v624
    %v859 = vunpack.c.l.b16 %v625
    %v860 = vunpack.c.l.b16 %v626
    %v861 = vunpack.c.h.b16 %v626
    %v862 = vunpack.c.l.b16 %v627
    %v863 = vunpack.c.l.b16 %v628
    %v864 = vunpack.c.h.b16 %v628
    %v865 = vunpack.c.l.b16 %v629
    %v866 = vunpack.c.l.b16 %v630
    %v867 = vunpack.c.h.b16 %v630
    %v868 = vunpack.c.l.b16 %v631
    %v869 = vunpack.c.l.b16 %v632
    %v870 = vunpack.c.h.b16 %v632
    %v871 = vunpack.c.l.b16 %v633
    %v872 = vunpack.c.l.b16 %v634
    %v873 = vunpack.c.h.b16 %v634
    %v874 = vunpack.c.l.b16 %v635
    %v875 = vunpack.c.l.b16 %v636
    %v876 = vunpack.c.h.b16 %v636
    %v877 = vunpack.c.l.b16 %v637
    %v878 = vunpack.c.l.b16 %v638
    %v879 = vunpack.c.h.b16 %v638
    %v880 = vunpack.c.l.b16 %v639
    %v881 = vunpack.c.l.b16 %v640
    %v882 = vunpack.c.h.b16 %v640
    %v883 = vunpack.c.l.b16 %v641
    %v884 = vunpack.c.l.b16 %v642
    %v885 = vunpack.c.h.b16 %v642
    %v886 = vunpack.c.l.b16 %v643
    %v887 = vunpack.c.l.b16 %v644
    %v888 = vunpack.c.h.b16 %v644
    %v889 = vunpack.c.l.b16 %v645
    %v890 = vunpack.c.l.b16 %v646
    %v891 = vunpack.c.h.b16 %v646
    %v892 = vunpack.c.l.b16 %v647
    %v893 = vunpack.c.l.b16 %v648
    %v894 = vunpack.c.h.b16 %v648
    %v895 = vunpack.c.l.b16 %v649
    %v896 = vunpack.c.l.b16 %v650
    %v897 = vunpack.c.h.b16 %v650
    %v898 = vunpack.c.l.b16 %v651
    %v899 = vunpack.c.l.b16 %v652
    %v900 = vunpack.c.h.b16 %v652
    %v901 = vunpack.c.l.b16 %v653
    %v902 = vunpack.c.l.b16 %v654
    %v903 = vunpack.c.h.b16 %v654
    %v904 = vunpack.c.l.b16 %v655
    %v905 = vunpack.c.l.b16 %v656
    %v906 = vunpack.c.h.b16 %v656
    %v907 = vunpack.c.l.b16 %v657
    %v908 = vunpack.c.l.b16 %v658
    %v909 = vunpack.c.h.b16 %v658
    %v910 = vunpack.c.l.b16 %v659
    %v911 = vunpack.c.l.b16 %v660
    %v912 = vunpack.c.h.b16 %v660
    %v913 = vunpack.c.l.b16 %v661
    %v914 = vunpack.c.l.b16 %v662
    %v915 = vunpack.c.h.b16 %v662
    %v916 = vunpack.c.l.b16 %v663
    %v917 = vunpack.c.l.b16 %v664
    %v918 = vunpack.c.h.b16 %v664
    %v919 = vunpack.c.l.b16 %v665
    %v920 = vunpack.c.l.b16 %v666
    %v921 = vunpack.c.h.b16 %v666
    %v922 = vunpack.c.l.b16 %v667
    %v923 = vunpack.c.l.b16 %v668
    %v924 = vunpack.c.h.b16 %v668
    %v925 = vunpack.c.l.b16 %v669
    %v926 = vunpack.c.l.b16 %v670
    %v927 = vunpack.c.h.b16 %v670
    %v928 = vunpack.c.l.b16 %v671
    %v929 = vunpack.c.l.b16 %v672
    %v930 = vunpack.c.h.b16 %v672
    %v931 = vunpack.c.l.b16 %v673
    %v932 = vunpack.c.l.b16 %v674
    %v933 = vunpack.c.h.b16 %v674
    %v934 = vunpack.c.l.b16 %v675
    %v935 = vunpack.c.l.b16 %v676
    %v936 = vunpack.c.h.b16 %v676
    %v937 = vunpack.c.l.b16 %v677
    %v938 = vunpack.c.l.b16 %v678
    %v939 = vunpack.c.h.b16 %v678
    %v940 = vunpack.c.l.b16 %v679
    %v941 = vunpack.c.l.b16 %v680
    %v942 = vunpack.c.h.b16 %v680
    %v943 = vunpack.c.l.b16 %v681
    %v944 = vunpack.c.l.b16 %v682
    %v945 = vunpack.c.h.b16 %v682
    %v946 = vunpack.c.l.b16 %v683
    %v947 = vunpack.c.l.b16 %v684
    %v948 = vunpack.c.h.b16 %v684
    %v949 = vunpack.c.l.b16 %v685
    %v950 = vunpack.c.l.b16 %v686
    %v951 = vunpack.c.h.b16 %v686
    %v952 = vunpack.c.l.b16 %v687
    %v953 = vunpack.c.l.b16 %v688
    %v954 = vunpack.c.h.b16 %v688
    %v955 = vunpack.c.l.b16 %v689
    %v956 = vunpack.c.l.b16 %v690
    %v957 = vunpack.c.h.b16 %v690
    %v958 = vunpack.c.l.b16 %v691
    %v959 = vunpack.c.l.b16 %v692
    %v960 = vunpack.c.h.b16 %v692
    %v961 = vunpack.c.l.b16 %v693
    %v962 = vunpack.c.l.b16 %v694
    %v963 = vunpack.c.h.b16 %v694
    %v964 = vunpack.c.l.b16 %v695
    %v965 = vunpack.c.l.b16 %v696
    %v966 = vunpack.c.h.b16 %v696
    %v967 = vunpack.c.l.b16 %v697
    %v968 = vunpack.c.l.b16 %v698
    %v969 = vunpack.c.h.b16 %v698
    %v970 = vunpack.c.l.b16 %v699
    %v971 = vunpack.c.l.b16 %v700
    %v972 = vunpack.c.h.b16 %v700
    %v973 = vunpack.c.l.b16 %v701
    %v974 = vunpack.c.l.b16 %v702
    %v975 = vunpack.c.h.b16 %v702
    %v976 = vunpack.c.l.b16 %v703
    %v977 = vunpack.c.l.b16 %v704
    %v978 = vunpack.c.h.b16 %v704
    %v979 = vunpack.c.l.b16 %v705
    %v980 = vunpack.c.l.b16 %v706
    %v981 = vunpack.c.h.b16 %v706
    %v982 = vunpack.c.l.b16 %v707
    %v983 = vpack.c.b16 %v842, %v839
    %v984 = vpack.c.b16 %v843, %v840
    %v985 = vpack.c.b16 %v844, %v841
    %v986 = vpack.c.b16 %v848, %v845
    %v987 = vpack.c.b16 %v849, %v846
    %v988 = vpack.c.b16 %v850, %v847
    %v989 = vpack.c.b16 %v854, %v851
    %v990 = vpack.c.b16 %v855, %v852
    %v991 = vpack.c.b16 %v856, %v853
    %v992 = vpack.c.b16 %v860, %v857
    %v993 = vpack.c.b16 %v861, %v858
    %v994 = vpack.c.b16 %v862, %v859
    %v995 = vpack.c.b16 %v866, %v863
    %v996 = vpack.c.b16 %v867, %v864
    %v997 = vpack.c.b16 %v868, %v865
    %v998 = vpack.c.b16 %v872, %v869
    %v999 = vpack.c.b16 %v873, %v870
    %v1000 = vpack.c.b16 %v874, %v871
    %v1001 = vpack.c.b16 %v878, %v875
    %v1002 = vpack.c.b16 %v879, %v876
    %v1003 = vpack.c.b16 %v880, %v877
    %v1004 = vpack.c.b16 %v884, %v881
    %v1005 = vpack.c.b16 %v885, %v882
    %v1006 = vpack.c.b16 %v886, %v883
    %v1007 = vpack.c.b16 %v890, %v887
    %v1008 = vpack.c.b16 %v891, %v888
    %v1009 = vpack.c.b16 %v892, %v889
    %v1010 = vpack.c.b16 %v896, %v893
    %v1011 = vpack.c.b16 %v897, %v894
    %v1012 = vpack.c.b16 %v898, %v895
    %v1013 = vpack.c.b16 %v902, %v899
    %v1014 = vpack.c.b16 %v903, %v900
    %v1015 = vpack.c.b16 %v904, %v901
    %v1016 = vpack.c.b16 %v908, %v905
    %v1017 = vpack.c.b16 %v909, %v906
    %v1018 = vpack.c.b16 %v910, %v907
    %v1019 = vpack.c.b16 %v914, %v911
    %v1020 = vpack.c.b16 %v915, %v912
    %v1021 = vpack.c.b16 %v916, %v913
    %v1022 = vpack.c.b16 %v920, %v917
    %v1023 = vpack.c.b16 %v921, %v918
    %v1024 = vpack.c.b16 %v922, %v919
    %v1025 = vpack.c.b16 %v926, %v923
    %v1026 = vpack.c.b16 %v927, %v924
    %v1027 = vpack.c.b16 %v928, %v925
    %v1028 = vpack.c.b16 %v932, %v929
    %v1029 = vpack.c.b16 %v933, %v930
    %v1030 = vpack.c.b16 %v934, %v931
    %v1031 = vpack.c.b16 %v938, %v935
    %v1032 = vpack.c.b16 %v939, %v936
    %v1033 = vpack.c.b16 %v940, %v937
    %v1034 = vpack.c.b16 %v944, %v941
    %v1035 = vpack.c.b16 %v945, %v942
    %v1036 = vpack.c.b16 %v946, %v943
    %v1037 = vpack.c.b16 %v950, %v947
    %v1038 = vpack.c.b16 %v951, %v948
    %v1039 = vpack.c.b16 %v952, %v949
    %v1040 = vpack.c.b16 %v956, %v953
    %v1041 = vpack.c.b16 %v957, %v954
    %v1042 = vpack.c.b16 %v958, %v955
    %v1043 = vpack.c.b16 %v962, %v959
    %v1044 = vpack.c.b16 %v963, %v960
    %v1045 = vpack.c.b16 %v964, %v961
    %v1046 = vpack.c.b16 %v968, %v965
    %v1047 = vpack.c.b16 %v969, %v966
    %v1048 = vpack.c.b16 %v970, %v967
    %v1049 = vpack.c.b16 %v974, %v971
    %v1050 = vpack.c.b16 %v975, %v972
    %v1051 = vpack.c.b16 %v976, %v973
    %v1052 = vpack.c.b16 %v980, %v977
    %v1053 = vpack.c.b16 %v981, %v978
    %v1054 = vpack.c.b16 %v982, %v979
    %1127 = vmatprep.subr.bf16.mxu0 %v984
    %1128 = vmatpush1.bf16.msra.mxu0 %v983
    %1129 = vmatprep.subr.bf16.mxu0 %v987
    %1130 = vmatpush1.bf16.msra.mxu0 %v986
    %1131 = vmatprep.subr.bf16.mxu0 %v990
    %1132 = vmatpush1.bf16.msra.mxu0 %v989
    %1133 = vmatprep.subr.bf16.mxu0 %v993
    %1134 = vmatpush1.bf16.msra.mxu0 %v992
    %1135 = vmatprep.subr.bf16.mxu0 %v996
    %1136 = vmatpush1.bf16.msra.mxu0 %v995
    %1137 = vmatprep.subr.bf16.mxu0 %v999
    %1138 = vmatpush1.bf16.msra.mxu0 %v998
    %1139 = vmatprep.subr.bf16.mxu0 %v1002
    %1140 = vmatpush1.bf16.msra.mxu0 %v1001
    %1141 = vmatprep.subr.bf16.mxu0 %v1005
    %1142 = vmatpush1.bf16.msra.mxu0 %v1004
    %1143 = vmatprep.subr.bf16.mxu0 %v1008
    %1144 = vmatpush1.bf16.msra.mxu0 %v1007
    %1145 = vmatprep.subr.bf16.mxu0 %v1011
    %1146 = vmatpush1.bf16.msra.mxu0 %v1010
    %1147 = vmatprep.subr.bf16.mxu0 %v1014
    %1148 = vmatpush1.bf16.msra.mxu0 %v1013
    %1149 = vmatprep.subr.bf16.mxu0 %v1017
    %1150 = vmatpush1.bf16.msra.mxu0 %v1016
    %1151 = vmatprep.subr.bf16.mxu0 %v1020
    %1152 = vmatpush1.bf16.msra.mxu0 %v1019
    %1153 = vmatprep.subr.bf16.mxu0 %v1023
    %1154 = vmatpush1.bf16.msra.mxu0 %v1022
    %1155 = vmatprep.subr.bf16.mxu0 %v1026
    %1156 = vmatpush1.bf16.msra.mxu0 %v1025
    %1157 = vmatprep.subr.bf16.mxu0 %v1029
    %1158 = vmatpush1.bf16.msra.mxu0 %v1028
    %1159 = vmatprep.mubr.bf16.mxu0 %v714
    %1160 = vmatmul.mubr.bf16.gmra.mrb[0].mxu0 %v713
    %v1161 = vpop.f32.mrb[0].mxu0
    %v1162 = vadd.f32 %v734, %v1161
    %v1163 = vpop.f32.mrb[0].mxu0
    %v1164 = vadd.f32 %v738, %v1163
    %v1165 = vpop.f32.mrb[0].mxu0
    %v1166 = vadd.f32 %v734, %v1165
    %v1167 = vpop.f32.mrb[0].mxu0
    %v1168 = vadd.f32 %v738, %v1167
    %1169 = vmatprep.mubr.bf16.mxu0 %v717
    %1170 = vmatmul.mubr.bf16.gmra.mrb[0].mxu0 %v716
    %v1171 = vpop.f32.mrb[0].mxu0
    %v1172 = vadd.f32 %v734, %v1171
    %v1173 = vpop.f32.mrb[0].mxu0
    %v1174 = vadd.f32 %v738, %v1173
    %v1175 = vpop.f32.mrb[0].mxu0
    %v1176 = vadd.f32 %v734, %v1175
    %v1177 = vpop.f32.mrb[0].mxu0
    %v1178 = vadd.f32 %v738, %v1177
    %1179 = vmatprep.mubr.bf16.mxu0 %v720
    %1180 = vmatmul.mubr.bf16.gmra.mrb[0].mxu0 %v719
    %v1181 = vpop.f32.mrb[0].mxu0
    %v1182 = vadd.f32 %v734, %v1181
    %v1183 = vpop.f32.mrb[0].mxu0
    %v1184 = vadd.f32 %v738, %v1183
    %v1185 = vpop.f32.mrb[0].mxu0
    %v1186 = vadd.f32 %v734, %v1185
    %v1187 = vpop.f32.mrb[0].mxu0
    %v1188 = vadd.f32 %v738, %v1187
    %1189 = vmatprep.mubr.bf16.mxu0 %v723
    %1190 = vmatmul.mubr.bf16.gmra.mrb[0].mxu0 %v722
    %v1191 = vpop.f32.mrb[0].mxu0
    %v1192 = vadd.f32 %v734, %v1191
    %v1193 = vpop.f32.mrb[0].mxu0
    %v1194 = vadd.f32 %v738, %v1193
    %v1195 = vpop.f32.mrb[0].mxu0
    %v1196 = vadd.f32 %v734, %v1195
    %v1197 = vpop.f32.mrb[0].mxu0
    %v1198 = vadd.f32 %v738, %v1197
    %1199 = vmatprep.mubr.bf16.mxu0 %v726
    %1200 = vmatmul.mubr.bf16.gmra.mrb[0].mxu0 %v725
    %v1201 = vpop.f32.mrb[0].mxu0
    %v1202 = vadd.f32 %v734, %v1201
    %v1203 = vpop.f32.mrb[0].mxu0
    %v1204 = vadd.f32 %v738, %v1203
    %v1205 = vpop.f32.mrb[0].mxu0
    %v1206 = vadd.f32 %v734, %v1205
    %v1207 = vpop.f32.mrb[0].mxu0
    %v1208 = vadd.f32 %v738, %v1207
    %1209 = vmatprep.mubr.bf16.mxu0 %v729
    %1210 = vmatmul.mubr.bf16.gmra.mrb[0].mxu0 %v728
    %v1211 = vpop.f32.mrb[0].mxu0
    %v1212 = vadd.f32 %v734, %v1211
    %v1213 = vpop.f32.mrb[0].mxu0
    %v1214 = vadd.f32 %v738, %v1213
    %v1215 = vpop.f32.mrb[0].mxu0
    %v1216 = vadd.f32 %v734, %v1215
    %v1217 = vpop.f32.mrb[0].mxu0
    %v1218 = vadd.f32 %v738, %v1217
    %1219 = vdwg.mxu0
    %1220 = vmatprep.subr.bf16.mxu0 %v1032
    %1221 = vmatpush1.bf16.msra.mxu0 %v1031
    %1222 = vmatprep.subr.bf16.mxu0 %v1035
    %1223 = vmatpush1.bf16.msra.mxu0 %v1034
    %1224 = vmatprep.subr.bf16.mxu0 %v1038
    %1225 = vmatpush1.bf16.msra.mxu0 %v1037
    %1226 = vmatprep.subr.bf16.mxu0 %v1041
    %1227 = vmatpush1.bf16.msra.mxu0 %v1040
    %1228 = vmatprep.subr.bf16.mxu0 %v1044
    %1229 = vmatpush1.bf16.msra.mxu0 %v1043
    %1230 = vmatprep.subr.bf16.mxu0 %v1047
    %1231 = vmatpush1.bf16.msra.mxu0 %v1046
    %1232 = vmatprep.subr.bf16.mxu0 %v1050
    %1233 = vmatpush1.bf16.msra.mxu0 %v1049
    %1234 = vmatprep.subr.bf16.mxu0 %v1053
    %1235 = vmatpush1.bf16.msra.mxu0 %v1052
    %1236 = vmatprep.subr.bf16.mxu0 0
    %1237 = vmatpush1.bf16.msra.mxu0 0
    %1238 = vmatprep.subr.bf16.mxu0 0
    %1239 = vmatpush1.bf16.msra.mxu0 0
    %1240 = vmatprep.subr.bf16.mxu0 0
    %1241 = vmatpush1.bf16.msra.mxu0 0
    %1242 = vmatprep.subr.bf16.mxu0 0
    %1243 = vmatpush1.bf16.msra.mxu0 0
    %1244 = vmatprep.subr.bf16.mxu0 0
    %1245 = vmatpush1.bf16.msra.mxu0 0
    %1246 = vmatprep.subr.bf16.mxu0 0
    %1247 = vmatpush1.bf16.msra.mxu0 0
    %1248 = vmatprep.subr.bf16.mxu0 0
    %1249 = vmatpush1.bf16.msra.mxu0 0
    %1250 = vmatprep.subr.bf16.mxu0 0
    %1251 = vmatpush1.bf16.msra.mxu0 0
    %1252 = vmatprep.mubr.bf16.mxu0 0
    %1253 = vmatmul.mubr.bf16.gmra.mrb[0].mxu0 %v715
    %v1254 = vpop.f32.mrb[0].mxu0
    %v1255 = vadd.f32 %v1162, %v1254
    %v1256 = vpop.f32.mrb[0].mxu0
    %v1257 = vadd.f32 %v1164, %v1256
    %v1258 = vpop.f32.mrb[0].mxu0
    %v1259 = vadd.f32 %v1166, %v1258
    %v1260 = vpop.f32.mrb[0].mxu0
    %v1261 = vadd.f32 %v1168, %v1260
    %1262 = vmatprep.mubr.bf16.mxu0 0
    %1263 = vmatmul.mubr.bf16.gmra.mrb[0].mxu0 %v718
    %v1264 = vpop.f32.mrb[0].mxu0
    %v1265 = vadd.f32 %v1172, %v1264
    %v1266 = vpop.f32.mrb[0].mxu0
    %v1267 = vadd.f32 %v1174, %v1266
    %v1268 = vpop.f32.mrb[0].mxu0
    %v1269 = vadd.f32 %v1176, %v1268
    %v1270 = vpop.f32.mrb[0].mxu0
    %v1271 = vadd.f32 %v1178, %v1270
    %1272 = vmatprep.mubr.bf16.mxu0 0
    %1273 = vmatmul.mubr.bf16.gmra.mrb[0].mxu0 %v721
    %v1274 = vpop.f32.mrb[0].mxu0
    %v1275 = vadd.f32 %v1182, %v1274
    %v1276 = vpop.f32.mrb[0].mxu0
    %v1277 = vadd.f32 %v1184, %v1276
    %v1278 = vpop.f32.mrb[0].mxu0
    %v1279 = vadd.f32 %v1186, %v1278
    %v1280 = vpop.f32.mrb[0].mxu0
    %v1281 = vadd.f32 %v1188, %v1280
    %1282 = vmatprep.mubr.bf16.mxu0 0
    %1283 = vmatmul.mubr.bf16.gmra.mrb[0].mxu0 %v724
    %v1284 = vpop.f32.mrb[0].mxu0
    %v1285 = vadd.f32 %v1192, %v1284
    %v1286 = vpop.f32.mrb[0].mxu0
    %v1287 = vadd.f32 %v1194, %v1286
    %v1288 = vpop.f32.mrb[0].mxu0
    %v1289 = vadd.f32 %v1196, %v1288
    %v1290 = vpop.f32.mrb[0].mxu0
    %v1291 = vadd.f32 %v1198, %v1290
    %1292 = vmatprep.mubr.bf16.mxu0 0
    %1293 = vmatmul.mubr.bf16.gmra.mrb[0].mxu0 %v727
    %v1294 = vpop.f32.mrb[0].mxu0
    %v1295 = vadd.f32 %v1202, %v1294
    %v1296 = vpop.f32.mrb[0].mxu0
    %v1297 = vadd.f32 %v1204, %v1296
    %v1298 = vpop.f32.mrb[0].mxu0
    %v1299 = vadd.f32 %v1206, %v1298
    %v1300 = vpop.f32.mrb[0].mxu0
    %v1301 = vadd.f32 %v1208, %v1300
    %1302 = vmatprep.mubr.bf16.mxu0 0
    %1303 = vmatmul.mubr.bf16.gmra.mrb[0].mxu0 %v730
    %v1304 = vpop.f32.mrb[0].mxu0
    %v1305 = vadd.f32 %v1212, %v1304
    %v1306 = vpop.f32.mrb[0].mxu0
    %v1307 = vadd.f32 %v1214, %v1306
    %v1308 = vpop.f32.mrb[0].mxu0
    %v1309 = vadd.f32 %v1216, %v1308
    %v1310 = vpop.f32.mrb[0].mxu0
    %v1311 = vadd.f32 %v1218, %v1310
    %1312 = vdwg.mxu0
    %1313 = vmatprep.subr.bf16.mxu0 0
    %1314 = vmatpush1.bf16.msra.mxu0 %v985
    %1315 = vmatprep.subr.bf16.mxu0 0
    %1316 = vmatpush1.bf16.msra.mxu0 %v988
    %1317 = vmatprep.subr.bf16.mxu0 0
    %1318 = vmatpush1.bf16.msra.mxu0 %v991
    %1319 = vmatprep.subr.bf16.mxu0 0
    %1320 = vmatpush1.bf16.msra.mxu0 %v994
    %1321 = vmatprep.subr.bf16.mxu0 0
    %1322 = vmatpush1.bf16.msra.mxu0 %v997
    %1323 = vmatprep.subr.bf16.mxu0 0
    %1324 = vmatpush1.bf16.msra.mxu0 %v1000
    %1325 = vmatprep.subr.bf16.mxu0 0
    %1326 = vmatpush1.bf16.msra.mxu0 %v1003
    %1327 = vmatprep.subr.bf16.mxu0 0
    %1328 = vmatpush1.bf16.msra.mxu0 %v1006
    %1329 = vmatprep.subr.bf16.mxu0 0
    %1330 = vmatpush1.bf16.msra.mxu0 %v1009
    %1331 = vmatprep.subr.bf16.mxu0 0
    %1332 = vmatpush1.bf16.msra.mxu0 %v1012
    %1333 = vmatprep.subr.bf16.mxu0 0
    %1334 = vmatpush1.bf16.msra.mxu0 %v1015
    %1335 = vmatprep.subr.bf16.mxu0 0
    %1336 = vmatpush1.bf16.msra.mxu0 %v1018
    %1337 = vmatprep.subr.bf16.mxu0 0
    %1338 = vmatpush1.bf16.msra.mxu0 %v1021
    %1339 = vmatprep.subr.bf16.mxu0 0
    %1340 = vmatpush1.bf16.msra.mxu0 %v1024
    %1341 = vmatprep.subr.bf16.mxu0 0
    %1342 = vmatpush1.bf16.msra.mxu0 %v1027
    %1343 = vmatprep.subr.bf16.mxu0 0
    %1344 = vmatpush1.bf16.msra.mxu0 %v1030
    %1345 = vmatprep.mubr.bf16.mxu0 %v714
    %1346 = vmatmul.mubr.bf16.gmra.mrb[0].mxu0 %v713
    %v1347 = vpop.f32.mrb[0].mxu0
    %v1348 = vadd.f32 %v742, %v1347
    %v1349 = vpop.f32.mrb[0].mxu0
    %v1350 = vpop.f32.mrb[0].mxu0
    %v1351 = vadd.f32 %v742, %v1350
    %v1352 = vpop.f32.mrb[0].mxu0
    %1353 = vmatprep.mubr.bf16.mxu0 %v717
    %1354 = vmatmul.mubr.bf16.gmra.mrb[0].mxu0 %v716
    %v1355 = vpop.f32.mrb[0].mxu0
    %v1356 = vadd.f32 %v742, %v1355
    %v1357 = vpop.f32.mrb[0].mxu0
    %v1358 = vpop.f32.mrb[0].mxu0
    %v1359 = vadd.f32 %v742, %v1358
    %v1360 = vpop.f32.mrb[0].mxu0
    %1361 = vmatprep.mubr.bf16.mxu0 %v720
    %1362 = vmatmul.mubr.bf16.gmra.mrb[0].mxu0 %v719
    %v1363 = vpop.f32.mrb[0].mxu0
    %v1364 = vadd.f32 %v742, %v1363
    %v1365 = vpop.f32.mrb[0].mxu0
    %v1366 = vpop.f32.mrb[0].mxu0
    %v1367 = vadd.f32 %v742, %v1366
    %v1368 = vpop.f32.mrb[0].mxu0
    %1369 = vmatprep.mubr.bf16.mxu0 %v723
    %1370 = vmatmul.mubr.bf16.gmra.mrb[0].mxu0 %v722
    %v1371 = vpop.f32.mrb[0].mxu0
    %v1372 = vadd.f32 %v742, %v1371
    %v1373 = vpop.f32.mrb[0].mxu0
    %v1374 = vpop.f32.mrb[0].mxu0
    %v1375 = vadd.f32 %v742, %v1374
    %v1376 = vpop.f32.mrb[0].mxu0
    %1377 = vmatprep.mubr.bf16.mxu0 %v726
    %1378 = vmatmul.mubr.bf16.gmra.mrb[0].mxu0 %v725
    %v1379 = vpop.f32.mrb[0].mxu0
    %v1380 = vadd.f32 %v742, %v1379
    %v1381 = vpop.f32.mrb[0].mxu0
    %v1382 = vpop.f32.mrb[0].mxu0
    %v1383 = vadd.f32 %v742, %v1382
    %v1384 = vpop.f32.mrb[0].mxu0
    %1385 = vmatprep.mubr.bf16.mxu0 %v729
    %1386 = vmatmul.mubr.bf16.gmra.mrb[0].mxu0 %v728
    %v1387 = vpop.f32.mrb[0].mxu0
    %v1388 = vadd.f32 %v742, %v1387
    %v1389 = vpop.f32.mrb[0].mxu0
    %v1390 = vpop.f32.mrb[0].mxu0
    %v1391 = vadd.f32 %v742, %v1390
    %v1392 = vpop.f32.mrb[0].mxu0
    %1393 = vdwg.mxu0
    %1394 = vmatprep.subr.bf16.mxu0 0
    %1395 = vmatpush1.bf16.msra.mxu0 %v1033
    %1396 = vmatprep.subr.bf16.mxu0 0
    %1397 = vmatpush1.bf16.msra.mxu0 %v1036
    %1398 = vmatprep.subr.bf16.mxu0 0
    %1399 = vmatpush1.bf16.msra.mxu0 %v1039
    %1400 = vmatprep.subr.bf16.mxu0 0
    %1401 = vmatpush1.bf16.msra.mxu0 %v1042
    %1402 = vmatprep.subr.bf16.mxu0 0
    %1403 = vmatpush1.bf16.msra.mxu0 %v1045
    %1404 = vmatprep.subr.bf16.mxu0 0
    %1405 = vmatpush1.bf16.msra.mxu0 %v1048
    %1406 = vmatprep.subr.bf16.mxu0 0
    %1407 = vmatpush1.bf16.msra.mxu0 %v1051
    %1408 = vmatprep.subr.bf16.mxu0 0
    %1409 = vmatpush1.bf16.msra.mxu0 %v1054
    %1410 = vmatprep.subr.bf16.mxu0 0
    %1411 = vmatpush1.bf16.msra.mxu0 0
    %1412 = vmatprep.subr.bf16.mxu0 0
    %1413 = vmatpush1.bf16.msra.mxu0 0
    %1414 = vmatprep.subr.bf16.mxu0 0
    %1415 = vmatpush1.bf16.msra.mxu0 0
    %1416 = vmatprep.subr.bf16.mxu0 0
    %1417 = vmatpush1.bf16.msra.mxu0 0
    %1418 = vmatprep.subr.bf16.mxu0 0
    %1419 = vmatpush1.bf16.msra.mxu0 0
    %1420 = vmatprep.subr.bf16.mxu0 0
    %1421 = vmatpush1.bf16.msra.mxu0 0
    %1422 = vmatprep.subr.bf16.mxu0 0
    %1423 = vmatpush1.bf16.msra.mxu0 0
    %1424 = vmatprep.subr.bf16.mxu0 0
    %1425 = vmatpush1.bf16.msra.mxu0 0
    %1426 = vmatprep.mubr.bf16.mxu0 0
    %1427 = vmatmul.mubr.bf16.gmra.mrb[0].mxu0 %v715
    %v1428 = vpop.f32.mrb[0].mxu0
    %v1429 = vadd.f32 %v1348, %v1428
    %v1430 = vpop.f32.mrb[0].mxu0
    %v1431 = vpop.f32.mrb[0].mxu0
    %v1432 = vadd.f32 %v1351, %v1431
    %v1433 = vpop.f32.mrb[0].mxu0
    %1434 = vmatprep.mubr.bf16.mxu0 0
    %1435 = vmatmul.mubr.bf16.gmra.mrb[0].mxu0 %v718
    %v1436 = vpop.f32.mrb[0].mxu0
    %v1437 = vadd.f32 %v1356, %v1436
    %v1438 = vpop.f32.mrb[0].mxu0
    %v1439 = vpop.f32.mrb[0].mxu0
    %v1440 = vadd.f32 %v1359, %v1439
    %v1441 = vpop.f32.mrb[0].mxu0
    %1442 = vmatprep.mubr.bf16.mxu0 0
    %1443 = vmatmul.mubr.bf16.gmra.mrb[0].mxu0 %v721
    %v1444 = vpop.f32.mrb[0].mxu0
    %v1445 = vadd.f32 %v1364, %v1444
    %v1446 = vpop.f32.mrb[0].mxu0
    %v1447 = vpop.f32.mrb[0].mxu0
    %v1448 = vadd.f32 %v1367, %v1447
    %v1449 = vpop.f32.mrb[0].mxu0
    %1450 = vmatprep.mubr.bf16.mxu0 0
    %1451 = vmatmul.mubr.bf16.gmra.mrb[0].mxu0 %v724
    %v1452 = vpop.f32.mrb[0].mxu0
    %v1453 = vadd.f32 %v1372, %v1452
    %v1454 = vpop.f32.mrb[0].mxu0
    %v1455 = vpop.f32.mrb[0].mxu0
    %v1456 = vadd.f32 %v1375, %v1455
    %v1457 = vpop.f32.mrb[0].mxu0
    %1458 = vmatprep.mubr.bf16.mxu0 0
    %1459 = vmatmul.mubr.bf16.gmra.mrb[0].mxu0 %v727
    %v1460 = vpop.f32.mrb[0].mxu0
    %v1461 = vadd.f32 %v1380, %v1460
    %v1462 = vpop.f32.mrb[0].mxu0
    %v1463 = vpop.f32.mrb[0].mxu0
    %v1464 = vadd.f32 %v1383, %v1463
    %v1465 = vpop.f32.mrb[0].mxu0
    %1466 = vmatprep.mubr.bf16.mxu0 0
    %1467 = vmatmul.mubr.bf16.gmra.mrb[0].mxu0 %v730
    %v1468 = vpop.f32.mrb[0].mxu0
    %v1469 = vadd.f32 %v1388, %v1468
    %v1470 = vpop.f32.mrb[0].mxu0
    %v1471 = vpop.f32.mrb[0].mxu0
    %v1472 = vadd.f32 %v1391, %v1471
    %v1473 = vpop.f32.mrb[0].mxu0
    %1474 = vdwg.mxu0
    %v1475 = vld [vmem:[%s2 + $0x240] sm:$0xff]
    %v1476 = vld [vmem:[%s2 + $0x248] sm:$0xf]
    %v1477 = vld [vmem:[%s2 + $0x24c] sm:$0xff]
    %v1478 = vld [vmem:[%s2 + $0x254] sm:$0xf]
    %v1479 = vld [vmem:[%s2 + $0x258] sm:$0xff]
    %v1480 = vld [vmem:[%s2 + $0x260] sm:$0xf]
    %v1481 = vld [vmem:[%s2 + $0x264] sm:$0xff]
    %v1482 = vld [vmem:[%s2 + $0x26c] sm:$0xf]
    %v1483 = vld [vmem:[%s2 + $0x270] sm:$0xff]
    %v1484 = vld [vmem:[%s2 + $0x278] sm:$0xf]
    %v1485 = vld [vmem:[%s2 + $0x27c] sm:$0xff]
    %v1486 = vld [vmem:[%s2 + $0x284] sm:$0xf]
    %v1487 = vld [vmem:[%s2 + $0x288] sm:$0xff]
    %v1488 = vld [vmem:[%s2 + $0x290] sm:$0xf]
    %v1489 = vld [vmem:[%s2 + $0x294] sm:$0xff]
    %v1490 = vld [vmem:[%s2 + $0x29c] sm:$0xf]
    %v1491 = vld [vmem:[%s2 + $0x2a0] sm:$0xff]
    %v1492 = vld [vmem:[%s2 + $0x2a8] sm:$0xf]
    %v1493 = vld [vmem:[%s2 + $0x2ac] sm:$0xff]
    %v1494 = vld [vmem:[%s2 + $0x2b4] sm:$0xf]
    %v1495 = vld [vmem:[%s2 + $0x2b8] sm:$0xff]
    %v1496 = vld [vmem:[%s2 + $0x2c0] sm:$0xf]
    %v1497 = vld [vmem:[%s2 + $0x2c4] sm:$0xff]
    %v1498 = vld [vmem:[%s2 + $0x2cc] sm:$0xf]
    %v1499 = vld [vmem:[%s2 + $0x2d0] sm:$0xff]
    %v1500 = vld [vmem:[%s2 + $0x2d8] sm:$0xf]
    %v1501 = vld [vmem:[%s2 + $0x2dc] sm:$0xff]
    %v1502 = vld [vmem:[%s2 + $0x2e4] sm:$0xf]
    %v1503 = vld [vmem:[%s2 + $0x2e8] sm:$0xff]
    %v1504 = vld [vmem:[%s2 + $0x2f0] sm:$0xf]
    %v1505 = vld [vmem:[%s2 + $0x2f4] sm:$0xff]
    %v1506 = vld [vmem:[%s2 + $0x2fc] sm:$0xf]
    %v1507 = vld [vmem:[%s2 + $0x438] sm:$0x11]
    %v1508 = vld [vmem:[%s2 + $0x440] sm:$0x1]
    %v1509 = vunpack.c.l.bf16 %v1507
    %v1510 = vunpack.c.h.bf16 %v1507
    %v1511 = vunpack.c.l.bf16 %v1508
    %v1512 = vlaneseq
    %v1513 = vshrl.u32 %v1512, 7
    %v1514 = vlaneseq
    %v1515 = vshrl.u32 %v1514, 7
    %v1516 = vsub.s32 0, %v1515
    %v1517 = vrot.slane %v1509, %v1516
    %v1518 = vlaneseq
    %v1519 = vshrl.u32 %v1518, 7
    %v1520 = vsub.s32 0, %v1519
    %v1521 = vrot.slane %v1510, %v1520
    %v1522 = vlaneseq
    %v1523 = vshrl.u32 %v1522, 7
    %v1524 = vsub.s32 0, %v1523
    %v1525 = vrot.slane %v1511, %v1524
    %v1558 = vunpack.c.l.b16 %v1475
    %v1559 = vunpack.c.h.b16 %v1475
    %v1560 = vunpack.c.l.b16 %v1476
    %v1561 = vunpack.c.l.b16 %v1477
    %v1562 = vunpack.c.h.b16 %v1477
    %v1563 = vunpack.c.l.b16 %v1478
    %v1564 = vunpack.c.l.b16 %v1479
    %v1565 = vunpack.c.h.b16 %v1479
    %v1566 = vunpack.c.l.b16 %v1480
    %v1567 = vunpack.c.l.b16 %v1481
    %v1568 = vunpack.c.h.b16 %v1481
    %v1569 = vunpack.c.l.b16 %v1482
    %v1570 = vunpack.c.l.b16 %v1483
    %v1571 = vunpack.c.h.b16 %v1483
    %v1572 = vunpack.c.l.b16 %v1484
    %v1573 = vunpack.c.l.b16 %v1485
    %v1574 = vunpack.c.h.b16 %v1485
    %v1575 = vunpack.c.l.b16 %v1486
    %v1576 = vunpack.c.l.b16 %v1487
    %v1577 = vunpack.c.h.b16 %v1487
    %v1578 = vunpack.c.l.b16 %v1488
    %v1579 = vunpack.c.l.b16 %v1489
    %v1580 = vunpack.c.h.b16 %v1489
    %v1581 = vunpack.c.l.b16 %v1490
    %v1582 = vunpack.c.l.b16 %v1491
    %v1583 = vunpack.c.h.b16 %v1491
    %v1584 = vunpack.c.l.b16 %v1492
    %v1585 = vunpack.c.l.b16 %v1493
    %v1586 = vunpack.c.h.b16 %v1493
    %v1587 = vunpack.c.l.b16 %v1494
    %v1588 = vunpack.c.l.b16 %v1495
    %v1589 = vunpack.c.h.b16 %v1495
    %v1590 = vunpack.c.l.b16 %v1496
    %v1591 = vunpack.c.l.b16 %v1497
    %v1592 = vunpack.c.h.b16 %v1497
    %v1593 = vunpack.c.l.b16 %v1498
    %v1594 = vunpack.c.l.b16 %v1499
    %v1595 = vunpack.c.h.b16 %v1499
    %v1596 = vunpack.c.l.b16 %v1500
    %v1597 = vunpack.c.l.b16 %v1501
    %v1598 = vunpack.c.h.b16 %v1501
    %v1599 = vunpack.c.l.b16 %v1502
    %v1600 = vunpack.c.l.b16 %v1503
    %v1601 = vunpack.c.h.b16 %v1503
    %v1602 = vunpack.c.l.b16 %v1504
    %v1603 = vunpack.c.l.b16 %v1505
    %v1604 = vunpack.c.h.b16 %v1505
    %v1605 = vunpack.c.l.b16 %v1506
    %v1606 = vpack.c.b16 %v1561, %v1558
    %v1607 = vpack.c.b16 %v1562, %v1559
    %v1608 = vpack.c.b16 %v1563, %v1560
    %v1609 = vpack.c.b16 %v1567, %v1564
    %v1610 = vpack.c.b16 %v1568, %v1565
    %v1611 = vpack.c.b16 %v1569, %v1566
    %v1612 = vpack.c.b16 %v1573, %v1570
    %v1613 = vpack.c.b16 %v1574, %v1571
    %v1614 = vpack.c.b16 %v1575, %v1572
    %v1615 = vpack.c.b16 %v1579, %v1576
    %v1616 = vpack.c.b16 %v1580, %v1577
    %v1617 = vpack.c.b16 %v1581, %v1578
    %v1618 = vpack.c.b16 %v1585, %v1582
    %v1619 = vpack.c.b16 %v1586, %v1583
    %v1620 = vpack.c.b16 %v1587, %v1584
    %v1621 = vpack.c.b16 %v1591, %v1588
    %v1622 = vpack.c.b16 %v1592, %v1589
    %v1623 = vpack.c.b16 %v1593, %v1590
    %v1624 = vpack.c.b16 %v1597, %v1594
    %v1625 = vpack.c.b16 %v1598, %v1595
    %v1626 = vpack.c.b16 %v1599, %v1596
    %v1627 = vpack.c.b16 %v1603, %v1600
    %v1628 = vpack.c.b16 %v1604, %v1601
    %v1629 = vpack.c.b16 %v1605, %v1602
    %1654 = vmatprep.subr.bf16.mxu0 %v1607
    %1655 = vmatpush1.bf16.msra.mxu0 %v1606
    %1656 = vmatprep.subr.bf16.mxu0 %v1610
    %1657 = vmatpush1.bf16.msra.mxu0 %v1609
    %1658 = vmatprep.subr.bf16.mxu0 %v1613
    %1659 = vmatpush1.bf16.msra.mxu0 %v1612
    %1660 = vmatprep.subr.bf16.mxu0 %v1616
    %1661 = vmatpush1.bf16.msra.mxu0 %v1615
    %1662 = vmatprep.subr.bf16.mxu0 %v1619
    %1663 = vmatpush1.bf16.msra.mxu0 %v1618
    %1664 = vmatprep.subr.bf16.mxu0 %v1622
    %1665 = vmatpush1.bf16.msra.mxu0 %v1621
    %1666 = vmatprep.subr.bf16.mxu0 %v1625
    %1667 = vmatpush1.bf16.msra.mxu0 %v1624
    %1668 = vmatprep.subr.bf16.mxu0 %v1628
    %1669 = vmatpush1.bf16.msra.mxu0 %v1627
    %1670 = vmatprep.subr.bf16.mxu0 0
    %1671 = vmatpush1.bf16.msra.mxu0 0
    %1672 = vmatprep.subr.bf16.mxu0 0
    %1673 = vmatpush1.bf16.msra.mxu0 0
    %1674 = vmatprep.subr.bf16.mxu0 0
    %1675 = vmatpush1.bf16.msra.mxu0 0
    %1676 = vmatprep.subr.bf16.mxu0 0
    %1677 = vmatpush1.bf16.msra.mxu0 0
    %1678 = vmatprep.subr.bf16.mxu0 0
    %1679 = vmatpush1.bf16.msra.mxu0 0
    %1680 = vmatprep.subr.bf16.mxu0 0
    %1681 = vmatpush1.bf16.msra.mxu0 0
    %1682 = vmatprep.subr.bf16.mxu0 0
    %1683 = vmatpush1.bf16.msra.mxu0 0
    %1684 = vmatprep.subr.bf16.mxu0 0
    %1685 = vmatpush1.bf16.msra.mxu0 0
    %1686 = vmatprep.mubr.bf16.mxu0 0
    %1687 = vmatmul.mubr.bf16.gmra.mrb[0].mxu0 0
    %v1688 = vpop.f32.mrb[0].mxu0
    %v1689 = vadd.f32 %v1517, %v1688
    %v1690 = vpop.f32.mrb[0].mxu0
    %v1691 = vadd.f32 %v1521, %v1690
    %v1692 = vpop.f32.mrb[0].mxu0
    %v1693 = vpop.f32.mrb[0].mxu0
    %1694 = vdwg.mxu0
    %1695 = vmatprep.subr.bf16.mxu0 0
    %1696 = vmatpush1.bf16.msra.mxu0 %v1608
    %1697 = vmatprep.subr.bf16.mxu0 0
    %1698 = vmatpush1.bf16.msra.mxu0 %v1611
    %1699 = vmatprep.subr.bf16.mxu0 0
    %1700 = vmatpush1.bf16.msra.mxu0 %v1614
    %1701 = vmatprep.subr.bf16.mxu0 0
    %1702 = vmatpush1.bf16.msra.mxu0 %v1617
    %1703 = vmatprep.subr.bf16.mxu0 0
    %1704 = vmatpush1.bf16.msra.mxu0 %v1620
    %1705 = vmatprep.subr.bf16.mxu0 0
    %1706 = vmatpush1.bf16.msra.mxu0 %v1623
    %1707 = vmatprep.subr.bf16.mxu0 0
    %1708 = vmatpush1.bf16.msra.mxu0 %v1626
    %1709 = vmatprep.subr.bf16.mxu0 0
    %1710 = vmatpush1.bf16.msra.mxu0 %v1629
    %1711 = vmatprep.subr.bf16.mxu0 0
    %1712 = vmatpush1.bf16.msra.mxu0 0
    %1713 = vmatprep.subr.bf16.mxu0 0
    %1714 = vmatpush1.bf16.msra.mxu0 0
    %1715 = vmatprep.subr.bf16.mxu0 0
    %1716 = vmatpush1.bf16.msra.mxu0 0
    %1717 = vmatprep.subr.bf16.mxu0 0
    %1718 = vmatpush1.bf16.msra.mxu0 0
    %1719 = vmatprep.subr.bf16.mxu0 0
    %1720 = vmatpush1.bf16.msra.mxu0 0
    %1721 = vmatprep.subr.bf16.mxu0 0
    %1722 = vmatpush1.bf16.msra.mxu0 0
    %1723 = vmatprep.subr.bf16.mxu0 0
    %1724 = vmatpush1.bf16.msra.mxu0 0
    %1725 = vmatprep.subr.bf16.mxu0 0
    %1726 = vmatpush1.bf16.msra.mxu0 0
    %1727 = vmatprep.mubr.bf16.mxu0 0
    %1728 = vmatmul.mubr.bf16.gmra.mrb[0].mxu0 0
    %v1729 = vpop.f32.mrb[0].mxu0
    %v1730 = vadd.f32 %v1525, %v1729
    %v1731 = vpop.f32.mrb[0].mxu0
    %v1732 = vpop.f32.mrb[0].mxu0
    %v1733 = vpop.f32.mrb[0].mxu0
    %1734 = vdwg.mxu0
    %v1735 = vadd.f32 %v1255, %v1689
    %v1736 = vxor.u32 %v1735, 2147483648
    %v1737 = vmul.f32 %v1736, 1.442695
    %v1738 = vpow.pop %v1737
    %v1739 = vadd.f32 %v1738, 1.0
    %v1740 = vrcp.pop %v1739
    %v1741 = vmul.f32 1.0, %v1740
    %v1742 = vadd.f32 %v1257, %v1691
    %v1743 = vxor.u32 %v1742, 2147483648
    %v1744 = vmul.f32 %v1743, 1.442695
    %v1745 = vpow.pop %v1744
    %v1746 = vadd.f32 %v1745, 1.0
    %v1747 = vrcp.pop %v1746
    %v1748 = vmul.f32 1.0, %v1747
    %v1749 = vmul.f32 %v1741, %v1730
    %v1750 = vadd.f32 %v1429, %v1749
    %v1751 = vtanh.pop %v1750
    %v1752 = vsub.f32 1.0, %v1748
    %v1753 = vmul.f32 %v1752, %v1751
    %v1754 = vmul.f32 %v1748, 0.0
    %v1755 = vadd.f32 %v1753, %v1754
    %1756 = vst [vmem:[#allocation2] sm:$0xff] %v1755
    %v1757 = vpack.c.bf16 %v1755, %v1755
    %1758 = vmatprep.subr.bf16.mxu0 %v1607
    %1759 = vmatpush1.bf16.msra.mxu0 %v1606
    %1760 = vmatprep.subr.bf16.mxu0 %v1610
    %1761 = vmatpush1.bf16.msra.mxu0 %v1609
    %1762 = vmatprep.subr.bf16.mxu0 %v1613
    %1763 = vmatpush1.bf16.msra.mxu0 %v1612
    %1764 = vmatprep.subr.bf16.mxu0 %v1616
    %1765 = vmatpush1.bf16.msra.mxu0 %v1615
    %1766 = vmatprep.subr.bf16.mxu0 %v1619
    %1767 = vmatpush1.bf16.msra.mxu0 %v1618
    %1768 = vmatprep.subr.bf16.mxu0 %v1622
    %1769 = vmatpush1.bf16.msra.mxu0 %v1621
    %1770 = vmatprep.subr.bf16.mxu0 %v1625
    %1771 = vmatpush1.bf16.msra.mxu0 %v1624
    %1772 = vmatprep.subr.bf16.mxu0 %v1628
    %1773 = vmatpush1.bf16.msra.mxu0 %v1627
    %1774 = vmatprep.subr.bf16.mxu0 0
    %1775 = vmatpush1.bf16.msra.mxu0 0
    %1776 = vmatprep.subr.bf16.mxu0 0
    %1777 = vmatpush1.bf16.msra.mxu0 0
    %1778 = vmatprep.subr.bf16.mxu0 0
    %1779 = vmatpush1.bf16.msra.mxu0 0
    %1780 = vmatprep.subr.bf16.mxu0 0
    %1781 = vmatpush1.bf16.msra.mxu0 0
    %1782 = vmatprep.subr.bf16.mxu0 0
    %1783 = vmatpush1.bf16.msra.mxu0 0
    %1784 = vmatprep.subr.bf16.mxu0 0
    %1785 = vmatpush1.bf16.msra.mxu0 0
    %1786 = vmatprep.subr.bf16.mxu0 0
    %1787 = vmatpush1.bf16.msra.mxu0 0
    %1788 = vmatprep.subr.bf16.mxu0 0
    %1789 = vmatpush1.bf16.msra.mxu0 0
    %1790 = vmatprep.mubr.bf16.mxu0 0
    %1791 = vmatmul.mubr.bf16.gmra.mrb[0].mxu0 %v1757
    %v1792 = vpop.f32.mrb[0].mxu0
    %v1793 = vadd.f32 %v1517, %v1792
    %v1794 = vpop.f32.mrb[0].mxu0
    %v1795 = vadd.f32 %v1521, %v1794
    %v1796 = vpop.f32.mrb[0].mxu0
    %v1797 = vpop.f32.mrb[0].mxu0
    %1798 = vdwg.mxu0
    %1799 = vmatprep.subr.bf16.mxu0 0
    %1800 = vmatpush1.bf16.msra.mxu0 %v1608
    %1801 = vmatprep.subr.bf16.mxu0 0
    %1802 = vmatpush1.bf16.msra.mxu0 %v1611
    %1803 = vmatprep.subr.bf16.mxu0 0
    %1804 = vmatpush1.bf16.msra.mxu0 %v1614
    %1805 = vmatprep.subr.bf16.mxu0 0
    %1806 = vmatpush1.bf16.msra.mxu0 %v1617
    %1807 = vmatprep.subr.bf16.mxu0 0
    %1808 = vmatpush1.bf16.msra.mxu0 %v1620
    %1809 = vmatprep.subr.bf16.mxu0 0
    %1810 = vmatpush1.bf16.msra.mxu0 %v1623
    %1811 = vmatprep.subr.bf16.mxu0 0
    %1812 = vmatpush1.bf16.msra.mxu0 %v1626
    %1813 = vmatprep.subr.bf16.mxu0 0
    %1814 = vmatpush1.bf16.msra.mxu0 %v1629
    %1815 = vmatprep.subr.bf16.mxu0 0
    %1816 = vmatpush1.bf16.msra.mxu0 0
    %1817 = vmatprep.subr.bf16.mxu0 0
    %1818 = vmatpush1.bf16.msra.mxu0 0
    %1819 = vmatprep.subr.bf16.mxu0 0
    %1820 = vmatpush1.bf16.msra.mxu0 0
    %1821 = vmatprep.subr.bf16.mxu0 0
    %1822 = vmatpush1.bf16.msra.mxu0 0
    %1823 = vmatprep.subr.bf16.mxu0 0
    %1824 = vmatpush1.bf16.msra.mxu0 0
    %1825 = vmatprep.subr.bf16.mxu0 0
    %1826 = vmatpush1.bf16.msra.mxu0 0
    %1827 = vmatprep.subr.bf16.mxu0 0
    %1828 = vmatpush1.bf16.msra.mxu0 0
    %1829 = vmatprep.subr.bf16.mxu0 0
    %1830 = vmatpush1.bf16.msra.mxu0 0
    %1831 = vmatprep.mubr.bf16.mxu0 0
    %1832 = vmatmul.mubr.bf16.gmra.mrb[0].mxu0 %v1757
    %v1833 = vpop.f32.mrb[0].mxu0
    %v1834 = vadd.f32 %v1525, %v1833
    %v1835 = vpop.f32.mrb[0].mxu0
    %v1836 = vpop.f32.mrb[0].mxu0
    %v1837 = vpop.f32.mrb[0].mxu0
    %1838 = vdwg.mxu0
    %v1839 = vadd.f32 %v1259, %v1793
    %v1840 = vxor.u32 %v1839, 2147483648
    %v1841 = vmul.f32 %v1840, 1.442695
    %v1842 = vpow.pop %v1841
    %v1843 = vadd.f32 %v1842, 1.0
    %v1844 = vrcp.pop %v1843
    %v1845 = vmul.f32 1.0, %v1844
    %v1846 = vadd.f32 %v1261, %v1795
    %v1847 = vxor.u32 %v1846, 2147483648
    %v1848 = vmul.f32 %v1847, 1.442695
    %v1849 = vpow.pop %v1848
    %v1850 = vadd.f32 %v1849, 1.0
    %v1851 = vrcp.pop %v1850
    %v1852 = vmul.f32 1.0, %v1851
    %v1853 = vmul.f32 %v1845, %v1834
    %v1854 = vadd.f32 %v1432, %v1853
    %v1855 = vtanh.pop %v1854
    %v1856 = vsub.f32 1.0, %v1852
    %v1857 = vmul.f32 %v1856, %v1855
    %v1858 = vmul.f32 %v1852, %v1755
    %v1859 = vadd.f32 %v1857, %v1858
    %1860 = vst [vmem:[#allocation2 + $0x8] sm:$0xff] %v1859
    %v1861 = vpack.c.bf16 %v1859, %v1859
    %1862 = vmatprep.subr.bf16.mxu0 %v1607
    %1863 = vmatpush1.bf16.msra.mxu0 %v1606
    %1864 = vmatprep.subr.bf16.mxu0 %v1610
    %1865 = vmatpush1.bf16.msra.mxu0 %v1609
    %1866 = vmatprep.subr.bf16.mxu0 %v1613
    %1867 = vmatpush1.bf16.msra.mxu0 %v1612
    %1868 = vmatprep.subr.bf16.mxu0 %v1616
    %1869 = vmatpush1.bf16.msra.mxu0 %v1615
    %1870 = vmatprep.subr.bf16.mxu0 %v1619
    %1871 = vmatpush1.bf16.msra.mxu0 %v1618
    %1872 = vmatprep.subr.bf16.mxu0 %v1622
    %1873 = vmatpush1.bf16.msra.mxu0 %v1621
    %1874 = vmatprep.subr.bf16.mxu0 %v1625
    %1875 = vmatpush1.bf16.msra.mxu0 %v1624
    %1876 = vmatprep.subr.bf16.mxu0 %v1628
    %1877 = vmatpush1.bf16.msra.mxu0 %v1627
    %1878 = vmatprep.subr.bf16.mxu0 0
    %1879 = vmatpush1.bf16.msra.mxu0 0
    %1880 = vmatprep.subr.bf16.mxu0 0
    %1881 = vmatpush1.bf16.msra.mxu0 0
    %1882 = vmatprep.subr.bf16.mxu0 0
    %1883 = vmatpush1.bf16.msra.mxu0 0
    %1884 = vmatprep.subr.bf16.mxu0 0
    %1885 = vmatpush1.bf16.msra.mxu0 0
    %1886 = vmatprep.subr.bf16.mxu0 0
    %1887 = vmatpush1.bf16.msra.mxu0 0
    %1888 = vmatprep.subr.bf16.mxu0 0
    %1889 = vmatpush1.bf16.msra.mxu0 0
    %1890 = vmatprep.subr.bf16.mxu0 0
    %1891 = vmatpush1.bf16.msra.mxu0 0
    %1892 = vmatprep.subr.bf16.mxu0 0
    %1893 = vmatpush1.bf16.msra.mxu0 0
    %1894 = vmatprep.mubr.bf16.mxu0 0
    %1895 = vmatmul.mubr.bf16.gmra.mrb[0].mxu0 %v1861
    %v1896 = vpop.f32.mrb[0].mxu0
    %v1897 = vadd.f32 %v1517, %v1896
    %v1898 = vpop.f32.mrb[0].mxu0
    %v1899 = vadd.f32 %v1521, %v1898
    %v1900 = vpop.f32.mrb[0].mxu0
    %v1901 = vpop.f32.mrb[0].mxu0
    %1902 = vdwg.mxu0
    %1903 = vmatprep.subr.bf16.mxu0 0
    %1904 = vmatpush1.bf16.msra.mxu0 %v1608
    %1905 = vmatprep.subr.bf16.mxu0 0
    %1906 = vmatpush1.bf16.msra.mxu0 %v1611
    %1907 = vmatprep.subr.bf16.mxu0 0
    %1908 = vmatpush1.bf16.msra.mxu0 %v1614
    %1909 = vmatprep.subr.bf16.mxu0 0
    %1910 = vmatpush1.bf16.msra.mxu0 %v1617
    %1911 = vmatprep.subr.bf16.mxu0 0
    %1912 = vmatpush1.bf16.msra.mxu0 %v1620
    %1913 = vmatprep.subr.bf16.mxu0 0
    %1914 = vmatpush1.bf16.msra.mxu0 %v1623
    %1915 = vmatprep.subr.bf16.mxu0 0
    %1916 = vmatpush1.bf16.msra.mxu0 %v1626
    %1917 = vmatprep.subr.bf16.mxu0 0
    %1918 = vmatpush1.bf16.msra.mxu0 %v1629
    %1919 = vmatprep.subr.bf16.mxu0 0
    %1920 = vmatpush1.bf16.msra.mxu0 0
    %1921 = vmatprep.subr.bf16.mxu0 0
    %1922 = vmatpush1.bf16.msra.mxu0 0
    %1923 = vmatprep.subr.bf16.mxu0 0
    %1924 = vmatpush1.bf16.msra.mxu0 0
    %1925 = vmatprep.subr.bf16.mxu0 0
    %1926 = vmatpush1.bf16.msra.mxu0 0
    %1927 = vmatprep.subr.bf16.mxu0 0
    %1928 = vmatpush1.bf16.msra.mxu0 0
    %1929 = vmatprep.subr.bf16.mxu0 0
    %1930 = vmatpush1.bf16.msra.mxu0 0
    %1931 = vmatprep.subr.bf16.mxu0 0
    %1932 = vmatpush1.bf16.msra.mxu0 0
    %1933 = vmatprep.subr.bf16.mxu0 0
    %1934 = vmatpush1.bf16.msra.mxu0 0
    %1935 = vmatprep.mubr.bf16.mxu0 0
    %1936 = vmatmul.mubr.bf16.gmra.mrb[0].mxu0 %v1861
    %v1937 = vpop.f32.mrb[0].mxu0
    %v1938 = vadd.f32 %v1525, %v1937
    %v1939 = vpop.f32.mrb[0].mxu0
    %v1940 = vpop.f32.mrb[0].mxu0
    %v1941 = vpop.f32.mrb[0].mxu0
    %1942 = vdwg.mxu0
    %v1943 = vadd.f32 %v1265, %v1897
    %v1944 = vxor.u32 %v1943, 2147483648
    %v1945 = vmul.f32 %v1944, 1.442695
    %v1946 = vpow.pop %v1945
    %v1947 = vadd.f32 %v1946, 1.0
    %v1948 = vrcp.pop %v1947
    %v1949 = vmul.f32 1.0, %v1948
    %v1950 = vadd.f32 %v1267, %v1899
    %v1951 = vxor.u32 %v1950, 2147483648
    %v1952 = vmul.f32 %v1951, 1.442695
    %v1953 = vpow.pop %v1952
    %v1954 = vadd.f32 %v1953, 1.0
    %v1955 = vrcp.pop %v1954
    %v1956 = vmul.f32 1.0, %v1955
    %v1957 = vmul.f32 %v1949, %v1938
    %v1958 = vadd.f32 %v1437, %v1957
    %v1959 = vtanh.pop %v1958
    %v1960 = vsub.f32 1.0, %v1956
    %v1961 = vmul.f32 %v1960, %v1959
    %v1962 = vmul.f32 %v1956, %v1859
    %v1963 = vadd.f32 %v1961, %v1962
    %1964 = vst [vmem:[#allocation2 + $0x10] sm:$0xff] %v1963
    %v1965 = vpack.c.bf16 %v1963, %v1963
    %1966 = vmatprep.subr.bf16.mxu0 %v1607
    %1967 = vmatpush1.bf16.msra.mxu0 %v1606
    %1968 = vmatprep.subr.bf16.mxu0 %v1610
    %1969 = vmatpush1.bf16.msra.mxu0 %v1609
    %1970 = vmatprep.subr.bf16.mxu0 %v1613
    %1971 = vmatpush1.bf16.msra.mxu0 %v1612
    %1972 = vmatprep.subr.bf16.mxu0 %v1616
    %1973 = vmatpush1.bf16.msra.mxu0 %v1615
    %1974 = vmatprep.subr.bf16.mxu0 %v1619
    %1975 = vmatpush1.bf16.msra.mxu0 %v1618
    %1976 = vmatprep.subr.bf16.mxu0 %v1622
    %1977 = vmatpush1.bf16.msra.mxu0 %v1621
    %1978 = vmatprep.subr.bf16.mxu0 %v1625
    %1979 = vmatpush1.bf16.msra.mxu0 %v1624
    %1980 = vmatprep.subr.bf16.mxu0 %v1628
    %1981 = vmatpush1.bf16.msra.mxu0 %v1627
    %1982 = vmatprep.subr.bf16.mxu0 0
    %1983 = vmatpush1.bf16.msra.mxu0 0
    %1984 = vmatprep.subr.bf16.mxu0 0
    %1985 = vmatpush1.bf16.msra.mxu0 0
    %1986 = vmatprep.subr.bf16.mxu0 0
    %1987 = vmatpush1.bf16.msra.mxu0 0
    %1988 = vmatprep.subr.bf16.mxu0 0
    %1989 = vmatpush1.bf16.msra.mxu0 0
    %1990 = vmatprep.subr.bf16.mxu0 0
    %1991 = vmatpush1.bf16.msra.mxu0 0
    %1992 = vmatprep.subr.bf16.mxu0 0
    %1993 = vmatpush1.bf16.msra.mxu0 0
    %1994 = vmatprep.subr.bf16.mxu0 0
    %1995 = vmatpush1.bf16.msra.mxu0 0
    %1996 = vmatprep.subr.bf16.mxu0 0
    %1997 = vmatpush1.bf16.msra.mxu0 0
    %1998 = vmatprep.mubr.bf16.mxu0 0
    %1999 = vmatmul.mubr.bf16.gmra.mrb[0].mxu0 %v1965
    %v2000 = vpop.f32.mrb[0].mxu0
    %v2001 = vadd.f32 %v1517, %v2000
    %v2002 = vpop.f32.mrb[0].mxu0
    %v2003 = vadd.f32 %v1521, %v2002
    %v2004 = vpop.f32.mrb[0].mxu0
    %v2005 = vpop.f32.mrb[0].mxu0
    %2006 = vdwg.mxu0
    %2007 = vmatprep.subr.bf16.mxu0 0
    %2008 = vmatpush1.bf16.msra.mxu0 %v1608
    %2009 = vmatprep.subr.bf16.mxu0 0
    %2010 = vmatpush1.bf16.msra.mxu0 %v1611
    %2011 = vmatprep.subr.bf16.mxu0 0
    %2012 = vmatpush1.bf16.msra.mxu0 %v1614
    %2013 = vmatprep.subr.bf16.mxu0 0
    %2014 = vmatpush1.bf16.msra.mxu0 %v1617
    %2015 = vmatprep.subr.bf16.mxu0 0
    %2016 = vmatpush1.bf16.msra.mxu0 %v1620
    %2017 = vmatprep.subr.bf16.mxu0 0
    %2018 = vmatpush1.bf16.msra.mxu0 %v1623
    %2019 = vmatprep.subr.bf16.mxu0 0
    %2020 = vmatpush1.bf16.msra.mxu0 %v1626
    %2021 = vmatprep.subr.bf16.mxu0 0
    %2022 = vmatpush1.bf16.msra.mxu0 %v1629
    %2023 = vmatprep.subr.bf16.mxu0 0
    %2024 = vmatpush1.bf16.msra.mxu0 0
    %2025 = vmatprep.subr.bf16.mxu0 0
    %2026 = vmatpush1.bf16.msra.mxu0 0
    %2027 = vmatprep.subr.bf16.mxu0 0
    %2028 = vmatpush1.bf16.msra.mxu0 0
    %2029 = vmatprep.subr.bf16.mxu0 0
    %2030 = vmatpush1.bf16.msra.mxu0 0
    %2031 = vmatprep.subr.bf16.mxu0 0
    %2032 = vmatpush1.bf16.msra.mxu0 0
    %2033 = vmatprep.subr.bf16.mxu0 0
    %2034 = vmatpush1.bf16.msra.mxu0 0
    %2035 = vmatprep.subr.bf16.mxu0 0
    %2036 = vmatpush1.bf16.msra.mxu0 0
    %2037 = vmatprep.subr.bf16.mxu0 0
    %2038 = vmatpush1.bf16.msra.mxu0 0
    %2039 = vmatprep.mubr.bf16.mxu0 0
    %2040 = vmatmul.mubr.bf16.gmra.mrb[0].mxu0 %v1965
    %v2041 = vpop.f32.mrb[0].mxu0
    %v2042 = vadd.f32 %v1525, %v2041
    %v2043 = vpop.f32.mrb[0].mxu0
    %v2044 = vpop.f32.mrb[0].mxu0
    %v2045 = vpop.f32.mrb[0].mxu0
    %2046 = vdwg.mxu0
    %v2047 = vadd.f32 %v1269, %v2001
    %v2048 = vxor.u32 %v2047, 2147483648
    %v2049 = vmul.f32 %v2048, 1.442695
    %v2050 = vpow.pop %v2049
    %v2051 = vadd.f32 %v2050, 1.0
    %v2052 = vrcp.pop %v2051
    %v2053 = vmul.f32 1.0, %v2052
    %v2054 = vadd.f32 %v1271, %v2003
    %v2055 = vxor.u32 %v2054, 2147483648
    %v2056 = vmul.f32 %v2055, 1.442695
    %v2057 = vpow.pop %v2056
    %v2058 = vadd.f32 %v2057, 1.0
    %v2059 = vrcp.pop %v2058
    %v2060 = vmul.f32 1.0, %v2059
    %v2061 = vmul.f32 %v2053, %v2042
    %v2062 = vadd.f32 %v1440, %v2061
    %v2063 = vtanh.pop %v2062
    %v2064 = vsub.f32 1.0, %v2060
    %v2065 = vmul.f32 %v2064, %v2063
    %v2066 = vmul.f32 %v2060, %v1963
    %v2067 = vadd.f32 %v2065, %v2066
    %2068 = vst [vmem:[#allocation2 + $0x18] sm:$0xff] %v2067
    %v2069 = vpack.c.bf16 %v2067, %v2067
    %2070 = vmatprep.subr.bf16.mxu0 %v1607
    %2071 = vmatpush1.bf16.msra.mxu0 %v1606
    %2072 = vmatprep.subr.bf16.mxu0 %v1610
    %2073 = vmatpush1.bf16.msra.mxu0 %v1609
    %2074 = vmatprep.subr.bf16.mxu0 %v1613
    %2075 = vmatpush1.bf16.msra.mxu0 %v1612
    %2076 = vmatprep.subr.bf16.mxu0 %v1616
    %2077 = vmatpush1.bf16.msra.mxu0 %v1615
    %2078 = vmatprep.subr.bf16.mxu0 %v1619
    %2079 = vmatpush1.bf16.msra.mxu0 %v1618
    %2080 = vmatprep.subr.bf16.mxu0 %v1622
    %2081 = vmatpush1.bf16.msra.mxu0 %v1621
    %2082 = vmatprep.subr.bf16.mxu0 %v1625
    %2083 = vmatpush1.bf16.msra.mxu0 %v1624
    %2084 = vmatprep.subr.bf16.mxu0 %v1628
    %2085 = vmatpush1.bf16.msra.mxu0 %v1627
    %2086 = vmatprep.subr.bf16.mxu0 0
    %2087 = vmatpush1.bf16.msra.mxu0 0
    %2088 = vmatprep.subr.bf16.mxu0 0
    %2089 = vmatpush1.bf16.msra.mxu0 0
    %2090 = vmatprep.subr.bf16.mxu0 0
    %2091 = vmatpush1.bf16.msra.mxu0 0
    %2092 = vmatprep.subr.bf16.mxu0 0
    %2093 = vmatpush1.bf16.msra.mxu0 0
    %2094 = vmatprep.subr.bf16.mxu0 0
    %2095 = vmatpush1.bf16.msra.mxu0 0
    %2096 = vmatprep.subr.bf16.mxu0 0
    %2097 = vmatpush1.bf16.msra.mxu0 0
    %2098 = vmatprep.subr.bf16.mxu0 0
    %2099 = vmatpush1.bf16.msra.mxu0 0
    %2100 = vmatprep.subr.bf16.mxu0 0
    %2101 = vmatpush1.bf16.msra.mxu0 0
    %2102 = vmatprep.mubr.bf16.mxu0 0
    %2103 = vmatmul.mubr.bf16.gmra.mrb[0].mxu0 %v2069
    %v2104 = vpop.f32.mrb[0].mxu0
    %v2105 = vadd.f32 %v1517, %v2104
    %v2106 = vpop.f32.mrb[0].mxu0
    %v2107 = vadd.f32 %v1521, %v2106
    %v2108 = vpop.f32.mrb[0].mxu0
    %v2109 = vpop.f32.mrb[0].mxu0
    %2110 = vdwg.mxu0
    %2111 = vmatprep.subr.bf16.mxu0 0
    %2112 = vmatpush1.bf16.msra.mxu0 %v1608
    %2113 = vmatprep.subr.bf16.mxu0 0
    %2114 = vmatpush1.bf16.msra.mxu0 %v1611
    %2115 = vmatprep.subr.bf16.mxu0 0
    %2116 = vmatpush1.bf16.msra.mxu0 %v1614
    %2117 = vmatprep.subr.bf16.mxu0 0
    %2118 = vmatpush1.bf16.msra.mxu0 %v1617
    %2119 = vmatprep.subr.bf16.mxu0 0
    %2120 = vmatpush1.bf16.msra.mxu0 %v1620
    %2121 = vmatprep.subr.bf16.mxu0 0
    %2122 = vmatpush1.bf16.msra.mxu0 %v1623
    %2123 = vmatprep.subr.bf16.mxu0 0
    %2124 = vmatpush1.bf16.msra.mxu0 %v1626
    %2125 = vmatprep.subr.bf16.mxu0 0
    %2126 = vmatpush1.bf16.msra.mxu0 %v1629
    %2127 = vmatprep.subr.bf16.mxu0 0
    %2128 = vmatpush1.bf16.msra.mxu0 0
    %2129 = vmatprep.subr.bf16.mxu0 0
    %2130 = vmatpush1.bf16.msra.mxu0 0
    %2131 = vmatprep.subr.bf16.mxu0 0
    %2132 = vmatpush1.bf16.msra.mxu0 0
    %2133 = vmatprep.subr.bf16.mxu0 0
    %2134 = vmatpush1.bf16.msra.mxu0 0
    %2135 = vmatprep.subr.bf16.mxu0 0
    %2136 = vmatpush1.bf16.msra.mxu0 0
    %2137 = vmatprep.subr.bf16.mxu0 0
    %2138 = vmatpush1.bf16.msra.mxu0 0
    %2139 = vmatprep.subr.bf16.mxu0 0
    %2140 = vmatpush1.bf16.msra.mxu0 0
    %2141 = vmatprep.subr.bf16.mxu0 0
    %2142 = vmatpush1.bf16.msra.mxu0 0
    %2143 = vmatprep.mubr.bf16.mxu0 0
    %2144 = vmatmul.mubr.bf16.gmra.mrb[0].mxu0 %v2069
    %v2145 = vpop.f32.mrb[0].mxu0
    %v2146 = vadd.f32 %v1525, %v2145
    %v2147 = vpop.f32.mrb[0].mxu0
    %v2148 = vpop.f32.mrb[0].mxu0
    %v2149 = vpop.f32.mrb[0].mxu0
    %2150 = vdwg.mxu0
    %v2151 = vadd.f32 %v1275, %v2105
    %v2152 = vxor.u32 %v2151, 2147483648
    %v2153 = vmul.f32 %v2152, 1.442695
    %v2154 = vpow.pop %v2153
    %v2155 = vadd.f32 %v2154, 1.0
    %v2156 = vrcp.pop %v2155
    %v2157 = vmul.f32 1.0, %v2156
    %v2158 = vadd.f32 %v1277, %v2107
    %v2159 = vxor.u32 %v2158, 2147483648
    %v2160 = vmul.f32 %v2159, 1.442695
    %v2161 = vpow.pop %v2160
    %v2162 = vadd.f32 %v2161, 1.0
    %v2163 = vrcp.pop %v2162
    %v2164 = vmul.f32 1.0, %v2163
    %v2165 = vmul.f32 %v2157, %v2146
    %v2166 = vadd.f32 %v1445, %v2165
    %v2167 = vtanh.pop %v2166
    %v2168 = vsub.f32 1.0, %v2164
    %v2169 = vmul.f32 %v2168, %v2167
    %v2170 = vmul.f32 %v2164, %v2067
    %v2171 = vadd.f32 %v2169, %v2170
    %2172 = vst [vmem:[#allocation2 + $0x20] sm:$0xff] %v2171
    %v2173 = vpack.c.bf16 %v2171, %v2171
    %2174 = vmatprep.subr.bf16.mxu0 %v1607
    %2175 = vmatpush1.bf16.msra.mxu0 %v1606
    %2176 = vmatprep.subr.bf16.mxu0 %v1610
    %2177 = vmatpush1.bf16.msra.mxu0 %v1609
    %2178 = vmatprep.subr.bf16.mxu0 %v1613
    %2179 = vmatpush1.bf16.msra.mxu0 %v1612
    %2180 = vmatprep.subr.bf16.mxu0 %v1616
    %2181 = vmatpush1.bf16.msra.mxu0 %v1615
    %2182 = vmatprep.subr.bf16.mxu0 %v1619
    %2183 = vmatpush1.bf16.msra.mxu0 %v1618
    %2184 = vmatprep.subr.bf16.mxu0 %v1622
    %2185 = vmatpush1.bf16.msra.mxu0 %v1621
    %2186 = vmatprep.subr.bf16.mxu0 %v1625
    %2187 = vmatpush1.bf16.msra.mxu0 %v1624
    %2188 = vmatprep.subr.bf16.mxu0 %v1628
    %2189 = vmatpush1.bf16.msra.mxu0 %v1627
    %2190 = vmatprep.subr.bf16.mxu0 0
    %2191 = vmatpush1.bf16.msra.mxu0 0
    %2192 = vmatprep.subr.bf16.mxu0 0
    %2193 = vmatpush1.bf16.msra.mxu0 0
    %2194 = vmatprep.subr.bf16.mxu0 0
    %2195 = vmatpush1.bf16.msra.mxu0 0
    %2196 = vmatprep.subr.bf16.mxu0 0
    %2197 = vmatpush1.bf16.msra.mxu0 0
    %2198 = vmatprep.subr.bf16.mxu0 0
    %2199 = vmatpush1.bf16.msra.mxu0 0
    %2200 = vmatprep.subr.bf16.mxu0 0
    %2201 = vmatpush1.bf16.msra.mxu0 0
    %2202 = vmatprep.subr.bf16.mxu0 0
    %2203 = vmatpush1.bf16.msra.mxu0 0
    %2204 = vmatprep.subr.bf16.mxu0 0
    %2205 = vmatpush1.bf16.msra.mxu0 0
    %2206 = vmatprep.mubr.bf16.mxu0 0
    %2207 = vmatmul.mubr.bf16.gmra.mrb[0].mxu0 %v2173
    %v2208 = vpop.f32.mrb[0].mxu0
    %v2209 = vadd.f32 %v1517, %v2208
    %v2210 = vpop.f32.mrb[0].mxu0
    %v2211 = vadd.f32 %v1521, %v2210
    %v2212 = vpop.f32.mrb[0].mxu0
    %v2213 = vpop.f32.mrb[0].mxu0
    %2214 = vdwg.mxu0
    %2215 = vmatprep.subr.bf16.mxu0 0
    %2216 = vmatpush1.bf16.msra.mxu0 %v1608
    %2217 = vmatprep.subr.bf16.mxu0 0
    %2218 = vmatpush1.bf16.msra.mxu0 %v1611
    %2219 = vmatprep.subr.bf16.mxu0 0
    %2220 = vmatpush1.bf16.msra.mxu0 %v1614
    %2221 = vmatprep.subr.bf16.mxu0 0
    %2222 = vmatpush1.bf16.msra.mxu0 %v1617
    %2223 = vmatprep.subr.bf16.mxu0 0
    %2224 = vmatpush1.bf16.msra.mxu0 %v1620
    %2225 = vmatprep.subr.bf16.mxu0 0
    %2226 = vmatpush1.bf16.msra.mxu0 %v1623
    %2227 = vmatprep.subr.bf16.mxu0 0
    %2228 = vmatpush1.bf16.msra.mxu0 %v1626
    %2229 = vmatprep.subr.bf16.mxu0 0
    %2230 = vmatpush1.bf16.msra.mxu0 %v1629
    %2231 = vmatprep.subr.bf16.mxu0 0
    %2232 = vmatpush1.bf16.msra.mxu0 0
    %2233 = vmatprep.subr.bf16.mxu0 0
    %2234 = vmatpush1.bf16.msra.mxu0 0
    %2235 = vmatprep.subr.bf16.mxu0 0
    %2236 = vmatpush1.bf16.msra.mxu0 0
    %2237 = vmatprep.subr.bf16.mxu0 0
    %2238 = vmatpush1.bf16.msra.mxu0 0
    %2239 = vmatprep.subr.bf16.mxu0 0
    %2240 = vmatpush1.bf16.msra.mxu0 0
    %2241 = vmatprep.subr.bf16.mxu0 0
    %2242 = vmatpush1.bf16.msra.mxu0 0
    %2243 = vmatprep.subr.bf16.mxu0 0
    %2244 = vmatpush1.bf16.msra.mxu0 0
    %2245 = vmatprep.subr.bf16.mxu0 0
    %2246 = vmatpush1.bf16.msra.mxu0 0
    %2247 = vmatprep.mubr.bf16.mxu0 0
    %2248 = vmatmul.mubr.bf16.gmra.mrb[0].mxu0 %v2173
    %v2249 = vpop.f32.mrb[0].mxu0
    %v2250 = vadd.f32 %v1525, %v2249
    %v2251 = vpop.f32.mrb[0].mxu0
    %v2252 = vpop.f32.mrb[0].mxu0
    %v2253 = vpop.f32.mrb[0].mxu0
    %2254 = vdwg.mxu0
    %v2255 = vadd.f32 %v1279, %v2209
    %v2256 = vxor.u32 %v2255, 2147483648
    %v2257 = vmul.f32 %v2256, 1.442695
    %v2258 = vpow.pop %v2257
    %v2259 = vadd.f32 %v2258, 1.0
    %v2260 = vrcp.pop %v2259
    %v2261 = vmul.f32 1.0, %v2260
    %v2262 = vadd.f32 %v1281, %v2211
    %v2263 = vxor.u32 %v2262, 2147483648
    %v2264 = vmul.f32 %v2263, 1.442695
    %v2265 = vpow.pop %v2264
    %v2266 = vadd.f32 %v2265, 1.0
    %v2267 = vrcp.pop %v2266
    %v2268 = vmul.f32 1.0, %v2267
    %v2269 = vmul.f32 %v2261, %v2250
    %v2270 = vadd.f32 %v1448, %v2269
    %v2271 = vtanh.pop %v2270
    %v2272 = vsub.f32 1.0, %v2268
    %v2273 = vmul.f32 %v2272, %v2271
    %v2274 = vmul.f32 %v2268, %v2171
    %v2275 = vadd.f32 %v2273, %v2274
    %2276 = vst [vmem:[#allocation2 + $0x28] sm:$0xff] %v2275
    %v2277 = vpack.c.bf16 %v2275, %v2275
    %2278 = vmatprep.subr.bf16.mxu0 %v1607
    %2279 = vmatpush1.bf16.msra.mxu0 %v1606
    %2280 = vmatprep.subr.bf16.mxu0 %v1610
    %2281 = vmatpush1.bf16.msra.mxu0 %v1609
    %2282 = vmatprep.subr.bf16.mxu0 %v1613
    %2283 = vmatpush1.bf16.msra.mxu0 %v1612
    %2284 = vmatprep.subr.bf16.mxu0 %v1616
    %2285 = vmatpush1.bf16.msra.mxu0 %v1615
    %2286 = vmatprep.subr.bf16.mxu0 %v1619
    %2287 = vmatpush1.bf16.msra.mxu0 %v1618
    %2288 = vmatprep.subr.bf16.mxu0 %v1622
    %2289 = vmatpush1.bf16.msra.mxu0 %v1621
    %2290 = vmatprep.subr.bf16.mxu0 %v1625
    %2291 = vmatpush1.bf16.msra.mxu0 %v1624
    %2292 = vmatprep.subr.bf16.mxu0 %v1628
    %2293 = vmatpush1.bf16.msra.mxu0 %v1627
    %2294 = vmatprep.subr.bf16.mxu0 0
    %2295 = vmatpush1.bf16.msra.mxu0 0
    %2296 = vmatprep.subr.bf16.mxu0 0
    %2297 = vmatpush1.bf16.msra.mxu0 0
    %2298 = vmatprep.subr.bf16.mxu0 0
    %2299 = vmatpush1.bf16.msra.mxu0 0
    %2300 = vmatprep.subr.bf16.mxu0 0
    %2301 = vmatpush1.bf16.msra.mxu0 0
    %2302 = vmatprep.subr.bf16.mxu0 0
    %2303 = vmatpush1.bf16.msra.mxu0 0
    %2304 = vmatprep.subr.bf16.mxu0 0
    %2305 = vmatpush1.bf16.msra.mxu0 0
    %2306 = vmatprep.subr.bf16.mxu0 0
    %2307 = vmatpush1.bf16.msra.mxu0 0
    %2308 = vmatprep.subr.bf16.mxu0 0
    %2309 = vmatpush1.bf16.msra.mxu0 0
    %2310 = vmatprep.mubr.bf16.mxu0 0
    %2311 = vmatmul.mubr.bf16.gmra.mrb[0].mxu0 %v2277
    %v2312 = vpop.f32.mrb[0].mxu0
    %v2313 = vadd.f32 %v1517, %v2312
    %v2314 = vpop.f32.mrb[0].mxu0
    %v2315 = vadd.f32 %v1521, %v2314
    %v2316 = vpop.f32.mrb[0].mxu0
    %v2317 = vpop.f32.mrb[0].mxu0
    %2318 = vdwg.mxu0
    %2319 = vmatprep.subr.bf16.mxu0 0
    %2320 = vmatpush1.bf16.msra.mxu0 %v1608
    %2321 = vmatprep.subr.bf16.mxu0 0
    %2322 = vmatpush1.bf16.msra.mxu0 %v1611
    %2323 = vmatprep.subr.bf16.mxu0 0
    %2324 = vmatpush1.bf16.msra.mxu0 %v1614
    %2325 = vmatprep.subr.bf16.mxu0 0
    %2326 = vmatpush1.bf16.msra.mxu0 %v1617
    %2327 = vmatprep.subr.bf16.mxu0 0
    %2328 = vmatpush1.bf16.msra.mxu0 %v1620
    %2329 = vmatprep.subr.bf16.mxu0 0
    %2330 = vmatpush1.bf16.msra.mxu0 %v1623
    %2331 = vmatprep.subr.bf16.mxu0 0
    %2332 = vmatpush1.bf16.msra.mxu0 %v1626
    %2333 = vmatprep.subr.bf16.mxu0 0
    %2334 = vmatpush1.bf16.msra.mxu0 %v1629
    %2335 = vmatprep.subr.bf16.mxu0 0
    %2336 = vmatpush1.bf16.msra.mxu0 0
    %2337 = vmatprep.subr.bf16.mxu0 0
    %2338 = vmatpush1.bf16.msra.mxu0 0
    %2339 = vmatprep.subr.bf16.mxu0 0
    %2340 = vmatpush1.bf16.msra.mxu0 0
    %2341 = vmatprep.subr.bf16.mxu0 0
    %2342 = vmatpush1.bf16.msra.mxu0 0
    %2343 = vmatprep.subr.bf16.mxu0 0
    %2344 = vmatpush1.bf16.msra.mxu0 0
    %2345 = vmatprep.subr.bf16.mxu0 0
    %2346 = vmatpush1.bf16.msra.mxu0 0
    %2347 = vmatprep.subr.bf16.mxu0 0
    %2348 = vmatpush1.bf16.msra.mxu0 0
    %2349 = vmatprep.subr.bf16.mxu0 0
    %2350 = vmatpush1.bf16.msra.mxu0 0
    %2351 = vmatprep.mubr.bf16.mxu0 0
    %2352 = vmatmul.mubr.bf16.gmra.mrb[0].mxu0 %v2277
    %v2353 = vpop.f32.mrb[0].mxu0
    %v2354 = vadd.f32 %v1525, %v2353
    %v2355 = vpop.f32.mrb[0].mxu0
    %v2356 = vpop.f32.mrb[0].mxu0
    %v2357 = vpop.f32.mrb[0].mxu0
    %2358 = vdwg.mxu0
    %v2359 = vadd.f32 %v1285, %v2313
    %v2360 = vxor.u32 %v2359, 2147483648
    %v2361 = vmul.f32 %v2360, 1.442695
    %v2362 = vpow.pop %v2361
    %v2363 = vadd.f32 %v2362, 1.0
    %v2364 = vrcp.pop %v2363
    %v2365 = vmul.f32 1.0, %v2364
    %v2366 = vadd.f32 %v1287, %v2315
    %v2367 = vxor.u32 %v2366, 2147483648
    %v2368 = vmul.f32 %v2367, 1.442695
    %v2369 = vpow.pop %v2368
    %v2370 = vadd.f32 %v2369, 1.0
    %v2371 = vrcp.pop %v2370
    %v2372 = vmul.f32 1.0, %v2371
    %v2373 = vmul.f32 %v2365, %v2354
    %v2374 = vadd.f32 %v1453, %v2373
    %v2375 = vtanh.pop %v2374
    %v2376 = vsub.f32 1.0, %v2372
    %v2377 = vmul.f32 %v2376, %v2375
    %v2378 = vmul.f32 %v2372, %v2275
    %v2379 = vadd.f32 %v2377, %v2378
    %2380 = vst [vmem:[#allocation2 + $0x30] sm:$0xff] %v2379
    %v2381 = vpack.c.bf16 %v2379, %v2379
    %2382 = vmatprep.subr.bf16.mxu0 %v1607
    %2383 = vmatpush1.bf16.msra.mxu0 %v1606
    %2384 = vmatprep.subr.bf16.mxu0 %v1610
    %2385 = vmatpush1.bf16.msra.mxu0 %v1609
    %2386 = vmatprep.subr.bf16.mxu0 %v1613
    %2387 = vmatpush1.bf16.msra.mxu0 %v1612
    %2388 = vmatprep.subr.bf16.mxu0 %v1616
    %2389 = vmatpush1.bf16.msra.mxu0 %v1615
    %2390 = vmatprep.subr.bf16.mxu0 %v1619
    %2391 = vmatpush1.bf16.msra.mxu0 %v1618
    %2392 = vmatprep.subr.bf16.mxu0 %v1622
    %2393 = vmatpush1.bf16.msra.mxu0 %v1621
    %2394 = vmatprep.subr.bf16.mxu0 %v1625
    %2395 = vmatpush1.bf16.msra.mxu0 %v1624
    %2396 = vmatprep.subr.bf16.mxu0 %v1628
    %2397 = vmatpush1.bf16.msra.mxu0 %v1627
    %2398 = vmatprep.subr.bf16.mxu0 0
    %2399 = vmatpush1.bf16.msra.mxu0 0
    %2400 = vmatprep.subr.bf16.mxu0 0
    %2401 = vmatpush1.bf16.msra.mxu0 0
    %2402 = vmatprep.subr.bf16.mxu0 0
    %2403 = vmatpush1.bf16.msra.mxu0 0
    %2404 = vmatprep.subr.bf16.mxu0 0
    %2405 = vmatpush1.bf16.msra.mxu0 0
    %2406 = vmatprep.subr.bf16.mxu0 0
    %2407 = vmatpush1.bf16.msra.mxu0 0
    %2408 = vmatprep.subr.bf16.mxu0 0
    %2409 = vmatpush1.bf16.msra.mxu0 0
    %2410 = vmatprep.subr.bf16.mxu0 0
    %2411 = vmatpush1.bf16.msra.mxu0 0
    %2412 = vmatprep.subr.bf16.mxu0 0
    %2413 = vmatpush1.bf16.msra.mxu0 0
    %2414 = vmatprep.mubr.bf16.mxu0 0
    %2415 = vmatmul.mubr.bf16.gmra.mrb[0].mxu0 %v2381
    %v2416 = vpop.f32.mrb[0].mxu0
    %v2417 = vadd.f32 %v1517, %v2416
    %v2418 = vpop.f32.mrb[0].mxu0
    %v2419 = vadd.f32 %v1521, %v2418
    %v2420 = vpop.f32.mrb[0].mxu0
    %v2421 = vpop.f32.mrb[0].mxu0
    %2422 = vdwg.mxu0
    %2423 = vmatprep.subr.bf16.mxu0 0
    %2424 = vmatpush1.bf16.msra.mxu0 %v1608
    %2425 = vmatprep.subr.bf16.mxu0 0
    %2426 = vmatpush1.bf16.msra.mxu0 %v1611
    %2427 = vmatprep.subr.bf16.mxu0 0
    %2428 = vmatpush1.bf16.msra.mxu0 %v1614
    %2429 = vmatprep.subr.bf16.mxu0 0
    %2430 = vmatpush1.bf16.msra.mxu0 %v1617
    %2431 = vmatprep.subr.bf16.mxu0 0
    %2432 = vmatpush1.bf16.msra.mxu0 %v1620
    %2433 = vmatprep.subr.bf16.mxu0 0
    %2434 = vmatpush1.bf16.msra.mxu0 %v1623
    %2435 = vmatprep.subr.bf16.mxu0 0
    %2436 = vmatpush1.bf16.msra.mxu0 %v1626
    %2437 = vmatprep.subr.bf16.mxu0 0
    %2438 = vmatpush1.bf16.msra.mxu0 %v1629
    %2439 = vmatprep.subr.bf16.mxu0 0
    %2440 = vmatpush1.bf16.msra.mxu0 0
    %2441 = vmatprep.subr.bf16.mxu0 0
    %2442 = vmatpush1.bf16.msra.mxu0 0
    %2443 = vmatprep.subr.bf16.mxu0 0
    %2444 = vmatpush1.bf16.msra.mxu0 0
    %2445 = vmatprep.subr.bf16.mxu0 0
    %2446 = vmatpush1.bf16.msra.mxu0 0
    %2447 = vmatprep.subr.bf16.mxu0 0
    %2448 = vmatpush1.bf16.msra.mxu0 0
    %2449 = vmatprep.subr.bf16.mxu0 0
    %2450 = vmatpush1.bf16.msra.mxu0 0
    %2451 = vmatprep.subr.bf16.mxu0 0
    %2452 = vmatpush1.bf16.msra.mxu0 0
    %2453 = vmatprep.subr.bf16.mxu0 0
    %2454 = vmatpush1.bf16.msra.mxu0 0
    %2455 = vmatprep.mubr.bf16.mxu0 0
    %2456 = vmatmul.mubr.bf16.gmra.mrb[0].mxu0 %v2381
    %v2457 = vpop.f32.mrb[0].mxu0
    %v2458 = vadd.f32 %v1525, %v2457
    %v2459 = vpop.f32.mrb[0].mxu0
    %v2460 = vpop.f32.mrb[0].mxu0
    %v2461 = vpop.f32.mrb[0].mxu0
    %2462 = vdwg.mxu0
    %v2463 = vadd.f32 %v1289, %v2417
    %v2464 = vxor.u32 %v2463, 2147483648
    %v2465 = vmul.f32 %v2464, 1.442695
    %v2466 = vpow.pop %v2465
    %v2467 = vadd.f32 %v2466, 1.0
    %v2468 = vrcp.pop %v2467
    %v2469 = vmul.f32 1.0, %v2468
    %v2470 = vadd.f32 %v1291, %v2419
    %v2471 = vxor.u32 %v2470, 2147483648
    %v2472 = vmul.f32 %v2471, 1.442695
    %v2473 = vpow.pop %v2472
    %v2474 = vadd.f32 %v2473, 1.0
    %v2475 = vrcp.pop %v2474
    %v2476 = vmul.f32 1.0, %v2475
    %v2477 = vmul.f32 %v2469, %v2458
    %v2478 = vadd.f32 %v1456, %v2477
    %v2479 = vtanh.pop %v2478
    %v2480 = vsub.f32 1.0, %v2476
    %v2481 = vmul.f32 %v2480, %v2479
    %v2482 = vmul.f32 %v2476, %v2379
    %v2483 = vadd.f32 %v2481, %v2482
    %2484 = vst [vmem:[#allocation2 + $0x38] sm:$0xff] %v2483
    %v2485 = vpack.c.bf16 %v2483, %v2483
    %2486 = vmatprep.subr.bf16.mxu0 %v1607
    %2487 = vmatpush1.bf16.msra.mxu0 %v1606
    %2488 = vmatprep.subr.bf16.mxu0 %v1610
    %2489 = vmatpush1.bf16.msra.mxu0 %v1609
    %2490 = vmatprep.subr.bf16.mxu0 %v1613
    %2491 = vmatpush1.bf16.msra.mxu0 %v1612
    %2492 = vmatprep.subr.bf16.mxu0 %v1616
    %2493 = vmatpush1.bf16.msra.mxu0 %v1615
    %2494 = vmatprep.subr.bf16.mxu0 %v1619
    %2495 = vmatpush1.bf16.msra.mxu0 %v1618
    %2496 = vmatprep.subr.bf16.mxu0 %v1622
    %2497 = vmatpush1.bf16.msra.mxu0 %v1621
    %2498 = vmatprep.subr.bf16.mxu0 %v1625
    %2499 = vmatpush1.bf16.msra.mxu0 %v1624
    %2500 = vmatprep.subr.bf16.mxu0 %v1628
    %2501 = vmatpush1.bf16.msra.mxu0 %v1627
    %2502 = vmatprep.subr.bf16.mxu0 0
    %2503 = vmatpush1.bf16.msra.mxu0 0
    %2504 = vmatprep.subr.bf16.mxu0 0
    %2505 = vmatpush1.bf16.msra.mxu0 0
    %2506 = vmatprep.subr.bf16.mxu0 0
    %2507 = vmatpush1.bf16.msra.mxu0 0
    %2508 = vmatprep.subr.bf16.mxu0 0
    %2509 = vmatpush1.bf16.msra.mxu0 0
    %2510 = vmatprep.subr.bf16.mxu0 0
    %2511 = vmatpush1.bf16.msra.mxu0 0
    %2512 = vmatprep.subr.bf16.mxu0 0
    %2513 = vmatpush1.bf16.msra.mxu0 0
    %2514 = vmatprep.subr.bf16.mxu0 0
    %2515 = vmatpush1.bf16.msra.mxu0 0
    %2516 = vmatprep.subr.bf16.mxu0 0
    %2517 = vmatpush1.bf16.msra.mxu0 0
    %2518 = vmatprep.mubr.bf16.mxu0 0
    %2519 = vmatmul.mubr.bf16.gmra.mrb[0].mxu0 %v2485
    %v2520 = vpop.f32.mrb[0].mxu0
    %v2521 = vadd.f32 %v1517, %v2520
    %v2522 = vpop.f32.mrb[0].mxu0
    %v2523 = vadd.f32 %v1521, %v2522
    %v2524 = vpop.f32.mrb[0].mxu0
    %v2525 = vpop.f32.mrb[0].mxu0
    %2526 = vdwg.mxu0
    %2527 = vmatprep.subr.bf16.mxu0 0
    %2528 = vmatpush1.bf16.msra.mxu0 %v1608
    %2529 = vmatprep.subr.bf16.mxu0 0
    %2530 = vmatpush1.bf16.msra.mxu0 %v1611
    %2531 = vmatprep.subr.bf16.mxu0 0
    %2532 = vmatpush1.bf16.msra.mxu0 %v1614
    %2533 = vmatprep.subr.bf16.mxu0 0
    %2534 = vmatpush1.bf16.msra.mxu0 %v1617
    %2535 = vmatprep.subr.bf16.mxu0 0
    %2536 = vmatpush1.bf16.msra.mxu0 %v1620
    %2537 = vmatprep.subr.bf16.mxu0 0
    %2538 = vmatpush1.bf16.msra.mxu0 %v1623
    %2539 = vmatprep.subr.bf16.mxu0 0
    %2540 = vmatpush1.bf16.msra.mxu0 %v1626
    %2541 = vmatprep.subr.bf16.mxu0 0
    %2542 = vmatpush1.bf16.msra.mxu0 %v1629
    %2543 = vmatprep.subr.bf16.mxu0 0
    %2544 = vmatpush1.bf16.msra.mxu0 0
    %2545 = vmatprep.subr.bf16.mxu0 0
    %2546 = vmatpush1.bf16.msra.mxu0 0
    %2547 = vmatprep.subr.bf16.mxu0 0
    %2548 = vmatpush1.bf16.msra.mxu0 0
    %2549 = vmatprep.subr.bf16.mxu0 0
    %2550 = vmatpush1.bf16.msra.mxu0 0
    %2551 = vmatprep.subr.bf16.mxu0 0
    %2552 = vmatpush1.bf16.msra.mxu0 0
    %2553 = vmatprep.subr.bf16.mxu0 0
    %2554 = vmatpush1.bf16.msra.mxu0 0
    %2555 = vmatprep.subr.bf16.mxu0 0
    %2556 = vmatpush1.bf16.msra.mxu0 0
    %2557 = vmatprep.subr.bf16.mxu0 0
    %2558 = vmatpush1.bf16.msra.mxu0 0
    %2559 = vmatprep.mubr.bf16.mxu0 0
    %2560 = vmatmul.mubr.bf16.gmra.mrb[0].mxu0 %v2485
    %v2561 = vpop.f32.mrb[0].mxu0
    %v2562 = vadd.f32 %v1525, %v2561
    %v2563 = vpop.f32.mrb[0].mxu0
    %v2564 = vpop.f32.mrb[0].mxu0
    %v2565 = vpop.f32.mrb[0].mxu0
    %2566 = vdwg.mxu0
    %v2567 = vadd.f32 %v1295, %v2521
    %v2568 = vxor.u32 %v2567, 2147483648
    %v2569 = vmul.f32 %v2568, 1.442695
    %v2570 = vpow.pop %v2569
    %v2571 = vadd.f32 %v2570, 1.0
    %v2572 = vrcp.pop %v2571
    %v2573 = vmul.f32 1.0, %v2572
    %v2574 = vadd.f32 %v1297, %v2523
    %v2575 = vxor.u32 %v2574, 2147483648
    %v2576 = vmul.f32 %v2575, 1.442695
    %v2577 = vpow.pop %v2576
    %v2578 = vadd.f32 %v2577, 1.0
    %v2579 = vrcp.pop %v2578
    %v2580 = vmul.f32 1.0, %v2579
    %v2581 = vmul.f32 %v2573, %v2562
    %v2582 = vadd.f32 %v1461, %v2581
    %v2583 = vtanh.pop %v2582
    %v2584 = vsub.f32 1.0, %v2580
    %v2585 = vmul.f32 %v2584, %v2583
    %v2586 = vmul.f32 %v2580, %v2483
    %v2587 = vadd.f32 %v2585, %v2586
    %2588 = vst [vmem:[#allocation2 + $0x40] sm:$0xff] %v2587
    %v2589 = vpack.c.bf16 %v2587, %v2587
    %2590 = vmatprep.subr.bf16.mxu0 %v1607
    %2591 = vmatpush1.bf16.msra.mxu0 %v1606
    %2592 = vmatprep.subr.bf16.mxu0 %v1610
    %2593 = vmatpush1.bf16.msra.mxu0 %v1609
    %2594 = vmatprep.subr.bf16.mxu0 %v1613
    %2595 = vmatpush1.bf16.msra.mxu0 %v1612
    %2596 = vmatprep.subr.bf16.mxu0 %v1616
    %2597 = vmatpush1.bf16.msra.mxu0 %v1615
    %2598 = vmatprep.subr.bf16.mxu0 %v1619
    %2599 = vmatpush1.bf16.msra.mxu0 %v1618
    %2600 = vmatprep.subr.bf16.mxu0 %v1622
    %2601 = vmatpush1.bf16.msra.mxu0 %v1621
    %2602 = vmatprep.subr.bf16.mxu0 %v1625
    %2603 = vmatpush1.bf16.msra.mxu0 %v1624
    %2604 = vmatprep.subr.bf16.mxu0 %v1628
    %2605 = vmatpush1.bf16.msra.mxu0 %v1627
    %2606 = vmatprep.subr.bf16.mxu0 0
    %2607 = vmatpush1.bf16.msra.mxu0 0
    %2608 = vmatprep.subr.bf16.mxu0 0
    %2609 = vmatpush1.bf16.msra.mxu0 0
    %2610 = vmatprep.subr.bf16.mxu0 0
    %2611 = vmatpush1.bf16.msra.mxu0 0
    %2612 = vmatprep.subr.bf16.mxu0 0
    %2613 = vmatpush1.bf16.msra.mxu0 0
    %2614 = vmatprep.subr.bf16.mxu0 0
    %2615 = vmatpush1.bf16.msra.mxu0 0
    %2616 = vmatprep.subr.bf16.mxu0 0
    %2617 = vmatpush1.bf16.msra.mxu0 0
    %2618 = vmatprep.subr.bf16.mxu0 0
    %2619 = vmatpush1.bf16.msra.mxu0 0
    %2620 = vmatprep.subr.bf16.mxu0 0
    %2621 = vmatpush1.bf16.msra.mxu0 0
    %2622 = vmatprep.mubr.bf16.mxu0 0
    %2623 = vmatmul.mubr.bf16.gmra.mrb[0].mxu0 %v2589
    %v2624 = vpop.f32.mrb[0].mxu0
    %v2625 = vadd.f32 %v1517, %v2624
    %v2626 = vpop.f32.mrb[0].mxu0
    %v2627 = vadd.f32 %v1521, %v2626
    %v2628 = vpop.f32.mrb[0].mxu0
    %v2629 = vpop.f32.mrb[0].mxu0
    %2630 = vdwg.mxu0
    %2631 = vmatprep.subr.bf16.mxu0 0
    %2632 = vmatpush1.bf16.msra.mxu0 %v1608
    %2633 = vmatprep.subr.bf16.mxu0 0
    %2634 = vmatpush1.bf16.msra.mxu0 %v1611
    %2635 = vmatprep.subr.bf16.mxu0 0
    %2636 = vmatpush1.bf16.msra.mxu0 %v1614
    %2637 = vmatprep.subr.bf16.mxu0 0
    %2638 = vmatpush1.bf16.msra.mxu0 %v1617
    %2639 = vmatprep.subr.bf16.mxu0 0
    %2640 = vmatpush1.bf16.msra.mxu0 %v1620
    %2641 = vmatprep.subr.bf16.mxu0 0
    %2642 = vmatpush1.bf16.msra.mxu0 %v1623
    %2643 = vmatprep.subr.bf16.mxu0 0
    %2644 = vmatpush1.bf16.msra.mxu0 %v1626
    %2645 = vmatprep.subr.bf16.mxu0 0
    %2646 = vmatpush1.bf16.msra.mxu0 %v1629
    %2647 = vmatprep.subr.bf16.mxu0 0
    %2648 = vmatpush1.bf16.msra.mxu0 0
    %2649 = vmatprep.subr.bf16.mxu0 0
    %2650 = vmatpush1.bf16.msra.mxu0 0
    %2651 = vmatprep.subr.bf16.mxu0 0
    %2652 = vmatpush1.bf16.msra.mxu0 0
    %2653 = vmatprep.subr.bf16.mxu0 0
    %2654 = vmatpush1.bf16.msra.mxu0 0
    %2655 = vmatprep.subr.bf16.mxu0 0
    %2656 = vmatpush1.bf16.msra.mxu0 0
    %2657 = vmatprep.subr.bf16.mxu0 0
    %2658 = vmatpush1.bf16.msra.mxu0 0
    %2659 = vmatprep.subr.bf16.mxu0 0
    %2660 = vmatpush1.bf16.msra.mxu0 0
    %2661 = vmatprep.subr.bf16.mxu0 0
    %2662 = vmatpush1.bf16.msra.mxu0 0
    %2663 = vmatprep.mubr.bf16.mxu0 0
    %2664 = vmatmul.mubr.bf16.gmra.mrb[0].mxu0 %v2589
    %v2665 = vpop.f32.mrb[0].mxu0
    %v2666 = vadd.f32 %v1525, %v2665
    %v2667 = vpop.f32.mrb[0].mxu0
    %v2668 = vpop.f32.mrb[0].mxu0
    %v2669 = vpop.f32.mrb[0].mxu0
    %2670 = vdwg.mxu0
    %v2671 = vadd.f32 %v1299, %v2625
    %v2672 = vxor.u32 %v2671, 2147483648
    %v2673 = vmul.f32 %v2672, 1.442695
    %v2674 = vpow.pop %v2673
    %v2675 = vadd.f32 %v2674, 1.0
    %v2676 = vrcp.pop %v2675
    %v2677 = vmul.f32 1.0, %v2676
    %v2678 = vadd.f32 %v1301, %v2627
    %v2679 = vxor.u32 %v2678, 2147483648
    %v2680 = vmul.f32 %v2679, 1.442695
    %v2681 = vpow.pop %v2680
    %v2682 = vadd.f32 %v2681, 1.0
    %v2683 = vrcp.pop %v2682
    %v2684 = vmul.f32 1.0, %v2683
    %v2685 = vmul.f32 %v2677, %v2666
    %v2686 = vadd.f32 %v1464, %v2685
    %v2687 = vtanh.pop %v2686
    %v2688 = vsub.f32 1.0, %v2684
    %v2689 = vmul.f32 %v2688, %v2687
    %v2690 = vmul.f32 %v2684, %v2587
    %v2691 = vadd.f32 %v2689, %v2690
    %2692 = vst [vmem:[#allocation2 + $0x48] sm:$0xff] %v2691
    %v2693 = vpack.c.bf16 %v2691, %v2691
    %2694 = vmatprep.subr.bf16.mxu0 %v1607
    %2695 = vmatpush1.bf16.msra.mxu0 %v1606
    %2696 = vmatprep.subr.bf16.mxu0 %v1610
    %2697 = vmatpush1.bf16.msra.mxu0 %v1609
    %2698 = vmatprep.subr.bf16.mxu0 %v1613
    %2699 = vmatpush1.bf16.msra.mxu0 %v1612
    %2700 = vmatprep.subr.bf16.mxu0 %v1616
    %2701 = vmatpush1.bf16.msra.mxu0 %v1615
    %2702 = vmatprep.subr.bf16.mxu0 %v1619
    %2703 = vmatpush1.bf16.msra.mxu0 %v1618
    %2704 = vmatprep.subr.bf16.mxu0 %v1622
    %2705 = vmatpush1.bf16.msra.mxu0 %v1621
    %2706 = vmatprep.subr.bf16.mxu0 %v1625
    %2707 = vmatpush1.bf16.msra.mxu0 %v1624
    %2708 = vmatprep.subr.bf16.mxu0 %v1628
    %2709 = vmatpush1.bf16.msra.mxu0 %v1627
    %2710 = vmatprep.subr.bf16.mxu0 0
    %2711 = vmatpush1.bf16.msra.mxu0 0
    %2712 = vmatprep.subr.bf16.mxu0 0
    %2713 = vmatpush1.bf16.msra.mxu0 0
    %2714 = vmatprep.subr.bf16.mxu0 0
    %2715 = vmatpush1.bf16.msra.mxu0 0
    %2716 = vmatprep.subr.bf16.mxu0 0
    %2717 = vmatpush1.bf16.msra.mxu0 0
    %2718 = vmatprep.subr.bf16.mxu0 0
    %2719 = vmatpush1.bf16.msra.mxu0 0
    %2720 = vmatprep.subr.bf16.mxu0 0
    %2721 = vmatpush1.bf16.msra.mxu0 0
    %2722 = vmatprep.subr.bf16.mxu0 0
    %2723 = vmatpush1.bf16.msra.mxu0 0
    %2724 = vmatprep.subr.bf16.mxu0 0
    %2725 = vmatpush1.bf16.msra.mxu0 0
    %2726 = vmatprep.mubr.bf16.mxu0 0
    %2727 = vmatmul.mubr.bf16.gmra.mrb[0].mxu0 %v2693
    %v2728 = vpop.f32.mrb[0].mxu0
    %v2729 = vadd.f32 %v1517, %v2728
    %v2730 = vpop.f32.mrb[0].mxu0
    %v2731 = vadd.f32 %v1521, %v2730
    %v2732 = vpop.f32.mrb[0].mxu0
    %v2733 = vpop.f32.mrb[0].mxu0
    %2734 = vdwg.mxu0
    %2735 = vmatprep.subr.bf16.mxu0 0
    %2736 = vmatpush1.bf16.msra.mxu0 %v1608
    %2737 = vmatprep.subr.bf16.mxu0 0
    %2738 = vmatpush1.bf16.msra.mxu0 %v1611
    %2739 = vmatprep.subr.bf16.mxu0 0
    %2740 = vmatpush1.bf16.msra.mxu0 %v1614
    %2741 = vmatprep.subr.bf16.mxu0 0
    %2742 = vmatpush1.bf16.msra.mxu0 %v1617
    %2743 = vmatprep.subr.bf16.mxu0 0
    %2744 = vmatpush1.bf16.msra.mxu0 %v1620
    %2745 = vmatprep.subr.bf16.mxu0 0
    %2746 = vmatpush1.bf16.msra.mxu0 %v1623
    %2747 = vmatprep.subr.bf16.mxu0 0
    %2748 = vmatpush1.bf16.msra.mxu0 %v1626
    %2749 = vmatprep.subr.bf16.mxu0 0
    %2750 = vmatpush1.bf16.msra.mxu0 %v1629
    %2751 = vmatprep.subr.bf16.mxu0 0
    %2752 = vmatpush1.bf16.msra.mxu0 0
    %2753 = vmatprep.subr.bf16.mxu0 0
    %2754 = vmatpush1.bf16.msra.mxu0 0
    %2755 = vmatprep.subr.bf16.mxu0 0
    %2756 = vmatpush1.bf16.msra.mxu0 0
    %2757 = vmatprep.subr.bf16.mxu0 0
    %2758 = vmatpush1.bf16.msra.mxu0 0
    %2759 = vmatprep.subr.bf16.mxu0 0
    %2760 = vmatpush1.bf16.msra.mxu0 0
    %2761 = vmatprep.subr.bf16.mxu0 0
    %2762 = vmatpush1.bf16.msra.mxu0 0
    %2763 = vmatprep.subr.bf16.mxu0 0
    %2764 = vmatpush1.bf16.msra.mxu0 0
    %2765 = vmatprep.subr.bf16.mxu0 0
    %2766 = vmatpush1.bf16.msra.mxu0 0
    %2767 = vmatprep.mubr.bf16.mxu0 0
    %2768 = vmatmul.mubr.bf16.gmra.mrb[0].mxu0 %v2693
    %v2769 = vpop.f32.mrb[0].mxu0
    %v2770 = vadd.f32 %v1525, %v2769
    %v2771 = vpop.f32.mrb[0].mxu0
    %v2772 = vpop.f32.mrb[0].mxu0
    %v2773 = vpop.f32.mrb[0].mxu0
    %2774 = vdwg.mxu0
    %v2775 = vadd.f32 %v1305, %v2729
    %v2776 = vxor.u32 %v2775, 2147483648
    %v2777 = vmul.f32 %v2776, 1.442695
    %v2778 = vpow.pop %v2777
    %v2779 = vadd.f32 %v2778, 1.0
    %v2780 = vrcp.pop %v2779
    %v2781 = vmul.f32 1.0, %v2780
    %v2782 = vadd.f32 %v1307, %v2731
    %v2783 = vxor.u32 %v2782, 2147483648
    %v2784 = vmul.f32 %v2783, 1.442695
    %v2785 = vpow.pop %v2784
    %v2786 = vadd.f32 %v2785, 1.0
    %v2787 = vrcp.pop %v2786
    %v2788 = vmul.f32 1.0, %v2787
    %v2789 = vmul.f32 %v2781, %v2770
    %v2790 = vadd.f32 %v1469, %v2789
    %v2791 = vtanh.pop %v2790
    %v2792 = vsub.f32 1.0, %v2788
    %v2793 = vmul.f32 %v2792, %v2791
    %v2794 = vmul.f32 %v2788, %v2691
    %v2795 = vadd.f32 %v2793, %v2794
    %vm2796 = vcmp.lt.s32.totalorder %v1513, 4
    %v2797 = vsel %vm2796, 1, 0
    %vm2798 = vcmp.eq.s32.totalorder %v2797, 1
    %v2799 = vsel %vm2798, %v2795, %v2691
    %2800 = vst [vmem:[#allocation2 + $0x50] sm:$0xff] %v2799
    %v2801 = vpack.c.bf16 %v2799, %v2799
    %2802 = vmatprep.subr.bf16.mxu0 %v1607
    %2803 = vmatpush1.bf16.msra.mxu0 %v1606
    %2804 = vmatprep.subr.bf16.mxu0 %v1610
    %2805 = vmatpush1.bf16.msra.mxu0 %v1609
    %2806 = vmatprep.subr.bf16.mxu0 %v1613
    %2807 = vmatpush1.bf16.msra.mxu0 %v1612
    %2808 = vmatprep.subr.bf16.mxu0 %v1616
    %2809 = vmatpush1.bf16.msra.mxu0 %v1615
    %2810 = vmatprep.subr.bf16.mxu0 %v1619
    %2811 = vmatpush1.bf16.msra.mxu0 %v1618
    %2812 = vmatprep.subr.bf16.mxu0 %v1622
    %2813 = vmatpush1.bf16.msra.mxu0 %v1621
    %2814 = vmatprep.subr.bf16.mxu0 %v1625
    %2815 = vmatpush1.bf16.msra.mxu0 %v1624
    %2816 = vmatprep.subr.bf16.mxu0 %v1628
    %2817 = vmatpush1.bf16.msra.mxu0 %v1627
    %2818 = vmatprep.subr.bf16.mxu0 0
    %2819 = vmatpush1.bf16.msra.mxu0 0
    %2820 = vmatprep.subr.bf16.mxu0 0
    %2821 = vmatpush1.bf16.msra.mxu0 0
    %2822 = vmatprep.subr.bf16.mxu0 0
    %2823 = vmatpush1.bf16.msra.mxu0 0
    %2824 = vmatprep.subr.bf16.mxu0 0
    %2825 = vmatpush1.bf16.msra.mxu0 0
    %2826 = vmatprep.subr.bf16.mxu0 0
    %2827 = vmatpush1.bf16.msra.mxu0 0
    %2828 = vmatprep.subr.bf16.mxu0 0
    %2829 = vmatpush1.bf16.msra.mxu0 0
    %2830 = vmatprep.subr.bf16.mxu0 0
    %2831 = vmatpush1.bf16.msra.mxu0 0
    %2832 = vmatprep.subr.bf16.mxu0 0
    %2833 = vmatpush1.bf16.msra.mxu0 0
    %2834 = vmatprep.mubr.bf16.mxu0 0
    %2835 = vmatmul.mubr.bf16.gmra.mrb[0].mxu0 %v2801
    %v2836 = vpop.f32.mrb[0].mxu0
    %v2837 = vadd.f32 %v1517, %v2836
    %v2838 = vpop.f32.mrb[0].mxu0
    %v2839 = vadd.f32 %v1521, %v2838
    %v2840 = vpop.f32.mrb[0].mxu0
    %v2841 = vpop.f32.mrb[0].mxu0
    %2842 = vdwg.mxu0
    %2843 = vmatprep.subr.bf16.mxu0 0
    %2844 = vmatpush1.bf16.msra.mxu0 %v1608
    %2845 = vmatprep.subr.bf16.mxu0 0
    %2846 = vmatpush1.bf16.msra.mxu0 %v1611
    %2847 = vmatprep.subr.bf16.mxu0 0
    %2848 = vmatpush1.bf16.msra.mxu0 %v1614
    %2849 = vmatprep.subr.bf16.mxu0 0
    %2850 = vmatpush1.bf16.msra.mxu0 %v1617
    %2851 = vmatprep.subr.bf16.mxu0 0
    %2852 = vmatpush1.bf16.msra.mxu0 %v1620
    %2853 = vmatprep.subr.bf16.mxu0 0
    %2854 = vmatpush1.bf16.msra.mxu0 %v1623
    %2855 = vmatprep.subr.bf16.mxu0 0
    %2856 = vmatpush1.bf16.msra.mxu0 %v1626
    %2857 = vmatprep.subr.bf16.mxu0 0
    %2858 = vmatpush1.bf16.msra.mxu0 %v1629
    %2859 = vmatprep.subr.bf16.mxu0 0
    %2860 = vmatpush1.bf16.msra.mxu0 0
    %2861 = vmatprep.subr.bf16.mxu0 0
    %2862 = vmatpush1.bf16.msra.mxu0 0
    %2863 = vmatprep.subr.bf16.mxu0 0
    %2864 = vmatpush1.bf16.msra.mxu0 0
    %2865 = vmatprep.subr.bf16.mxu0 0
    %2866 = vmatpush1.bf16.msra.mxu0 0
    %2867 = vmatprep.subr.bf16.mxu0 0
    %2868 = vmatpush1.bf16.msra.mxu0 0
    %2869 = vmatprep.subr.bf16.mxu0 0
    %2870 = vmatpush1.bf16.msra.mxu0 0
    %2871 = vmatprep.subr.bf16.mxu0 0
    %2872 = vmatpush1.bf16.msra.mxu0 0
    %2873 = vmatprep.subr.bf16.mxu0 0
    %2874 = vmatpush1.bf16.msra.mxu0 0
    %2875 = vmatprep.mubr.bf16.mxu0 0
    %2876 = vmatmul.mubr.bf16.gmra.mrb[0].mxu0 %v2801
    %v2877 = vpop.f32.mrb[0].mxu0
    %v2878 = vadd.f32 %v1525, %v2877
    %v2879 = vpop.f32.mrb[0].mxu0
    %v2880 = vpop.f32.mrb[0].mxu0
    %v2881 = vpop.f32.mrb[0].mxu0
    %2882 = vdwg.mxu0
    %v2883 = vadd.f32 %v1309, %v2837
    %v2884 = vxor.u32 %v2883, 2147483648
    %v2885 = vmul.f32 %v2884, 1.442695
    %v2886 = vpow.pop %v2885
    %v2887 = vadd.f32 %v2886, 1.0
    %v2888 = vrcp.pop %v2887
    %v2889 = vmul.f32 1.0, %v2888
    %v2890 = vadd.f32 %v1311, %v2839
    %v2891 = vxor.u32 %v2890, 2147483648
    %v2892 = vmul.f32 %v2891, 1.442695
    %v2893 = vpow.pop %v2892
    %v2894 = vadd.f32 %v2893, 1.0
    %v2895 = vrcp.pop %v2894
    %v2896 = vmul.f32 1.0, %v2895
    %v2897 = vmul.f32 %v2889, %v2878
    %v2898 = vadd.f32 %v1472, %v2897
    %v2899 = vtanh.pop %v2898
    %v2900 = vsub.f32 1.0, %v2896
    %v2901 = vmul.f32 %v2900, %v2899
    %v2902 = vmul.f32 %v2896, %v2799
    %v2903 = vadd.f32 %v2901, %v2902
    %vm2904 = vcmp.lt.s32.totalorder %v1513, 2
    %v2905 = vsel %vm2904, 1, 0
    %vm2906 = vcmp.eq.s32.totalorder %v2905, 1
    %v2907 = vsel %vm2906, %v2903, %v2799
    %2908 = vst [vmem:[#allocation2 + $0x58] sm:$0xff] %v2907
    %v2909 = vld [vmem:[#allocation2] sm:$0xff]
    %v2910 = vld [vmem:[#allocation2 + $0x8] sm:$0xff]
    %v2911 = vld [vmem:[#allocation2 + $0x10] sm:$0xff]
    %v2912 = vld [vmem:[#allocation2 + $0x18] sm:$0xff]
    %v2913 = vld [vmem:[#allocation2 + $0x20] sm:$0xff]
    %v2914 = vld [vmem:[#allocation2 + $0x28] sm:$0xff]
    %v2915 = vld [vmem:[#allocation2 + $0x30] sm:$0xff]
    %v2916 = vld [vmem:[#allocation2 + $0x38] sm:$0xff]
    %v2917 = vld [vmem:[#allocation2 + $0x40] sm:$0xff]
    %v2918 = vld [vmem:[#allocation2 + $0x48] sm:$0xff]
    %v2919 = vld [vmem:[#allocation2 + $0x50] sm:$0xff]
    %v2920 = vld [vmem:[#allocation2 + $0x58] sm:$0xff]
    %v2921 = vmul.f32 %v2909, %v2907
    %v2922 = vmul.f32 %v2910, %v2907
    %v2923 = vmul.f32 %v2911, %v2907
    %v2924 = vmul.f32 %v2912, %v2907
    %v2925 = vmul.f32 %v2913, %v2907
    %v2926 = vmul.f32 %v2914, %v2907
    %v2927 = vmul.f32 %v2915, %v2907
    %v2928 = vmul.f32 %v2916, %v2907
    %v2929 = vmul.f32 %v2917, %v2907
    %v2930 = vmul.f32 %v2918, %v2907
    %v2931 = vmul.f32 %v2919, %v2907
    %v2932 = vmul.f32 %v2920, %v2907
    %v2933 = vld [vmem:[%s3 + $0x60] sm:$0xff]
    %v2934 = vld [vmem:[%s3 + $0x68] sm:$0xff]
    %v2935 = vld [vmem:[%s3 + $0x70] sm:$0xff]
    %v2936 = vld [vmem:[%s3 + $0x78] sm:$0xff]
    %v2937 = vld [vmem:[%s3 + $0x80] sm:$0xff]
    %v2938 = vld [vmem:[%s3 + $0x88] sm:$0xff]
    %v2939 = vld [vmem:[%s3 + $0x90] sm:$0xff]
    %v2940 = vld [vmem:[%s3 + $0x98] sm:$0xff]
    %v2941 = vld [vmem:[%s3 + $0xa0] sm:$0xff]
    %v2942 = vld [vmem:[%s3 + $0xa8] sm:$0xff]
    %v2943 = vld [vmem:[%s3 + $0xb0] sm:$0xff]
    %v2944 = vld [vmem:[%s3 + $0xb8] sm:$0xff]
    %v2945 = vld [vmem:[%s3 + $0xc0] sm:$0xff]
    %v2946 = vld [vmem:[%s3 + $0xc8] sm:$0xff]
    %v2947 = vld [vmem:[%s3 + $0xd0] sm:$0xff]
    %v2948 = vld [vmem:[%s3 + $0xd8] sm:$0xff]
    %v2949 = vld [vmem:[%s3] sm:$0xff]
    %v2950 = vld [vmem:[%s3 + $0x8] sm:$0xff]
    %v2951 = vld [vmem:[%s3 + $0x10] sm:$0xff]
    %v2952 = vld [vmem:[%s3 + $0x18] sm:$0xff]
    %v2953 = vld [vmem:[%s3 + $0x20] sm:$0xff]
    %v2954 = vld [vmem:[%s3 + $0x28] sm:$0xff]
    %v2955 = vld [vmem:[%s3 + $0x30] sm:$0xff]
    %v2956 = vld [vmem:[%s3 + $0x38] sm:$0xff]
    %v2957 = vld [vmem:[%s3 + $0x40] sm:$0xff]
    %v2958 = vld [vmem:[%s3 + $0x48] sm:$0xff]
    %v2959 = vld [vmem:[%s3 + $0x50] sm:$0xff]
    %v2960 = vld [vmem:[%s3 + $0x58] sm:$0xff]
    %2961 = vmatprep.subr.mxu0 0.0
    %2962 = vmatpush1.msra.mxu0 %v2933
    %2963 = vmatprep.subr.mxu0 0.0
    %2964 = vmatpush1.msra.mxu0 %v2934
    %2965 = vmatprep.subr.mxu0 0.0
    %2966 = vmatpush1.msra.mxu0 %v2935
    %2967 = vmatprep.subr.mxu0 0.0
    %2968 = vmatpush1.msra.mxu0 %v2936
    %2969 = vmatprep.subr.mxu0 0.0
    %2970 = vmatpush1.msra.mxu0 %v2937
    %2971 = vmatprep.subr.mxu0 0.0
    %2972 = vmatpush1.msra.mxu0 %v2938
    %2973 = vmatprep.subr.mxu0 0.0
    %2974 = vmatpush1.msra.mxu0 %v2939
    %2975 = vmatprep.subr.mxu0 0.0
    %2976 = vmatpush1.msra.mxu0 %v2940
    %2977 = vmatprep.subr.mxu0 0.0
    %2978 = vmatpush1.msra.mxu0 %v2941
    %2979 = vmatprep.subr.mxu0 0.0
    %2980 = vmatpush1.msra.mxu0 %v2942
    %2981 = vmatprep.subr.mxu0 0.0
    %2982 = vmatpush1.msra.mxu0 %v2943
    %2983 = vmatprep.subr.mxu0 0.0
    %2984 = vmatpush1.msra.mxu0 %v2944
    %2985 = vmatprep.subr.mxu0 0.0
    %2986 = vmatpush1.msra.mxu0 %v2945
    %2987 = vmatprep.subr.mxu0 0.0
    %2988 = vmatpush1.msra.mxu0 %v2946
    %2989 = vmatprep.subr.mxu0 0.0
    %2990 = vmatpush1.msra.mxu0 %v2947
    %2991 = vmatprep.subr.mxu0 0.0
    %2992 = vmatpush1.msra.mxu0 %v2948
    %2993 = vmatprep.subr.mxu0 0.0
    %2994 = vmatpush1.msra.mxu0 0.0
    %2995 = vmatprep.subr.mxu0 0.0
    %2996 = vmatpush1.msra.mxu0 0.0
    %2997 = vmatprep.subr.mxu0 0.0
    %2998 = vmatpush1.msra.mxu0 0.0
    %2999 = vmatprep.subr.mxu0 0.0
    %3000 = vmatpush1.msra.mxu0 0.0
    %3001 = vmatprep.subr.mxu0 0.0
    %3002 = vmatpush1.msra.mxu0 0.0
    %3003 = vmatprep.subr.mxu0 0.0
    %3004 = vmatpush1.msra.mxu0 0.0
    %3005 = vmatprep.subr.mxu0 0.0
    %3006 = vmatpush1.msra.mxu0 0.0
    %3007 = vmatprep.subr.mxu0 0.0
    %3008 = vmatpush1.msra.mxu0 0.0
    %3009 = vmatprep.subr.mxu0 0.0
    %3010 = vmatpush1.msra.mxu0 0.0
    %3011 = vmatprep.subr.mxu0 0.0
    %3012 = vmatpush1.msra.mxu0 0.0
    %3013 = vmatprep.subr.mxu0 0.0
    %3014 = vmatpush1.msra.mxu0 0.0
    %3015 = vmatprep.subr.mxu0 0.0
    %3016 = vmatpush1.msra.mxu0 0.0
    %3017 = vmatprep.subr.mxu0 0.0
    %3018 = vmatpush1.msra.mxu0 0.0
    %3019 = vmatprep.subr.mxu0 0.0
    %3020 = vmatpush1.msra.mxu0 0.0
    %3021 = vmatprep.subr.mxu0 0.0
    %3022 = vmatpush1.msra.mxu0 0.0
    %3023 = vmatprep.subr.mxu0 0.0
    %3024 = vmatpush1.msra.mxu0 0.0
    %3025 = vmatprep.mubr.f32.mxu0 0.0
    %3026 = vmatmul.mubr.f32.gmra.mrb[0].mxu0 %v2921
    %v3027 = vpop.f32.mrb[0].mxu0
    %v3028 = vadd.f32 %v2949, %v3027
    %v3029 = vpop.f32.mrb[0].mxu0
    %3030 = vmatprep.mubr.f32.mxu0 0.0
    %3031 = vmatmul.mubr.f32.gmra.mrb[0].mxu0 %v2922
    %v3032 = vpop.f32.mrb[0].mxu0
    %v3033 = vadd.f32 %v2950, %v3032
    %v3034 = vpop.f32.mrb[0].mxu0
    %3035 = vmatprep.mubr.f32.mxu0 0.0
    %3036 = vmatmul.mubr.f32.gmra.mrb[0].mxu0 %v2923
    %v3037 = vpop.f32.mrb[0].mxu0
    %v3038 = vadd.f32 %v2951, %v3037
    %v3039 = vpop.f32.mrb[0].mxu0
    %3040 = vmatprep.mubr.f32.mxu0 0.0
    %3041 = vmatmul.mubr.f32.gmra.mrb[0].mxu0 %v2924
    %v3042 = vpop.f32.mrb[0].mxu0
    %v3043 = vadd.f32 %v2952, %v3042
    %v3044 = vpop.f32.mrb[0].mxu0
    %3045 = vmatprep.mubr.f32.mxu0 0.0
    %3046 = vmatmul.mubr.f32.gmra.mrb[0].mxu0 %v2925
    %v3047 = vpop.f32.mrb[0].mxu0
    %v3048 = vadd.f32 %v2953, %v3047
    %v3049 = vpop.f32.mrb[0].mxu0
    %3050 = vmatprep.mubr.f32.mxu0 0.0
    %3051 = vmatmul.mubr.f32.gmra.mrb[0].mxu0 %v2926
    %v3052 = vpop.f32.mrb[0].mxu0
    %v3053 = vadd.f32 %v2954, %v3052
    %v3054 = vpop.f32.mrb[0].mxu0
    %3055 = vmatprep.mubr.f32.mxu0 0.0
    %3056 = vmatmul.mubr.f32.gmra.mrb[0].mxu0 %v2927
    %v3057 = vpop.f32.mrb[0].mxu0
    %v3058 = vadd.f32 %v2955, %v3057
    %v3059 = vpop.f32.mrb[0].mxu0
    %3060 = vmatprep.mubr.f32.mxu0 0.0
    %3061 = vmatmul.mubr.f32.gmra.mrb[0].mxu0 %v2928
    %v3062 = vpop.f32.mrb[0].mxu0
    %v3063 = vadd.f32 %v2956, %v3062
    %v3064 = vpop.f32.mrb[0].mxu0
    %3065 = vmatprep.mubr.f32.mxu0 0.0
    %3066 = vmatmul.mubr.f32.gmra.mrb[0].mxu0 %v2929
    %v3067 = vpop.f32.mrb[0].mxu0
    %v3068 = vadd.f32 %v2957, %v3067
    %v3069 = vpop.f32.mrb[0].mxu0
    %3070 = vmatprep.mubr.f32.mxu0 0.0
    %3071 = vmatmul.mubr.f32.gmra.mrb[0].mxu0 %v2930
    %v3072 = vpop.f32.mrb[0].mxu0
    %v3073 = vadd.f32 %v2958, %v3072
    %v3074 = vpop.f32.mrb[0].mxu0
    %3075 = vmatprep.mubr.f32.mxu0 0.0
    %3076 = vmatmul.mubr.f32.gmra.mrb[0].mxu0 %v2931
    %v3077 = vpop.f32.mrb[0].mxu0
    %v3078 = vadd.f32 %v2959, %v3077
    %v3079 = vpop.f32.mrb[0].mxu0
    %3080 = vmatprep.mubr.f32.mxu0 0.0
    %3081 = vmatmul.mubr.f32.gmra.mrb[0].mxu0 %v2932
    %v3082 = vpop.f32.mrb[0].mxu0
    %v3083 = vadd.f32 %v2960, %v3082
    %v3084 = vpop.f32.mrb[0].mxu0
    %3085 = vdwg.mxu0
    %vm3086 = vcmask 31744
    %v3087 = vsel %vm3086, %v3028, -inf
    %v3088 = vsel %vm3086, %v3033, -inf
    %v3089 = vsel %vm3086, %v3038, -inf
    %v3090 = vsel %vm3086, %v3043, -inf
    %v3091 = vsel %vm3086, %v3048, -inf
    %v3092 = vmax.f32 %v3087, %v3091
    %v3093 = vsel %vm3086, %v3053, -inf
    %v3094 = vmax.f32 %v3088, %v3093
    %v3095 = vsel %vm3086, %v3058, -inf
    %v3096 = vmax.f32 %v3089, %v3095
    %v3097 = vsel %vm3086, %v3063, -inf
    %v3098 = vmax.f32 %v3090, %v3097
    %v3099 = vsel %vm3086, %v3068, -inf
    %v3100 = vmax.f32 %v3092, %v3099
    %v3101 = vsel %vm3086, %v3073, -inf
    %v3102 = vmax.f32 %v3094, %v3101
    %v3103 = vsel %vm3086, %v3078, -inf
    %v3104 = vmax.f32 %v3096, %v3103
    %v3105 = vsel %vm3086, %v3083, -inf
    %v3106 = vmax.f32 %v3098, %v3105
    %v3107 = vmax.f32 %v3100, %v3102
    %v3108 = vmax.f32 %v3104, %v3106
    %v3109 = vmax.f32 %v3107, %v3108
    %v3110 = vsub.f32 %v3028, %v3109
    %v3111 = vsub.f32 %v3033, %v3109
    %v3112 = vsub.f32 %v3038, %v3109
    %v3113 = vsub.f32 %v3043, %v3109
    %v3114 = vsub.f32 %v3048, %v3109
    %v3115 = vsub.f32 %v3053, %v3109
    %v3116 = vsub.f32 %v3058, %v3109
    %v3117 = vsub.f32 %v3063, %v3109
    %v3118 = vsub.f32 %v3068, %v3109
    %v3119 = vsub.f32 %v3073, %v3109
    %v3120 = vsub.f32 %v3078, %v3109
    %v3121 = vsub.f32 %v3083, %v3109
    %v3122 = vmul.f32 %v3110, 1.442695
    %v3123 = vpow.pop %v3122
    %v3124 = vmul.f32 %v3111, 1.442695
    %v3125 = vpow.pop %v3124
    %v3126 = vmul.f32 %v3112, 1.442695
    %v3127 = vpow.pop %v3126
    %v3128 = vmul.f32 %v3113, 1.442695
    %v3129 = vpow.pop %v3128
    %v3130 = vmul.f32 %v3114, 1.442695
    %v3131 = vpow.pop %v3130
    %v3132 = vmul.f32 %v3115, 1.442695
    %v3133 = vpow.pop %v3132
    %v3134 = vmul.f32 %v3116, 1.442695
    %v3135 = vpow.pop %v3134
    %v3136 = vmul.f32 %v3117, 1.442695
    %v3137 = vpow.pop %v3136
    %v3138 = vmul.f32 %v3118, 1.442695
    %v3139 = vpow.pop %v3138
    %v3140 = vmul.f32 %v3119, 1.442695
    %v3141 = vpow.pop %v3140
    %v3142 = vmul.f32 %v3120, 1.442695
    %v3143 = vpow.pop %v3142
    %v3144 = vmul.f32 %v3121, 1.442695
    %v3145 = vpow.pop %v3144
    %v3146 = vsel %vm3086, %v3123, 0.0
    %v3147 = vsel %vm3086, %v3125, 0.0
    %v3148 = vadd.f32 %v3146, %v3147
    %v3149 = vsel %vm3086, %v3127, 0.0
    %v3150 = vadd.f32 %v3148, %v3149
    %v3151 = vsel %vm3086, %v3129, 0.0
    %v3152 = vadd.f32 %v3150, %v3151
    %v3153 = vsel %vm3086, %v3131, 0.0
    %v3154 = vadd.f32 %v3152, %v3153
    %v3155 = vsel %vm3086, %v3133, 0.0
    %v3156 = vadd.f32 %v3154, %v3155
    %v3157 = vsel %vm3086, %v3135, 0.0
    %v3158 = vadd.f32 %v3156, %v3157
    %v3159 = vsel %vm3086, %v3137, 0.0
    %v3160 = vadd.f32 %v3158, %v3159
    %v3161 = vsel %vm3086, %v3139, 0.0
    %v3162 = vadd.f32 %v3160, %v3161
    %v3163 = vsel %vm3086, %v3141, 0.0
    %v3164 = vadd.f32 %v3162, %v3163
    %v3165 = vsel %vm3086, %v3143, 0.0
    %v3166 = vadd.f32 %v3164, %v3165
    %v3167 = vsel %vm3086, %v3145, 0.0
    %v3168 = vadd.f32 %v3166, %v3167
    %v3169 = vrcp.pop %v3168
    %v3170 = vmul.f32 %v3123, %v3169
    %v3171 = vmul.f32 %v3125, %v3169
    %v3172 = vmul.f32 %v3127, %v3169
    %v3173 = vmul.f32 %v3129, %v3169
    %v3174 = vmul.f32 %v3131, %v3169
    %v3175 = vmul.f32 %v3133, %v3169
    %v3176 = vmul.f32 %v3135, %v3169
    %v3177 = vmul.f32 %v3137, %v3169
    %v3178 = vmul.f32 %v3139, %v3169
    %v3179 = vmul.f32 %v3141, %v3169
    %v3180 = vmul.f32 %v3143, %v3169
    %v3181 = vmul.f32 %v3145, %v3169
    %v3182 = vld [vmem:[%s3 + $0xe0] sm:$0xf]
    %v3184 = vsel %vm3086, %v3170, 0
    %v3187 = vsel %vm3086, %v3171, 0
    %v3190 = vsel %vm3086, %v3172, 0
    %v3193 = vsel %vm3086, %v3173, 0
    %v3196 = vsel %vm3086, %v3174, 0
    %v3199 = vsel %vm3086, %v3175, 0
    %v3202 = vsel %vm3086, %v3176, 0
    %v3205 = vsel %vm3086, %v3177, 0
    %v3208 = vsel %vm3086, %v3178, 0
    %v3211 = vsel %vm3086, %v3179, 0
    %v3214 = vsel %vm3086, %v3180, 0
    %v3217 = vsel %vm3086, %v3181, 0
    %vm3219 = vcmask 1043456
    %v3221 = vsel %vm3219, %v3182, 0
    %3223 = vmatprep.subr.mxu0 0.0
    %3224 = vmatpush1.msra.mxu0 %v3221
    %3225 = vmatprep.subr.mxu0 0.0
    %3226 = vmatpush1.msra.mxu0 0.0
    %3227 = vmatprep.subr.mxu0 0.0
    %3228 = vmatpush1.msra.mxu0 0.0
    %3229 = vmatprep.subr.mxu0 0.0
    %3230 = vmatpush1.msra.mxu0 0.0
    %3231 = vmatprep.subr.mxu0 0.0
    %3232 = vmatpush1.msra.mxu0 0.0
    %3233 = vmatprep.subr.mxu0 0.0
    %3234 = vmatpush1.msra.mxu0 0.0
    %3235 = vmatprep.subr.mxu0 0.0
    %3236 = vmatpush1.msra.mxu0 0.0
    %3237 = vmatprep.subr.mxu0 0.0
    %3238 = vmatpush1.msra.mxu0 0.0
    %3239 = vmatprep.subr.mxu0 0.0
    %3240 = vmatpush1.msra.mxu0 0.0
    %3241 = vmatprep.subr.mxu0 0.0
    %3242 = vmatpush1.msra.mxu0 0.0
    %3243 = vmatprep.subr.mxu0 0.0
    %3244 = vmatpush1.msra.mxu0 0.0
    %3245 = vmatprep.subr.mxu0 0.0
    %3246 = vmatpush1.msra.mxu0 0.0
    %3247 = vmatprep.subr.mxu0 0.0
    %3248 = vmatpush1.msra.mxu0 0.0
    %3249 = vmatprep.subr.mxu0 0.0
    %3250 = vmatpush1.msra.mxu0 0.0
    %3251 = vmatprep.subr.mxu0 0.0
    %3252 = vmatpush1.msra.mxu0 0.0
    %3253 = vmatprep.subr.mxu0 0.0
    %3254 = vmatpush1.msra.mxu0 0.0
    %3255 = vmatprep.subr.mxu0 0.0
    %3256 = vmatpush1.msra.mxu0 0.0
    %3257 = vmatprep.subr.mxu0 0.0
    %3258 = vmatpush1.msra.mxu0 0.0
    %3259 = vmatprep.subr.mxu0 0.0
    %3260 = vmatpush1.msra.mxu0 0.0
    %3261 = vmatprep.subr.mxu0 0.0
    %3262 = vmatpush1.msra.mxu0 0.0
    %3263 = vmatprep.subr.mxu0 0.0
    %3264 = vmatpush1.msra.mxu0 0.0
    %3265 = vmatprep.subr.mxu0 0.0
    %3266 = vmatpush1.msra.mxu0 0.0
    %3267 = vmatprep.subr.mxu0 0.0
    %3268 = vmatpush1.msra.mxu0 0.0
    %3269 = vmatprep.subr.mxu0 0.0
    %3270 = vmatpush1.msra.mxu0 0.0
    %3271 = vmatprep.subr.mxu0 0.0
    %3272 = vmatpush1.msra.mxu0 0.0
    %3273 = vmatprep.subr.mxu0 0.0
    %3274 = vmatpush1.msra.mxu0 0.0
    %3275 = vmatprep.subr.mxu0 0.0
    %3276 = vmatpush1.msra.mxu0 0.0
    %3277 = vmatprep.subr.mxu0 0.0
    %3278 = vmatpush1.msra.mxu0 0.0
    %3279 = vmatprep.subr.mxu0 0.0
    %3280 = vmatpush1.msra.mxu0 0.0
    %3281 = vmatprep.subr.mxu0 0.0
    %3282 = vmatpush1.msra.mxu0 0.0
    %3283 = vmatprep.subr.mxu0 0.0
    %3284 = vmatpush1.msra.mxu0 0.0
    %3285 = vmatprep.subr.mxu0 0.0
    %3286 = vmatpush1.msra.mxu0 0.0
    %3287 = vmatprep.mubr.f32.mxu0 0.0
    %3288 = vmatmul.mubr.f32.gmra.mrb[0].mxu0 %v3184
    %v3289 = vpop.f32.mrb[0].mxu0
    %v3290 = vadd.f32 0.0, %v3289
    %v3291 = vpop.f32.mrb[0].mxu0
    %3292 = vmatprep.mubr.f32.mxu0 0.0
    %3293 = vmatmul.mubr.f32.gmra.mrb[0].mxu0 %v3187
    %v3294 = vpop.f32.mrb[0].mxu0
    %v3295 = vadd.f32 0.0, %v3294
    %v3296 = vpop.f32.mrb[0].mxu0
    %3297 = vmatprep.mubr.f32.mxu0 0.0
    %3298 = vmatmul.mubr.f32.gmra.mrb[0].mxu0 %v3190
    %v3299 = vpop.f32.mrb[0].mxu0
    %v3300 = vadd.f32 0.0, %v3299
    %v3301 = vpop.f32.mrb[0].mxu0
    %3302 = vmatprep.mubr.f32.mxu0 0.0
    %3303 = vmatmul.mubr.f32.gmra.mrb[0].mxu0 %v3193
    %v3304 = vpop.f32.mrb[0].mxu0
    %v3305 = vadd.f32 0.0, %v3304
    %v3306 = vpop.f32.mrb[0].mxu0
    %3307 = vmatprep.mubr.f32.mxu0 0.0
    %3308 = vmatmul.mubr.f32.gmra.mrb[0].mxu0 %v3196
    %v3309 = vpop.f32.mrb[0].mxu0
    %v3310 = vadd.f32 0.0, %v3309
    %v3311 = vpop.f32.mrb[0].mxu0
    %3312 = vmatprep.mubr.f32.mxu0 0.0
    %3313 = vmatmul.mubr.f32.gmra.mrb[0].mxu0 %v3199
    %v3314 = vpop.f32.mrb[0].mxu0
    %v3315 = vadd.f32 0.0, %v3314
    %v3316 = vpop.f32.mrb[0].mxu0
    %3317 = vmatprep.mubr.f32.mxu0 0.0
    %3318 = vmatmul.mubr.f32.gmra.mrb[0].mxu0 %v3202
    %v3319 = vpop.f32.mrb[0].mxu0
    %v3320 = vadd.f32 0.0, %v3319
    %v3321 = vpop.f32.mrb[0].mxu0
    %3322 = vmatprep.mubr.f32.mxu0 0.0
    %3323 = vmatmul.mubr.f32.gmra.mrb[0].mxu0 %v3205
    %v3324 = vpop.f32.mrb[0].mxu0
    %v3325 = vadd.f32 0.0, %v3324
    %v3326 = vpop.f32.mrb[0].mxu0
    %3327 = vmatprep.mubr.f32.mxu0 0.0
    %3328 = vmatmul.mubr.f32.gmra.mrb[0].mxu0 %v3208
    %v3329 = vpop.f32.mrb[0].mxu0
    %v3330 = vadd.f32 0.0, %v3329
    %v3331 = vpop.f32.mrb[0].mxu0
    %3332 = vmatprep.mubr.f32.mxu0 0.0
    %3333 = vmatmul.mubr.f32.gmra.mrb[0].mxu0 %v3211
    %v3334 = vpop.f32.mrb[0].mxu0
    %v3335 = vadd.f32 0.0, %v3334
    %v3336 = vpop.f32.mrb[0].mxu0
    %3337 = vmatprep.mubr.f32.mxu0 0.0
    %3338 = vmatmul.mubr.f32.gmra.mrb[0].mxu0 %v3214
    %v3339 = vpop.f32.mrb[0].mxu0
    %v3340 = vadd.f32 0.0, %v3339
    %v3341 = vpop.f32.mrb[0].mxu0
    %3342 = vmatprep.mubr.f32.mxu0 0.0
    %3343 = vmatmul.mubr.f32.gmra.mrb[0].mxu0 %v3217
    %v3344 = vpop.f32.mrb[0].mxu0
    %v3345 = vadd.f32 0.0, %v3344
    %v3346 = vpop.f32.mrb[0].mxu0
    %3347 = vdwg.mxu0
    %v3348 = vmul.f32 %v3290, %v2909
    %v3349 = vmul.f32 %v3295, %v2910
    %v3350 = vmul.f32 %v3300, %v2911
    %v3351 = vmul.f32 %v3305, %v2912
    %v3352 = vmul.f32 %v3310, %v2913
    %v3353 = vmul.f32 %v3315, %v2914
    %v3354 = vmul.f32 %v3320, %v2915
    %v3355 = vmul.f32 %v3325, %v2916
    %v3356 = vmul.f32 %v3330, %v2917
    %v3357 = vmul.f32 %v3335, %v2918
    %v3358 = vmul.f32 %v3340, %v2919
    %v3359 = vmul.f32 %v3345, %v2920
    %v3360 = vadd.f32 %v3348, %v3349
    %v3361 = vadd.f32 %v3360, %v3350
    %v3362 = vadd.f32 %v3361, %v3351
    %v3363 = vadd.f32 %v3362, %v3352
    %v3364 = vadd.f32 %v3363, %v3353
    %v3365 = vadd.f32 %v3364, %v3354
    %v3366 = vadd.f32 %v3365, %v3355
    %v3367 = vadd.f32 %v3366, %v3356
    %v3368 = vadd.f32 %v3367, %v3357
    %v3369 = vadd.f32 %v3368, %v3358
    %v3370 = vadd.f32 %v3369, %v3359
    %v3371 = vld [vmem:[%s3 + $0xe8] sm:$0xff]
    %v3372 = vmul.f32 %v3370, %v3371
    %v3374 = vrot.slane %v3372, 2
    %v3376 = vadd.f32 %v3372, %v3374
    %v3377 = vrot.slane %v3372, 4
    %v3379 = vadd.f32 %v3376, %v3377
    %3381 = vrot.lane.b32.xlu0 %v3379, 96
    %v3382 = vpop.permute.xlu0 %3381
    %v3384 = vadd.f32 %v3379, %v3382
    %3385 = vrot.lane.b32.xlu0 %v3379, 64
    %v3386 = vpop.permute.xlu0 %3385
    %v3388 = vadd.f32 %v3384, %v3386
    %v3389 = vld [vmem:[%s1] sm:$0x3]
    %v3390 = vld [vmem:[%s3 + $0xf0] sm:$0xff]
    %v3391 = vld [vmem:[%s3 + $0xf8] sm:$0x1]
    %v3392 = vlaneseq
    %v3393 = vshrl.u32 %v3392, 7
    %v3394 = vsub.s32 0, %v3393
    %v3395 = vrot.slane %v3391, %v3394
    %vm3396 = vcmask 64512
    %v3398 = vsel %vm3396, %v3389, 0
    %3400 = vmatprep.subr.mxu0 0.0
    %3401 = vmatpush1.msra.mxu0 %v3390
    %3402 = vmatprep.subr.mxu0 0.0
    %3403 = vmatpush1.msra.mxu0 0.0
    %3404 = vmatprep.subr.mxu0 0.0
    %3405 = vmatpush1.msra.mxu0 0.0
    %3406 = vmatprep.subr.mxu0 0.0
    %3407 = vmatpush1.msra.mxu0 0.0
    %3408 = vmatprep.subr.mxu0 0.0
    %3409 = vmatpush1.msra.mxu0 0.0
    %3410 = vmatprep.subr.mxu0 0.0
    %3411 = vmatpush1.msra.mxu0 0.0
    %3412 = vmatprep.subr.mxu0 0.0
    %3413 = vmatpush1.msra.mxu0 0.0
    %3414 = vmatprep.subr.mxu0 0.0
    %3415 = vmatpush1.msra.mxu0 0.0
    %3416 = vmatprep.subr.mxu0 0.0
    %3417 = vmatpush1.msra.mxu0 0.0
    %3418 = vmatprep.subr.mxu0 0.0
    %3419 = vmatpush1.msra.mxu0 0.0
    %3420 = vmatprep.subr.mxu0 0.0
    %3421 = vmatpush1.msra.mxu0 0.0
    %3422 = vmatprep.subr.mxu0 0.0
    %3423 = vmatpush1.msra.mxu0 0.0
    %3424 = vmatprep.subr.mxu0 0.0
    %3425 = vmatpush1.msra.mxu0 0.0
    %3426 = vmatprep.subr.mxu0 0.0
    %3427 = vmatpush1.msra.mxu0 0.0
    %3428 = vmatprep.subr.mxu0 0.0
    %3429 = vmatpush1.msra.mxu0 0.0
    %3430 = vmatprep.subr.mxu0 0.0
    %3431 = vmatpush1.msra.mxu0 0.0
    %3432 = vmatprep.subr.mxu0 0.0
    %3433 = vmatpush1.msra.mxu0 0.0
    %3434 = vmatprep.subr.mxu0 0.0
    %3435 = vmatpush1.msra.mxu0 0.0
    %3436 = vmatprep.subr.mxu0 0.0
    %3437 = vmatpush1.msra.mxu0 0.0
    %3438 = vmatprep.subr.mxu0 0.0
    %3439 = vmatpush1.msra.mxu0 0.0
    %3440 = vmatprep.subr.mxu0 0.0
    %3441 = vmatpush1.msra.mxu0 0.0
    %3442 = vmatprep.subr.mxu0 0.0
    %3443 = vmatpush1.msra.mxu0 0.0
    %3444 = vmatprep.subr.mxu0 0.0
    %3445 = vmatpush1.msra.mxu0 0.0
    %3446 = vmatprep.subr.mxu0 0.0
    %3447 = vmatpush1.msra.mxu0 0.0
    %3448 = vmatprep.subr.mxu0 0.0
    %3449 = vmatpush1.msra.mxu0 0.0
    %3450 = vmatprep.subr.mxu0 0.0
    %3451 = vmatpush1.msra.mxu0 0.0
    %3452 = vmatprep.subr.mxu0 0.0
    %3453 = vmatpush1.msra.mxu0 0.0
    %3454 = vmatprep.subr.mxu0 0.0
    %3455 = vmatpush1.msra.mxu0 0.0
    %3456 = vmatprep.subr.mxu0 0.0
    %3457 = vmatpush1.msra.mxu0 0.0
    %3458 = vmatprep.subr.mxu0 0.0
    %3459 = vmatpush1.msra.mxu0 0.0
    %3460 = vmatprep.subr.mxu0 0.0
    %3461 = vmatpush1.msra.mxu0 0.0
    %3462 = vmatprep.subr.mxu0 0.0
    %3463 = vmatpush1.msra.mxu0 0.0
    %3464 = vmatprep.mubr.f32.mxu0 0.0
    %3465 = vmatmul.mubr.f32.gmra.mrb[0].mxu0 %v3398
    %v3466 = vpop.f32.mrb[0].mxu0
    %v3467 = vadd.f32 %v3395, %v3466
    %v3468 = vpop.f32.mrb[0].mxu0
    %3469 = vdwg.mxu0
    %3471 = vrot.lane.b32.xlu0 %v3467, 32
    %v3472 = vpop.permute.xlu0 %3471
    %vm3474 = vcmask 261120
    %v3475 = vsel %vm3474, %v3388, %v3472
    %v3476 = vld [vmem:[%s3 + $0x100] sm:$0xff]
    %v3477 = vld [vmem:[%s3 + $0x108] sm:$0xff]
    %v3478 = vld [vmem:[%s3 + $0x110] sm:$0xff]
    %v3479 = vld [vmem:[%s3 + $0x118] sm:$0xff]
    %v3480 = vld [vmem:[%s3 + $0x120] sm:$0xff]
    %v3481 = vld [vmem:[%s3 + $0x128] sm:$0xff]
    %v3482 = vld [vmem:[%s3 + $0x130] sm:$0xff]
    %v3483 = vld [vmem:[%s3 + $0x138] sm:$0xff]
    %v3484 = vld [vmem:[%s3 + $0x140] sm:$0x1]
    %v3485 = vlaneseq
    %v3486 = vshrl.u32 %v3485, 7
    %v3487 = vsub.s32 0, %v3486
    %v3488 = vrot.slane %v3484, %v3487
    %v3490 = vsel %vm342, %v3475, 0
    %3492 = vmatprep.subr.mxu0 0.0
    %3493 = vmatpush1.msra.mxu0 %v3476
    %3494 = vmatprep.subr.mxu0 0.0
    %3495 = vmatpush1.msra.mxu0 %v3477
    %3496 = vmatprep.subr.mxu0 0.0
    %3497 = vmatpush1.msra.mxu0 %v3478
    %3498 = vmatprep.subr.mxu0 0.0
    %3499 = vmatpush1.msra.mxu0 %v3479
    %3500 = vmatprep.subr.mxu0 0.0
    %3501 = vmatpush1.msra.mxu0 %v3480
    %3502 = vmatprep.subr.mxu0 0.0
    %3503 = vmatpush1.msra.mxu0 %v3481
    %3504 = vmatprep.subr.mxu0 0.0
    %3505 = vmatpush1.msra.mxu0 %v3482
    %3506 = vmatprep.subr.mxu0 0.0
    %3507 = vmatpush1.msra.mxu0 %v3483
    %3508 = vmatprep.subr.mxu0 0.0
    %3509 = vmatpush1.msra.mxu0 0.0
    %3510 = vmatprep.subr.mxu0 0.0
    %3511 = vmatpush1.msra.mxu0 0.0
    %3512 = vmatprep.subr.mxu0 0.0
    %3513 = vmatpush1.msra.mxu0 0.0
    %3514 = vmatprep.subr.mxu0 0.0
    %3515 = vmatpush1.msra.mxu0 0.0
    %3516 = vmatprep.subr.mxu0 0.0
    %3517 = vmatpush1.msra.mxu0 0.0
    %3518 = vmatprep.subr.mxu0 0.0
    %3519 = vmatpush1.msra.mxu0 0.0
    %3520 = vmatprep.subr.mxu0 0.0
    %3521 = vmatpush1.msra.mxu0 0.0
    %3522 = vmatprep.subr.mxu0 0.0
    %3523 = vmatpush1.msra.mxu0 0.0
    %3524 = vmatprep.subr.mxu0 0.0
    %3525 = vmatpush1.msra.mxu0 0.0
    %3526 = vmatprep.subr.mxu0 0.0
    %3527 = vmatpush1.msra.mxu0 0.0
    %3528 = vmatprep.subr.mxu0 0.0
    %3529 = vmatpush1.msra.mxu0 0.0
    %3530 = vmatprep.subr.mxu0 0.0
    %3531 = vmatpush1.msra.mxu0 0.0
    %3532 = vmatprep.subr.mxu0 0.0
    %3533 = vmatpush1.msra.mxu0 0.0
    %3534 = vmatprep.subr.mxu0 0.0
    %3535 = vmatpush1.msra.mxu0 0.0
    %3536 = vmatprep.subr.mxu0 0.0
    %3537 = vmatpush1.msra.mxu0 0.0
    %3538 = vmatprep.subr.mxu0 0.0
    %3539 = vmatpush1.msra.mxu0 0.0
    %3540 = vmatprep.subr.mxu0 0.0
    %3541 = vmatpush1.msra.mxu0 0.0
    %3542 = vmatprep.subr.mxu0 0.0
    %3543 = vmatpush1.msra.mxu0 0.0
    %3544 = vmatprep.subr.mxu0 0.0
    %3545 = vmatpush1.msra.mxu0 0.0
    %3546 = vmatprep.subr.mxu0 0.0
    %3547 = vmatpush1.msra.mxu0 0.0
    %3548 = vmatprep.subr.mxu0 0.0
    %3549 = vmatpush1.msra.mxu0 0.0
    %3550 = vmatprep.subr.mxu0 0.0
    %3551 = vmatpush1.msra.mxu0 0.0
    %3552 = vmatprep.subr.mxu0 0.0
    %3553 = vmatpush1.msra.mxu0 0.0
    %3554 = vmatprep.subr.mxu0 0.0
    %3555 = vmatpush1.msra.mxu0 0.0
    %3556 = vmatprep.mubr.f32.mxu0 0.0
    %3557 = vmatmul.mubr.f32.gmra.mrb[0].mxu0 %v3490
    %v3558 = vpop.f32.mrb[0].mxu0
    %v3559 = vadd.f32 %v3488, %v3558
    %v3560 = vpop.f32.mrb[0].mxu0
    %3561 = vdwg.mxu0
    %v3562 = vxor.u32 %v3559, 2147483648
    %v3563 = vmul.f32 %v3562, 1.442695
    %v3564 = vpow.pop %v3563
    %v3565 = vadd.f32 %v3564, 1.0
    %v3566 = vrcp.pop %v3565
    %v3567 = vmul.f32 1.0, %v3566
    %v3568 = vmul.f32 %v3567, %v3388
    %v3569 = vsub.f32 1.0, %v3567
    %3570 = vrot.lane.b32.xlu0 %v3379, 32
    %v3571 = vpop.permute.xlu0 %3570
    %v3573 = vmul.f32 %v3569, %v3571
    %v3574 = vadd.f32 %v3568, %v3573
    %v3575 = vld [vmem:[%s3 + $0x148] sm:$0xff]
    %v3576 = vld [vmem:[%s3 + $0x150] sm:$0xff]
    %v3577 = vld [vmem:[%s3 + $0x158] sm:$0xff]
    %v3578 = vld [vmem:[%s3 + $0x160] sm:$0xff]
    %v3579 = vld [vmem:[%s3 + $0x168] sm:$0x1]
    %v3580 = vlaneseq
    %v3581 = vshrl.u32 %v3580, 7
    %v3582 = vsub.s32 0, %v3581
    %v3583 = vrot.slane %v3579, %v3582
    %v3585 = vsel %vm3474, %v3574, 0
    %3587 = vmatprep.subr.mxu0 0.0
    %3588 = vmatpush1.msra.mxu0 %v3575
    %3589 = vmatprep.subr.mxu0 0.0
    %3590 = vmatpush1.msra.mxu0 %v3576
    %3591 = vmatprep.subr.mxu0 0.0
    %3592 = vmatpush1.msra.mxu0 %v3577
    %3593 = vmatprep.subr.mxu0 0.0
    %3594 = vmatpush1.msra.mxu0 %v3578
    %3595 = vmatprep.subr.mxu0 0.0
    %3596 = vmatpush1.msra.mxu0 0.0
    %3597 = vmatprep.subr.mxu0 0.0
    %3598 = vmatpush1.msra.mxu0 0.0
    %3599 = vmatprep.subr.mxu0 0.0
    %3600 = vmatpush1.msra.mxu0 0.0
    %3601 = vmatprep.subr.mxu0 0.0
    %3602 = vmatpush1.msra.mxu0 0.0
    %3603 = vmatprep.subr.mxu0 0.0
    %3604 = vmatpush1.msra.mxu0 0.0
    %3605 = vmatprep.subr.mxu0 0.0
    %3606 = vmatpush1.msra.mxu0 0.0
    %3607 = vmatprep.subr.mxu0 0.0
    %3608 = vmatpush1.msra.mxu0 0.0
    %3609 = vmatprep.subr.mxu0 0.0
    %3610 = vmatpush1.msra.mxu0 0.0
    %3611 = vmatprep.subr.mxu0 0.0
    %3612 = vmatpush1.msra.mxu0 0.0
    %3613 = vmatprep.subr.mxu0 0.0
    %3614 = vmatpush1.msra.mxu0 0.0
    %3615 = vmatprep.subr.mxu0 0.0
    %3616 = vmatpush1.msra.mxu0 0.0
    %3617 = vmatprep.subr.mxu0 0.0
    %3618 = vmatpush1.msra.mxu0 0.0
    %3619 = vmatprep.subr.mxu0 0.0
    %3620 = vmatpush1.msra.mxu0 0.0
    %3621 = vmatprep.subr.mxu0 0.0
    %3622 = vmatpush1.msra.mxu0 0.0
    %3623 = vmatprep.subr.mxu0 0.0
    %3624 = vmatpush1.msra.mxu0 0.0
    %3625 = vmatprep.subr.mxu0 0.0
    %3626 = vmatpush1.msra.mxu0 0.0
    %3627 = vmatprep.subr.mxu0 0.0
    %3628 = vmatpush1.msra.mxu0 0.0
    %3629 = vmatprep.subr.mxu0 0.0
    %3630 = vmatpush1.msra.mxu0 0.0
    %3631 = vmatprep.subr.mxu0 0.0
    %3632 = vmatpush1.msra.mxu0 0.0
    %3633 = vmatprep.subr.mxu0 0.0
    %3634 = vmatpush1.msra.mxu0 0.0
    %3635 = vmatprep.subr.mxu0 0.0
    %3636 = vmatpush1.msra.mxu0 0.0
    %3637 = vmatprep.subr.mxu0 0.0
    %3638 = vmatpush1.msra.mxu0 0.0
    %3639 = vmatprep.subr.mxu0 0.0
    %3640 = vmatpush1.msra.mxu0 0.0
    %3641 = vmatprep.subr.mxu0 0.0
    %3642 = vmatpush1.msra.mxu0 0.0
    %3643 = vmatprep.subr.mxu0 0.0
    %3644 = vmatpush1.msra.mxu0 0.0
    %3645 = vmatprep.subr.mxu0 0.0
    %3646 = vmatpush1.msra.mxu0 0.0
    %3647 = vmatprep.subr.mxu0 0.0
    %3648 = vmatpush1.msra.mxu0 0.0
    %3649 = vmatprep.subr.mxu0 0.0
    %3650 = vmatpush1.msra.mxu0 0.0
    %3651 = vmatprep.mubr.f32.mxu0 0.0
    %3652 = vmatmul.mubr.f32.gmra.mrb[0].mxu0 %v3585
    %v3653 = vpop.f32.mrb[0].mxu0
    %v3654 = vadd.f32 %v3583, %v3653
    %v3655 = vpop.f32.mrb[0].mxu0
    %3656 = vdwg.mxu0
    %vm3657 = vcmask 9216
    %3658 = vst.msk [vmem:[#allocation3] sm:$0x3] %vm3657, %v3654
    // Predicated region
    $region18: #{deep_basic_forward.1} parent=1 // pred_check
      _
    $region19: #{deep_basic_forward.1} parent=1 // pred_check_branch
      %3660 = sbr.rel (0) target = $region21
    $region20: #{deep_basic_forward.1} parent=1 // pred_region
      %s3662 = ssub.s32 32, 32
      %3663 = vsyncadd [#allocation4], %s3662
      %s3665 = sshll.u32 [#allocation3], 4
      %s3666 = int_to_ptr.vmem [resolvable:$true] %s3665
      %3668 = dma.vmem_to_hbm [thread:$0]  %s3666, 32, %s4, [#allocation4]
    $region21: #{deep_basic_forward.1} parent=1 // pred_fallthru
      _
    // Predicated region
    $region22: #{deep_basic_forward.1} parent=1 // pred_check
      _
    $region23: #{deep_basic_forward.1} parent=1 // pred_check_branch
      %3670 = sbr.rel (0) target = $region25
    $region24: #{deep_basic_forward.1} parent=1 // pred_region
      %3671 = dma.done [#allocation4], 32
    $region25: #{deep_basic_forward.1} parent=1 // pred_fallthru
      _
    %3672 = vsyncpa [#allocation4], 1

</llo_original>
